<compile_context>
chip_gen: v7x
topology: tpu7x:2x2x1
jax: 0.10.0
libtpu: 0.0.40
codegen_flags: <defaults>
</compile_context>

<pallas_src>
import jax
import jax.numpy as jnp
from jax.experimental import pallas as pl
from jax.experimental.pallas import tpu as pltpu

VMEM_SPEC = pl.BlockSpec(memory_space=pltpu.MemorySpace.VMEM)


# ----------------------------------------------------------------------------
# Fused kernel: biLSTM + direction-mean + Linear + log_softmax + CRF logZ.
# Sequence tensors are time-major and row-flattened: row index = t*B + b.
# ----------------------------------------------------------------------------
def fused_lstm_crf_kernel(emb_ref,                 # (T*B, E)   bf16
                          h0_ref, c0_ref,          # (2, B, H)  f32 [fwd, bwd]
                          wx_ref,                  # (E, 8H)    bf16  [wih_f | wih_b]
                          bx_ref,                  # (1, 8H)    f32   [b_f   | b_b ]
                          whh_f_ref, whh_b_ref,    # (H, 4H)    bf16
                          wtag_ref,                # (H, K)     f32 (pre-scaled by 0.5)
                          btag_ref,                # (1, K)     f32
                          mask_ref,                # (T, B, 1)  f32
                          start_ref, end_ref,      # (1, K)     f32
                          trans_ref,               # (K, K)     f32
                          em_out_ref,              # (T*B, K)   f32 out
                          logz_ref,                # (B, 1)     f32 out
                          hf_scr, hb_scr):         # (T*B, H)   f32 scratch
    T, B, _ = mask_ref.shape
    H = hf_scr.shape[1]
    K = trans_ref.shape[0]
    H4 = 4 * H

    # ---- hoisted input projection: one MXU pass for all timesteps and both
    # directions, bias folded in once (no per-step broadcast_in_dim).
    gx = jnp.dot(emb_ref[...], wx_ref[...],
                 preferred_element_type=jnp.float32) + bx_ref[...]      # (T*B, 8H)

    whh_f = whh_f_ref[...]
    whh_b = whh_b_ref[...]

    def cell(gates_x, h, c, whh):
        # gates_x already contains x@W_ih + b_ih + b_hh
        gates = gates_x + jnp.dot(h.astype(whh.dtype), whh,
                                  preferred_element_type=jnp.float32)   # (B, 4H)
        sig = jax.nn.sigmoid(gates)      # one full-128-lane EUP pass
        th = jnp.tanh(gates)             # one full-128-lane EUP pass
        i = sig[:, 0 * H:1 * H]
        f = sig[:, 1 * H:2 * H]
        g = th[:, 2 * H:3 * H]
        o = sig[:, 3 * H:4 * H]
        c_new = f * c + i * g
        h_new = o * jnp.tanh(c_new)
        return h_new, c_new

    h_f = h0_ref[0]
    c_f = c0_ref[0]
    h_b = h0_ref[1]
    c_b = c0_ref[1]

    # Interleaved forward/backward recurrences, fully unrolled (T is static):
    # the two independent serial chains overlap each other's latency.
    for t in range(T):
        tb = T - 1 - t
        h_f, c_f = cell(gx[t * B:(t + 1) * B, 0:H4], h_f, c_f, whh_f)
        hf_scr[t * B:(t + 1) * B, :] = h_f
        h_b, c_b = cell(gx[tb * B:(tb + 1) * B, H4:2 * H4], h_b, c_b, whh_b)
        hb_scr[tb * B:(tb + 1) * B, :] = h_b

    # ---- direction mean + hidden2tag Linear + log_softmax, batched over T*B.
    # wtag is pre-scaled by 0.5, so 0.5*(hf+hb)@W == hf@wtag + hb@wtag.
    wtag = wtag_ref[...]
    logits = (jnp.dot(hf_scr[...], wtag, preferred_element_type=jnp.float32)
              + jnp.dot(hb_scr[...], wtag, preferred_element_type=jnp.float32)
              + btag_ref[...])                                          # (T*B, K)
    m = jnp.max(logits, axis=-1, keepdims=True)
    z = logits - m
    lse = jnp.log(jnp.sum(jnp.exp(z), axis=-1, keepdims=True))
    em = z - lse                                                        # (T*B, K)
    em_out_ref[...] = em

    # ---- CRF partition function: masked forward algorithm, unrolled over T.
    start = start_ref[...]        # (1, K)
    end = end_ref[...]            # (1, K)
    trans = trans_ref[...]        # (K, K)

    alpha = start + em[0:B, :]    # (B, K); assumes mask[:, 0] == 1 (torchcrf)
    for t in range(1, T):
        em_t = em[t * B:(t + 1) * B, :]                                 # (B, K)
        m_t = mask_ref[t]                                               # (B, 1)
        broad = alpha[:, :, None] + trans[None, :, :] + em_t[:, None, :]  # (B,K,K)
        mmax = jnp.max(broad, axis=1, keepdims=True)                      # (B,1,K)
        nxt = jnp.log(jnp.sum(jnp.exp(broad - mmax), axis=1)) + mmax[:, 0, :]
        alpha = jnp.where(m_t > 0.5, nxt, alpha)

    zfin = alpha + end
    zmax = jnp.max(zfin, axis=-1, keepdims=True)
    logz_ref[...] = (jnp.log(jnp.sum(jnp.exp(zfin - zmax), axis=-1, keepdims=True))
                     + zmax)                                            # (B, 1)


# ----------------------------------------------------------------------------
# Parameter init (deterministic, PyTorch-style shapes / ranges)
# ----------------------------------------------------------------------------
def init_params(key, vocab_size, embed_dim, hidden_dim, tag_size):
    ks = jax.random.split(key, 14)
    lim = 1.0 / float(jnp.sqrt(hidden_dim))

    def u(k, shape, bound):
        return jax.random.uniform(k, shape, jnp.float32, -bound, bound)

    return {
        "embed": jax.random.normal(ks[0], (vocab_size, embed_dim), jnp.float32),
        # LSTM weights stored pre-transposed: (in, 4H) / (H, 4H); biases b_ih+b_hh
        "wih_f": u(ks[1], (embed_dim, 4 * hidden_dim), lim),
        "whh_f": u(ks[2], (hidden_dim, 4 * hidden_dim), lim),
        "b_f": u(ks[3], (1, 4 * hidden_dim), lim) + u(ks[4], (1, 4 * hidden_dim), lim),
        "wih_b": u(ks[5], (embed_dim, 4 * hidden_dim), lim),
        "whh_b": u(ks[6], (hidden_dim, 4 * hidden_dim), lim),
        "b_b": u(ks[7], (1, 4 * hidden_dim), lim) + u(ks[8], (1, 4 * hidden_dim), lim),
        # hidden2tag (reduction='mean' => Linear(hidden_dim, tag_size)), stored (H,K)
        "w_tag": u(ks[9], (hidden_dim, tag_size), lim),
        "b_tag": u(ks[10], (1, tag_size), lim),
        # CRF params (torchcrf init: uniform(-0.1, 0.1))
        "crf_start": u(ks[11], (1, tag_size), 0.1),
        "crf_end": u(ks[12], (1, tag_size), 0.1),
        "crf_trans": u(ks[13], (tag_size, tag_size), 0.1),
    }


# ----------------------------------------------------------------------------
# Forward wrapper (glue: embedding gather, layout prep, CRF numerator gathers)
# ----------------------------------------------------------------------------
def lstm_crf_forward(params, sentences, tags, mask, state_key):
    B, T = sentences.shape
    E = params["embed"].shape[1]
    H = params["whh_f"].shape[0]
    K = params["crf_trans"].shape[0]

    # embedding lookup, time-major row-flattened, bf16 operands for the MXU
    emb = jnp.take(params["embed"], sentences, axis=0)               # (B,T,E) f32
    emb_tb = jnp.transpose(emb, (1, 0, 2)).reshape(T * B, E).astype(jnp.bfloat16)

    # torch.randn initial states
    k1, k2 = jax.random.split(state_key)
    h0 = jax.random.normal(k1, (2, B, H), jnp.float32)
    c0 = jax.random.normal(k2, (2, B, H), jnp.float32)

    wx = jnp.concatenate([params["wih_f"], params["wih_b"]],
                         axis=1).astype(jnp.bfloat16)                # (E, 8H)
    bx = jnp.concatenate([params["b_f"], params["b_b"]], axis=1)     # (1, 8H)
    whh_f = params["whh_f"].astype(jnp.bfloat16)                     # (H, 4H)
    whh_b = params["whh_b"].astype(jnp.bfloat16)
    wtag_half = 0.5 * params["w_tag"]                                # (H, K)

    maskf = mask.astype(jnp.float32)                                 # (B, T)
    mask_tb1 = jnp.transpose(maskf, (1, 0))[:, :, None]              # (T, B, 1)

    em_flat, logz = pl.pallas_call(
        fused_lstm_crf_kernel,
        out_shape=(jax.ShapeDtypeStruct((T * B, K), jnp.float32),
                   jax.ShapeDtypeStruct((B, 1), jnp.float32)),
        in_specs=[VMEM_SPEC] * 13,
        out_specs=(VMEM_SPEC, VMEM_SPEC),
        scratch_shapes=[pltpu.VMEM((T * B, H), jnp.float32),
                        pltpu.VMEM((T * B, H), jnp.float32)],
        compiler_params=pltpu.CompilerParams(vmem_limit_bytes=32 * 1024 * 1024),
    )(emb_tb, h0, c0, wx, bx, whh_f, whh_b, wtag_half, params["b_tag"],
      mask_tb1, params["crf_start"], params["crf_end"], params["crf_trans"])

    emission = jnp.transpose(em_flat.reshape(T, B, K), (1, 0, 2))    # (B, T, K)

    # CRF numerator via integer gathers (glue; replaces one-hot tensors and the
    # per-step gold-path dot inside the kernel's serial loop).
    em_gold = jnp.take_along_axis(emission, tags[:, :, None], axis=2)[:, :, 0]  # (B,T)
    start_sc = params["crf_start"][0][tags[:, 0]]                               # (B,)
    trans_gold = params["crf_trans"][tags[:, :-1], tags[:, 1:]]                 # (B,T-1)
    last_idx = (jnp.sum(maskf, axis=1) - 1.0).astype(jnp.int32)
    last_tags = tags[jnp.arange(B), last_idx]
    end_sc = params["crf_end"][0][last_tags]                                    # (B,)
    numerator = (start_sc + em_gold[:, 0]
                 + jnp.sum(maskf[:, 1:] * (trans_gold + em_gold[:, 1:]), axis=1)
                 + end_sc)                                                      # (B,)

    log_likelihood = jnp.mean(numerator - logz[:, 0])
    return log_likelihood, emission


if __name__ == "__main__":
    vocab_size, embed_dim, hidden_dim, tag_size = 50, 16, 32, 8
    B, T = 2, 8

    key = jax.random.PRNGKey(0)
    pkey, dkey, tkey, skey = jax.random.split(key, 4)

    params = init_params(pkey, vocab_size, embed_dim, hidden_dim, tag_size)
    sentences = jax.random.randint(dkey, (B, T), 0, vocab_size, dtype=jnp.int32)
    tags = jax.random.randint(tkey, (B, T), 0, tag_size, dtype=jnp.int32)
    lengths = jnp.array([T, 5], dtype=jnp.int32)
    mask = (jnp.arange(T)[None, :] < lengths[:, None]).astype(jnp.int32)  # (B,T) 0/1

    fwd = jax.jit(lstm_crf_forward)
    log_likelihood, emission = fwd(params, sentences, tags, mask, skey)
    log_likelihood = jax.block_until_ready(log_likelihood)
    emission = jax.block_until_ready(emission)

    assert emission.shape == (B, T, tag_size)
    assert bool(jnp.isfinite(log_likelihood))
    print("KERNEL_OK")
</pallas_src>

<mosaic_0001>
module attributes {stable_mosaic.version = 11 : i64} {
  func.func @fused_lstm_crf_kernel(%arg0: memref<16x16xbf16, #tpu.memory_space<vmem>>, %arg1: memref<2x2x32xf32, #tpu.memory_space<vmem>>, %arg2: memref<2x2x32xf32, #tpu.memory_space<vmem>>, %arg3: memref<16x256xbf16, #tpu.memory_space<vmem>>, %arg4: memref<1x256xf32, #tpu.memory_space<vmem>>, %arg5: memref<32x128xbf16, #tpu.memory_space<vmem>>, %arg6: memref<32x128xbf16, #tpu.memory_space<vmem>>, %arg7: memref<32x8xf32, #tpu.memory_space<vmem>>, %arg8: memref<1x8xf32, #tpu.memory_space<vmem>>, %arg9: memref<8x2x1xf32, #tpu.memory_space<vmem>>, %arg10: memref<1x8xf32, #tpu.memory_space<vmem>>, %arg11: memref<1x8xf32, #tpu.memory_space<vmem>>, %arg12: memref<8x8xf32, #tpu.memory_space<vmem>>, %arg13: memref<16x8xf32, #tpu.memory_space<vmem>>, %arg14: memref<2x1xf32, #tpu.memory_space<vmem>>, %arg15: memref<16x32xf32, #tpu.memory_space<vmem>>, %arg16: memref<16x32xf32, #tpu.memory_space<vmem>>) attributes {dimension_semantics = [], scalar_prefetch = 0 : i64, scratch_operands = 2 : i64, tpu.core_type = #tpu.core_type<tc>} {
    %c0 = arith.constant 0 : index
    %c0_0 = arith.constant 0 : index
    %0 = vector.load %arg0[%c0, %c0_0] : memref<16x16xbf16, #tpu.memory_space<vmem>>, vector<16x16xbf16>
    %c0_1 = arith.constant 0 : index
    %c0_2 = arith.constant 0 : index
    %1 = vector.load %arg3[%c0_1, %c0_2] : memref<16x256xbf16, #tpu.memory_space<vmem>>, vector<16x256xbf16>
    %cst = arith.constant dense<0.000000e+00> : vector<16x256xf32>
    %2 = tpu.matmul %0, %1, %cst {dimension_numbers = #tpu.dot_dimension_numbers<[1], [0], [0], [1], [0, 0, 1, 1], [], []>} : vector<16x16xbf16>, vector<16x256xbf16>, vector<16x256xf32> -> vector<16x256xf32>
    %c0_3 = arith.constant 0 : index
    %c0_4 = arith.constant 0 : index
    %3 = vector.load %arg4[%c0_3, %c0_4] : memref<1x256xf32, #tpu.memory_space<vmem>>, vector<1x256xf32>
    %4 = vector.broadcast %3 : vector<1x256xf32> to vector<16x256xf32>
    %5 = arith.addf %2, %4 : vector<16x256xf32>
    %c0_5 = arith.constant 0 : index
    %c0_6 = arith.constant 0 : index
    %6 = vector.load %arg5[%c0_5, %c0_6] : memref<32x128xbf16, #tpu.memory_space<vmem>>, vector<32x128xbf16>
    %c0_7 = arith.constant 0 : index
    %c0_8 = arith.constant 0 : index
    %7 = vector.load %arg6[%c0_7, %c0_8] : memref<32x128xbf16, #tpu.memory_space<vmem>>, vector<32x128xbf16>
    %c0_9 = arith.constant 0 : index
    %c0_10 = arith.constant 0 : index
    %c0_11 = arith.constant 0 : index
    %8 = vector.load %arg1[%c0_9, %c0_10, %c0_11] : memref<2x2x32xf32, #tpu.memory_space<vmem>>, vector<1x2x32xf32>
    %9 = vector.shape_cast %8 : vector<1x2x32xf32> to vector<2x32xf32>
    %c0_12 = arith.constant 0 : index
    %c0_13 = arith.constant 0 : index
    %c0_14 = arith.constant 0 : index
    %10 = vector.load %arg2[%c0_12, %c0_13, %c0_14] : memref<2x2x32xf32, #tpu.memory_space<vmem>>, vector<1x2x32xf32>
    %11 = vector.shape_cast %10 : vector<1x2x32xf32> to vector<2x32xf32>
    %c1 = arith.constant 1 : index
    %c0_15 = arith.constant 0 : index
    %c0_16 = arith.constant 0 : index
    %12 = vector.load %arg1[%c1, %c0_15, %c0_16] : memref<2x2x32xf32, #tpu.memory_space<vmem>>, vector<1x2x32xf32>
    %13 = vector.shape_cast %12 : vector<1x2x32xf32> to vector<2x32xf32>
    %c1_17 = arith.constant 1 : index
    %c0_18 = arith.constant 0 : index
    %c0_19 = arith.constant 0 : index
    %14 = vector.load %arg2[%c1_17, %c0_18, %c0_19] : memref<2x2x32xf32, #tpu.memory_space<vmem>>, vector<1x2x32xf32>
    %15 = vector.shape_cast %14 : vector<1x2x32xf32> to vector<2x32xf32>
    %16 = vector.extract_strided_slice %5 {offsets = [0, 0], sizes = [2, 128], strides = [1, 1]} : vector<16x256xf32> to vector<2x128xf32>
    %17 = arith.truncf %9 : vector<2x32xf32> to vector<2x32xbf16>
    %cst_20 = arith.constant dense<0.000000e+00> : vector<2x128xf32>
    %18 = tpu.matmul %17, %6, %cst_20 {dimension_numbers = #tpu.dot_dimension_numbers<[1], [0], [0], [1], [0, 0, 1, 1], [], []>} : vector<2x32xbf16>, vector<32x128xbf16>, vector<2x128xf32> -> vector<2x128xf32>
    %19 = arith.addf %16, %18 : vector<2x128xf32>
    %20 = arith.negf %19 : vector<2x128xf32>
    %21 = math.exp %20 : vector<2x128xf32>
    %cst_21 = arith.constant 1.000000e+00 : f32
    %22 = vector.broadcast %cst_21 : f32 to vector<2x128xf32>
    %23 = arith.addf %22, %21 : vector<2x128xf32>
    %24 = arith.divf %22, %23 : vector<2x128xf32>
    %25 = math.tanh %19 : vector<2x128xf32>
    %26 = vector.extract_strided_slice %24 {offsets = [0, 0], sizes = [2, 32], strides = [1, 1]} : vector<2x128xf32> to vector<2x32xf32>
    %27 = vector.extract_strided_slice %24 {offsets = [0, 32], sizes = [2, 32], strides = [1, 1]} : vector<2x128xf32> to vector<2x32xf32>
    %28 = vector.extract_strided_slice %25 {offsets = [0, 64], sizes = [2, 32], strides = [1, 1]} : vector<2x128xf32> to vector<2x32xf32>
    %29 = vector.extract_strided_slice %24 {offsets = [0, 96], sizes = [2, 32], strides = [1, 1]} : vector<2x128xf32> to vector<2x32xf32>
    %30 = arith.mulf %27, %11 : vector<2x32xf32>
    %31 = arith.mulf %26, %28 : vector<2x32xf32>
    %32 = arith.addf %30, %31 : vector<2x32xf32>
    %33 = math.tanh %32 : vector<2x32xf32>
    %34 = arith.mulf %29, %33 : vector<2x32xf32>
    %c0_22 = arith.constant 0 : index
    %c0_23 = arith.constant 0 : index
    %35 = vector.load %arg15[%c0_22, %c0_23] : memref<16x32xf32, #tpu.memory_space<vmem>>, vector<2x32xf32>
    tpu.vector_store %arg15[%c0_22, %c0_23], %34 {strides = array<i32>} : memref<16x32xf32, #tpu.memory_space<vmem>>, vector<2x32xf32>,
    %36 = vector.extract_strided_slice %5 {offsets = [14, 128], sizes = [2, 128], strides = [1, 1]} : vector<16x256xf32> to vector<2x128xf32>
    %37 = arith.truncf %13 : vector<2x32xf32> to vector<2x32xbf16>
    %cst_24 = arith.constant dense<0.000000e+00> : vector<2x128xf32>
    %38 = tpu.matmul %37, %7, %cst_24 {dimension_numbers = #tpu.dot_dimension_numbers<[1], [0], [0], [1], [0, 0, 1, 1], [], []>} : vector<2x32xbf16>, vector<32x128xbf16>, vector<2x128xf32> -> vector<2x128xf32>
    %39 = arith.addf %36, %38 : vector<2x128xf32>
    %40 = arith.negf %39 : vector<2x128xf32>
    %41 = math.exp %40 : vector<2x128xf32>
    %cst_25 = arith.constant 1.000000e+00 : f32
    %42 = vector.broadcast %cst_25 : f32 to vector<2x128xf32>
    %43 = arith.addf %42, %41 : vector<2x128xf32>
    %44 = arith.divf %42, %43 : vector<2x128xf32>
    %45 = math.tanh %39 : vector<2x128xf32>
    %46 = vector.extract_strided_slice %44 {offsets = [0, 0], sizes = [2, 32], strides = [1, 1]} : vector<2x128xf32> to vector<2x32xf32>
    %47 = vector.extract_strided_slice %44 {offsets = [0, 32], sizes = [2, 32], strides = [1, 1]} : vector<2x128xf32> to vector<2x32xf32>
    %48 = vector.extract_strided_slice %45 {offsets = [0, 64], sizes = [2, 32], strides = [1, 1]} : vector<2x128xf32> to vector<2x32xf32>
    %49 = vector.extract_strided_slice %44 {offsets = [0, 96], sizes = [2, 32], strides = [1, 1]} : vector<2x128xf32> to vector<2x32xf32>
    %50 = arith.mulf %47, %15 : vector<2x32xf32>
    %51 = arith.mulf %46, %48 : vector<2x32xf32>
    %52 = arith.addf %50, %51 : vector<2x32xf32>
    %53 = math.tanh %52 : vector<2x32xf32>
    %54 = arith.mulf %49, %53 : vector<2x32xf32>
    %c14 = arith.constant 14 : index
    %c0_26 = arith.constant 0 : index
    %55 = vector.load %arg16[%c14, %c0_26] : memref<16x32xf32, #tpu.memory_space<vmem>>, vector<2x32xf32>
    tpu.vector_store %arg16[%c14, %c0_26], %54 {strides = array<i32>} : memref<16x32xf32, #tpu.memory_space<vmem>>, vector<2x32xf32>,
    %56 = vector.extract_strided_slice %5 {offsets = [2, 0], sizes = [2, 128], strides = [1, 1]} : vector<16x256xf32> to vector<2x128xf32>
    %57 = arith.truncf %34 : vector<2x32xf32> to vector<2x32xbf16>
    %cst_27 = arith.constant dense<0.000000e+00> : vector<2x128xf32>
    %58 = tpu.matmul %57, %6, %cst_27 {dimension_numbers = #tpu.dot_dimension_numbers<[1], [0], [0], [1], [0, 0, 1, 1], [], []>} : vector<2x32xbf16>, vector<32x128xbf16>, vector<2x128xf32> -> vector<2x128xf32>
    %59 = arith.addf %56, %58 : vector<2x128xf32>
    %60 = arith.negf %59 : vector<2x128xf32>
    %61 = math.exp %60 : vector<2x128xf32>
    %cst_28 = arith.constant 1.000000e+00 : f32
    %62 = vector.broadcast %cst_28 : f32 to vector<2x128xf32>
    %63 = arith.addf %62, %61 : vector<2x128xf32>
    %64 = arith.divf %62, %63 : vector<2x128xf32>
    %65 = math.tanh %59 : vector<2x128xf32>
    %66 = vector.extract_strided_slice %64 {offsets = [0, 0], sizes = [2, 32], strides = [1, 1]} : vector<2x128xf32> to vector<2x32xf32>
    %67 = vector.extract_strided_slice %64 {offsets = [0, 32], sizes = [2, 32], strides = [1, 1]} : vector<2x128xf32> to vector<2x32xf32>
    %68 = vector.extract_strided_slice %65 {offsets = [0, 64], sizes = [2, 32], strides = [1, 1]} : vector<2x128xf32> to vector<2x32xf32>
    %69 = vector.extract_strided_slice %64 {offsets = [0, 96], sizes = [2, 32], strides = [1, 1]} : vector<2x128xf32> to vector<2x32xf32>
    %70 = arith.mulf %67, %32 : vector<2x32xf32>
    %71 = arith.mulf %66, %68 : vector<2x32xf32>
    %72 = arith.addf %70, %71 : vector<2x32xf32>
    %73 = math.tanh %72 : vector<2x32xf32>
    %74 = arith.mulf %69, %73 : vector<2x32xf32>
    %c2 = arith.constant 2 : index
    %c0_29 = arith.constant 0 : index
    %75 = vector.load %arg15[%c2, %c0_29] : memref<16x32xf32, #tpu.memory_space<vmem>>, vector<2x32xf32>
    tpu.vector_store %arg15[%c2, %c0_29], %74 {strides = array<i32>} : memref<16x32xf32, #tpu.memory_space<vmem>>, vector<2x32xf32>,
    %76 = vector.extract_strided_slice %5 {offsets = [12, 128], sizes = [2, 128], strides = [1, 1]} : vector<16x256xf32> to vector<2x128xf32>
    %77 = arith.truncf %54 : vector<2x32xf32> to vector<2x32xbf16>
    %cst_30 = arith.constant dense<0.000000e+00> : vector<2x128xf32>
    %78 = tpu.matmul %77, %7, %cst_30 {dimension_numbers = #tpu.dot_dimension_numbers<[1], [0], [0], [1], [0, 0, 1, 1], [], []>} : vector<2x32xbf16>, vector<32x128xbf16>, vector<2x128xf32> -> vector<2x128xf32>
    %79 = arith.addf %76, %78 : vector<2x128xf32>
    %80 = arith.negf %79 : vector<2x128xf32>
    %81 = math.exp %80 : vector<2x128xf32>
    %cst_31 = arith.constant 1.000000e+00 : f32
    %82 = vector.broadcast %cst_31 : f32 to vector<2x128xf32>
    %83 = arith.addf %82, %81 : vector<2x128xf32>
    %84 = arith.divf %82, %83 : vector<2x128xf32>
    %85 = math.tanh %79 : vector<2x128xf32>
    %86 = vector.extract_strided_slice %84 {offsets = [0, 0], sizes = [2, 32], strides = [1, 1]} : vector<2x128xf32> to vector<2x32xf32>
    %87 = vector.extract_strided_slice %84 {offsets = [0, 32], sizes = [2, 32], strides = [1, 1]} : vector<2x128xf32> to vector<2x32xf32>
    %88 = vector.extract_strided_slice %85 {offsets = [0, 64], sizes = [2, 32], strides = [1, 1]} : vector<2x128xf32> to vector<2x32xf32>
    %89 = vector.extract_strided_slice %84 {offsets = [0, 96], sizes = [2, 32], strides = [1, 1]} : vector<2x128xf32> to vector<2x32xf32>
    %90 = arith.mulf %87, %52 : vector<2x32xf32>
    %91 = arith.mulf %86, %88 : vector<2x32xf32>
    %92 = arith.addf %90, %91 : vector<2x32xf32>
    %93 = math.tanh %92 : vector<2x32xf32>
    %94 = arith.mulf %89, %93 : vector<2x32xf32>
    %c12 = arith.constant 12 : index
    %c0_32 = arith.constant 0 : index
    %95 = vector.load %arg16[%c12, %c0_32] : memref<16x32xf32, #tpu.memory_space<vmem>>, vector<2x32xf32>
    tpu.vector_store %arg16[%c12, %c0_32], %94 {strides = array<i32>} : memref<16x32xf32, #tpu.memory_space<vmem>>, vector<2x32xf32>,
    %96 = vector.extract_strided_slice %5 {offsets = [4, 0], sizes = [2, 128], strides = [1, 1]} : vector<16x256xf32> to vector<2x128xf32>
    %97 = arith.truncf %74 : vector<2x32xf32> to vector<2x32xbf16>
    %cst_33 = arith.constant dense<0.000000e+00> : vector<2x128xf32>
    %98 = tpu.matmul %97, %6, %cst_33 {dimension_numbers = #tpu.dot_dimension_numbers<[1], [0], [0], [1], [0, 0, 1, 1], [], []>} : vector<2x32xbf16>, vector<32x128xbf16>, vector<2x128xf32> -> vector<2x128xf32>
    %99 = arith.addf %96, %98 : vector<2x128xf32>
    %100 = arith.negf %99 : vector<2x128xf32>
    %101 = math.exp %100 : vector<2x128xf32>
    %cst_34 = arith.constant 1.000000e+00 : f32
    %102 = vector.broadcast %cst_34 : f32 to vector<2x128xf32>
    %103 = arith.addf %102, %101 : vector<2x128xf32>
    %104 = arith.divf %102, %103 : vector<2x128xf32>
    %105 = math.tanh %99 : vector<2x128xf32>
    %106 = vector.extract_strided_slice %104 {offsets = [0, 0], sizes = [2, 32], strides = [1, 1]} : vector<2x128xf32> to vector<2x32xf32>
    %107 = vector.extract_strided_slice %104 {offsets = [0, 32], sizes = [2, 32], strides = [1, 1]} : vector<2x128xf32> to vector<2x32xf32>
    %108 = vector.extract_strided_slice %105 {offsets = [0, 64], sizes = [2, 32], strides = [1, 1]} : vector<2x128xf32> to vector<2x32xf32>
    %109 = vector.extract_strided_slice %104 {offsets = [0, 96], sizes = [2, 32], strides = [1, 1]} : vector<2x128xf32> to vector<2x32xf32>
    %110 = arith.mulf %107, %72 : vector<2x32xf32>
    %111 = arith.mulf %106, %108 : vector<2x32xf32>
    %112 = arith.addf %110, %111 : vector<2x32xf32>
    %113 = math.tanh %112 : vector<2x32xf32>
    %114 = arith.mulf %109, %113 : vector<2x32xf32>
    %c4 = arith.constant 4 : index
    %c0_35 = arith.constant 0 : index
    %115 = vector.load %arg15[%c4, %c0_35] : memref<16x32xf32, #tpu.memory_space<vmem>>, vector<2x32xf32>
    tpu.vector_store %arg15[%c4, %c0_35], %114 {strides = array<i32>} : memref<16x32xf32, #tpu.memory_space<vmem>>, vector<2x32xf32>,
    %116 = vector.extract_strided_slice %5 {offsets = [10, 128], sizes = [2, 128], strides = [1, 1]} : vector<16x256xf32> to vector<2x128xf32>
    %117 = arith.truncf %94 : vector<2x32xf32> to vector<2x32xbf16>
    %cst_36 = arith.constant dense<0.000000e+00> : vector<2x128xf32>
    %118 = tpu.matmul %117, %7, %cst_36 {dimension_numbers = #tpu.dot_dimension_numbers<[1], [0], [0], [1], [0, 0, 1, 1], [], []>} : vector<2x32xbf16>, vector<32x128xbf16>, vector<2x128xf32> -> vector<2x128xf32>
    %119 = arith.addf %116, %118 : vector<2x128xf32>
    %120 = arith.negf %119 : vector<2x128xf32>
    %121 = math.exp %120 : vector<2x128xf32>
    %cst_37 = arith.constant 1.000000e+00 : f32
    %122 = vector.broadcast %cst_37 : f32 to vector<2x128xf32>
    %123 = arith.addf %122, %121 : vector<2x128xf32>
    %124 = arith.divf %122, %123 : vector<2x128xf32>
    %125 = math.tanh %119 : vector<2x128xf32>
    %126 = vector.extract_strided_slice %124 {offsets = [0, 0], sizes = [2, 32], strides = [1, 1]} : vector<2x128xf32> to vector<2x32xf32>
    %127 = vector.extract_strided_slice %124 {offsets = [0, 32], sizes = [2, 32], strides = [1, 1]} : vector<2x128xf32> to vector<2x32xf32>
    %128 = vector.extract_strided_slice %125 {offsets = [0, 64], sizes = [2, 32], strides = [1, 1]} : vector<2x128xf32> to vector<2x32xf32>
    %129 = vector.extract_strided_slice %124 {offsets = [0, 96], sizes = [2, 32], strides = [1, 1]} : vector<2x128xf32> to vector<2x32xf32>
    %130 = arith.mulf %127, %92 : vector<2x32xf32>
    %131 = arith.mulf %126, %128 : vector<2x32xf32>
    %132 = arith.addf %130, %131 : vector<2x32xf32>
    %133 = math.tanh %132 : vector<2x32xf32>
    %134 = arith.mulf %129, %133 : vector<2x32xf32>
    %c10 = arith.constant 10 : index
    %c0_38 = arith.constant 0 : index
    %135 = vector.load %arg16[%c10, %c0_38] : memref<16x32xf32, #tpu.memory_space<vmem>>, vector<2x32xf32>
    tpu.vector_store %arg16[%c10, %c0_38], %134 {strides = array<i32>} : memref<16x32xf32, #tpu.memory_space<vmem>>, vector<2x32xf32>,
    %136 = vector.extract_strided_slice %5 {offsets = [6, 0], sizes = [2, 128], strides = [1, 1]} : vector<16x256xf32> to vector<2x128xf32>
    %137 = arith.truncf %114 : vector<2x32xf32> to vector<2x32xbf16>
    %cst_39 = arith.constant dense<0.000000e+00> : vector<2x128xf32>
    %138 = tpu.matmul %137, %6, %cst_39 {dimension_numbers = #tpu.dot_dimension_numbers<[1], [0], [0], [1], [0, 0, 1, 1], [], []>} : vector<2x32xbf16>, vector<32x128xbf16>, vector<2x128xf32> -> vector<2x128xf32>
    %139 = arith.addf %136, %138 : vector<2x128xf32>
    %140 = arith.negf %139 : vector<2x128xf32>
    %141 = math.exp %140 : vector<2x128xf32>
    %cst_40 = arith.constant 1.000000e+00 : f32
    %142 = vector.broadcast %cst_40 : f32 to vector<2x128xf32>
    %143 = arith.addf %142, %141 : vector<2x128xf32>
    %144 = arith.divf %142, %143 : vector<2x128xf32>
    %145 = math.tanh %139 : vector<2x128xf32>
    %146 = vector.extract_strided_slice %144 {offsets = [0, 0], sizes = [2, 32], strides = [1, 1]} : vector<2x128xf32> to vector<2x32xf32>
    %147 = vector.extract_strided_slice %144 {offsets = [0, 32], sizes = [2, 32], strides = [1, 1]} : vector<2x128xf32> to vector<2x32xf32>
    %148 = vector.extract_strided_slice %145 {offsets = [0, 64], sizes = [2, 32], strides = [1, 1]} : vector<2x128xf32> to vector<2x32xf32>
    %149 = vector.extract_strided_slice %144 {offsets = [0, 96], sizes = [2, 32], strides = [1, 1]} : vector<2x128xf32> to vector<2x32xf32>
    %150 = arith.mulf %147, %112 : vector<2x32xf32>
    %151 = arith.mulf %146, %148 : vector<2x32xf32>
    %152 = arith.addf %150, %151 : vector<2x32xf32>
    %153 = math.tanh %152 : vector<2x32xf32>
    %154 = arith.mulf %149, %153 : vector<2x32xf32>
    %c6 = arith.constant 6 : index
    %c0_41 = arith.constant 0 : index
    %155 = vector.load %arg15[%c6, %c0_41] : memref<16x32xf32, #tpu.memory_space<vmem>>, vector<2x32xf32>
    tpu.vector_store %arg15[%c6, %c0_41], %154 {strides = array<i32>} : memref<16x32xf32, #tpu.memory_space<vmem>>, vector<2x32xf32>,
    %156 = vector.extract_strided_slice %5 {offsets = [8, 128], sizes = [2, 128], strides = [1, 1]} : vector<16x256xf32> to vector<2x128xf32>
    %157 = arith.truncf %134 : vector<2x32xf32> to vector<2x32xbf16>
    %cst_42 = arith.constant dense<0.000000e+00> : vector<2x128xf32>
    %158 = tpu.matmul %157, %7, %cst_42 {dimension_numbers = #tpu.dot_dimension_numbers<[1], [0], [0], [1], [0, 0, 1, 1], [], []>} : vector<2x32xbf16>, vector<32x128xbf16>, vector<2x128xf32> -> vector<2x128xf32>
    %159 = arith.addf %156, %158 : vector<2x128xf32>
    %160 = arith.negf %159 : vector<2x128xf32>
    %161 = math.exp %160 : vector<2x128xf32>
    %cst_43 = arith.constant 1.000000e+00 : f32
    %162 = vector.broadcast %cst_43 : f32 to vector<2x128xf32>
    %163 = arith.addf %162, %161 : vector<2x128xf32>
    %164 = arith.divf %162, %163 : vector<2x128xf32>
    %165 = math.tanh %159 : vector<2x128xf32>
    %166 = vector.extract_strided_slice %164 {offsets = [0, 0], sizes = [2, 32], strides = [1, 1]} : vector<2x128xf32> to vector<2x32xf32>
    %167 = vector.extract_strided_slice %164 {offsets = [0, 32], sizes = [2, 32], strides = [1, 1]} : vector<2x128xf32> to vector<2x32xf32>
    %168 = vector.extract_strided_slice %165 {offsets = [0, 64], sizes = [2, 32], strides = [1, 1]} : vector<2x128xf32> to vector<2x32xf32>
    %169 = vector.extract_strided_slice %164 {offsets = [0, 96], sizes = [2, 32], strides = [1, 1]} : vector<2x128xf32> to vector<2x32xf32>
    %170 = arith.mulf %167, %132 : vector<2x32xf32>
    %171 = arith.mulf %166, %168 : vector<2x32xf32>
    %172 = arith.addf %170, %171 : vector<2x32xf32>
    %173 = math.tanh %172 : vector<2x32xf32>
    %174 = arith.mulf %169, %173 : vector<2x32xf32>
    %c8 = arith.constant 8 : index
    %c0_44 = arith.constant 0 : index
    %175 = vector.load %arg16[%c8, %c0_44] : memref<16x32xf32, #tpu.memory_space<vmem>>, vector<2x32xf32>
    tpu.vector_store %arg16[%c8, %c0_44], %174 {strides = array<i32>} : memref<16x32xf32, #tpu.memory_space<vmem>>, vector<2x32xf32>,
    %176 = vector.extract_strided_slice %5 {offsets = [8, 0], sizes = [2, 128], strides = [1, 1]} : vector<16x256xf32> to vector<2x128xf32>
    %177 = arith.truncf %154 : vector<2x32xf32> to vector<2x32xbf16>
    %cst_45 = arith.constant dense<0.000000e+00> : vector<2x128xf32>
    %178 = tpu.matmul %177, %6, %cst_45 {dimension_numbers = #tpu.dot_dimension_numbers<[1], [0], [0], [1], [0, 0, 1, 1], [], []>} : vector<2x32xbf16>, vector<32x128xbf16>, vector<2x128xf32> -> vector<2x128xf32>
    %179 = arith.addf %176, %178 : vector<2x128xf32>
    %180 = arith.negf %179 : vector<2x128xf32>
    %181 = math.exp %180 : vector<2x128xf32>
    %cst_46 = arith.constant 1.000000e+00 : f32
    %182 = vector.broadcast %cst_46 : f32 to vector<2x128xf32>
    %183 = arith.addf %182, %181 : vector<2x128xf32>
    %184 = arith.divf %182, %183 : vector<2x128xf32>
    %185 = math.tanh %179 : vector<2x128xf32>
    %186 = vector.extract_strided_slice %184 {offsets = [0, 0], sizes = [2, 32], strides = [1, 1]} : vector<2x128xf32> to vector<2x32xf32>
    %187 = vector.extract_strided_slice %184 {offsets = [0, 32], sizes = [2, 32], strides = [1, 1]} : vector<2x128xf32> to vector<2x32xf32>
    %188 = vector.extract_strided_slice %185 {offsets = [0, 64], sizes = [2, 32], strides = [1, 1]} : vector<2x128xf32> to vector<2x32xf32>
    %189 = vector.extract_strided_slice %184 {offsets = [0, 96], sizes = [2, 32], strides = [1, 1]} : vector<2x128xf32> to vector<2x32xf32>
    %190 = arith.mulf %187, %152 : vector<2x32xf32>
    %191 = arith.mulf %186, %188 : vector<2x32xf32>
    %192 = arith.addf %190, %191 : vector<2x32xf32>
    %193 = math.tanh %192 : vector<2x32xf32>
    %194 = arith.mulf %189, %193 : vector<2x32xf32>
    %c8_47 = arith.constant 8 : index
    %c0_48 = arith.constant 0 : index
    %195 = vector.load %arg15[%c8_47, %c0_48] : memref<16x32xf32, #tpu.memory_space<vmem>>, vector<2x32xf32>
    tpu.vector_store %arg15[%c8_47, %c0_48], %194 {strides = array<i32>} : memref<16x32xf32, #tpu.memory_space<vmem>>, vector<2x32xf32>,
    %196 = vector.extract_strided_slice %5 {offsets = [6, 128], sizes = [2, 128], strides = [1, 1]} : vector<16x256xf32> to vector<2x128xf32>
    %197 = arith.truncf %174 : vector<2x32xf32> to vector<2x32xbf16>
    %cst_49 = arith.constant dense<0.000000e+00> : vector<2x128xf32>
    %198 = tpu.matmul %197, %7, %cst_49 {dimension_numbers = #tpu.dot_dimension_numbers<[1], [0], [0], [1], [0, 0, 1, 1], [], []>} : vector<2x32xbf16>, vector<32x128xbf16>, vector<2x128xf32> -> vector<2x128xf32>
    %199 = arith.addf %196, %198 : vector<2x128xf32>
    %200 = arith.negf %199 : vector<2x128xf32>
    %201 = math.exp %200 : vector<2x128xf32>
    %cst_50 = arith.constant 1.000000e+00 : f32
    %202 = vector.broadcast %cst_50 : f32 to vector<2x128xf32>
    %203 = arith.addf %202, %201 : vector<2x128xf32>
    %204 = arith.divf %202, %203 : vector<2x128xf32>
    %205 = math.tanh %199 : vector<2x128xf32>
    %206 = vector.extract_strided_slice %204 {offsets = [0, 0], sizes = [2, 32], strides = [1, 1]} : vector<2x128xf32> to vector<2x32xf32>
    %207 = vector.extract_strided_slice %204 {offsets = [0, 32], sizes = [2, 32], strides = [1, 1]} : vector<2x128xf32> to vector<2x32xf32>
    %208 = vector.extract_strided_slice %205 {offsets = [0, 64], sizes = [2, 32], strides = [1, 1]} : vector<2x128xf32> to vector<2x32xf32>
    %209 = vector.extract_strided_slice %204 {offsets = [0, 96], sizes = [2, 32], strides = [1, 1]} : vector<2x128xf32> to vector<2x32xf32>
    %210 = arith.mulf %207, %172 : vector<2x32xf32>
    %211 = arith.mulf %206, %208 : vector<2x32xf32>
    %212 = arith.addf %210, %211 : vector<2x32xf32>
    %213 = math.tanh %212 : vector<2x32xf32>
    %214 = arith.mulf %209, %213 : vector<2x32xf32>
    %c6_51 = arith.constant 6 : index
    %c0_52 = arith.constant 0 : index
    %215 = vector.load %arg16[%c6_51, %c0_52] : memref<16x32xf32, #tpu.memory_space<vmem>>, vector<2x32xf32>
    tpu.vector_store %arg16[%c6_51, %c0_52], %214 {strides = array<i32>} : memref<16x32xf32, #tpu.memory_space<vmem>>, vector<2x32xf32>,
    %216 = vector.extract_strided_slice %5 {offsets = [10, 0], sizes = [2, 128], strides = [1, 1]} : vector<16x256xf32> to vector<2x128xf32>
    %217 = arith.truncf %194 : vector<2x32xf32> to vector<2x32xbf16>
    %cst_53 = arith.constant dense<0.000000e+00> : vector<2x128xf32>
    %218 = tpu.matmul %217, %6, %cst_53 {dimension_numbers = #tpu.dot_dimension_numbers<[1], [0], [0], [1], [0, 0, 1, 1], [], []>} : vector<2x32xbf16>, vector<32x128xbf16>, vector<2x128xf32> -> vector<2x128xf32>
    %219 = arith.addf %216, %218 : vector<2x128xf32>
    %220 = arith.negf %219 : vector<2x128xf32>
    %221 = math.exp %220 : vector<2x128xf32>
    %cst_54 = arith.constant 1.000000e+00 : f32
    %222 = vector.broadcast %cst_54 : f32 to vector<2x128xf32>
    %223 = arith.addf %222, %221 : vector<2x128xf32>
    %224 = arith.divf %222, %223 : vector<2x128xf32>
    %225 = math.tanh %219 : vector<2x128xf32>
    %226 = vector.extract_strided_slice %224 {offsets = [0, 0], sizes = [2, 32], strides = [1, 1]} : vector<2x128xf32> to vector<2x32xf32>
    %227 = vector.extract_strided_slice %224 {offsets = [0, 32], sizes = [2, 32], strides = [1, 1]} : vector<2x128xf32> to vector<2x32xf32>
    %228 = vector.extract_strided_slice %225 {offsets = [0, 64], sizes = [2, 32], strides = [1, 1]} : vector<2x128xf32> to vector<2x32xf32>
    %229 = vector.extract_strided_slice %224 {offsets = [0, 96], sizes = [2, 32], strides = [1, 1]} : vector<2x128xf32> to vector<2x32xf32>
    %230 = arith.mulf %227, %192 : vector<2x32xf32>
    %231 = arith.mulf %226, %228 : vector<2x32xf32>
    %232 = arith.addf %230, %231 : vector<2x32xf32>
    %233 = math.tanh %232 : vector<2x32xf32>
    %234 = arith.mulf %229, %233 : vector<2x32xf32>
    %c10_55 = arith.constant 10 : index
    %c0_56 = arith.constant 0 : index
    %235 = vector.load %arg15[%c10_55, %c0_56] : memref<16x32xf32, #tpu.memory_space<vmem>>, vector<2x32xf32>
    tpu.vector_store %arg15[%c10_55, %c0_56], %234 {strides = array<i32>} : memref<16x32xf32, #tpu.memory_space<vmem>>, vector<2x32xf32>,
    %236 = vector.extract_strided_slice %5 {offsets = [4, 128], sizes = [2, 128], strides = [1, 1]} : vector<16x256xf32> to vector<2x128xf32>
    %237 = arith.truncf %214 : vector<2x32xf32> to vector<2x32xbf16>
    %cst_57 = arith.constant dense<0.000000e+00> : vector<2x128xf32>
    %238 = tpu.matmul %237, %7, %cst_57 {dimension_numbers = #tpu.dot_dimension_numbers<[1], [0], [0], [1], [0, 0, 1, 1], [], []>} : vector<2x32xbf16>, vector<32x128xbf16>, vector<2x128xf32> -> vector<2x128xf32>
    %239 = arith.addf %236, %238 : vector<2x128xf32>
    %240 = arith.negf %239 : vector<2x128xf32>
    %241 = math.exp %240 : vector<2x128xf32>
    %cst_58 = arith.constant 1.000000e+00 : f32
    %242 = vector.broadcast %cst_58 : f32 to vector<2x128xf32>
    %243 = arith.addf %242, %241 : vector<2x128xf32>
    %244 = arith.divf %242, %243 : vector<2x128xf32>
    %245 = math.tanh %239 : vector<2x128xf32>
    %246 = vector.extract_strided_slice %244 {offsets = [0, 0], sizes = [2, 32], strides = [1, 1]} : vector<2x128xf32> to vector<2x32xf32>
    %247 = vector.extract_strided_slice %244 {offsets = [0, 32], sizes = [2, 32], strides = [1, 1]} : vector<2x128xf32> to vector<2x32xf32>
    %248 = vector.extract_strided_slice %245 {offsets = [0, 64], sizes = [2, 32], strides = [1, 1]} : vector<2x128xf32> to vector<2x32xf32>
    %249 = vector.extract_strided_slice %244 {offsets = [0, 96], sizes = [2, 32], strides = [1, 1]} : vector<2x128xf32> to vector<2x32xf32>
    %250 = arith.mulf %247, %212 : vector<2x32xf32>
    %251 = arith.mulf %246, %248 : vector<2x32xf32>
    %252 = arith.addf %250, %251 : vector<2x32xf32>
    %253 = math.tanh %252 : vector<2x32xf32>
    %254 = arith.mulf %249, %253 : vector<2x32xf32>
    %c4_59 = arith.constant 4 : index
    %c0_60 = arith.constant 0 : index
    %255 = vector.load %arg16[%c4_59, %c0_60] : memref<16x32xf32, #tpu.memory_space<vmem>>, vector<2x32xf32>
    tpu.vector_store %arg16[%c4_59, %c0_60], %254 {strides = array<i32>} : memref<16x32xf32, #tpu.memory_space<vmem>>, vector<2x32xf32>,
    %256 = vector.extract_strided_slice %5 {offsets = [12, 0], sizes = [2, 128], strides = [1, 1]} : vector<16x256xf32> to vector<2x128xf32>
    %257 = arith.truncf %234 : vector<2x32xf32> to vector<2x32xbf16>
    %cst_61 = arith.constant dense<0.000000e+00> : vector<2x128xf32>
    %258 = tpu.matmul %257, %6, %cst_61 {dimension_numbers = #tpu.dot_dimension_numbers<[1], [0], [0], [1], [0, 0, 1, 1], [], []>} : vector<2x32xbf16>, vector<32x128xbf16>, vector<2x128xf32> -> vector<2x128xf32>
    %259 = arith.addf %256, %258 : vector<2x128xf32>
    %260 = arith.negf %259 : vector<2x128xf32>
    %261 = math.exp %260 : vector<2x128xf32>
    %cst_62 = arith.constant 1.000000e+00 : f32
    %262 = vector.broadcast %cst_62 : f32 to vector<2x128xf32>
    %263 = arith.addf %262, %261 : vector<2x128xf32>
    %264 = arith.divf %262, %263 : vector<2x128xf32>
    %265 = math.tanh %259 : vector<2x128xf32>
    %266 = vector.extract_strided_slice %264 {offsets = [0, 0], sizes = [2, 32], strides = [1, 1]} : vector<2x128xf32> to vector<2x32xf32>
    %267 = vector.extract_strided_slice %264 {offsets = [0, 32], sizes = [2, 32], strides = [1, 1]} : vector<2x128xf32> to vector<2x32xf32>
    %268 = vector.extract_strided_slice %265 {offsets = [0, 64], sizes = [2, 32], strides = [1, 1]} : vector<2x128xf32> to vector<2x32xf32>
    %269 = vector.extract_strided_slice %264 {offsets = [0, 96], sizes = [2, 32], strides = [1, 1]} : vector<2x128xf32> to vector<2x32xf32>
    %270 = arith.mulf %267, %232 : vector<2x32xf32>
    %271 = arith.mulf %266, %268 : vector<2x32xf32>
    %272 = arith.addf %270, %271 : vector<2x32xf32>
    %273 = math.tanh %272 : vector<2x32xf32>
    %274 = arith.mulf %269, %273 : vector<2x32xf32>
    %c12_63 = arith.constant 12 : index
    %c0_64 = arith.constant 0 : index
    %275 = vector.load %arg15[%c12_63, %c0_64] : memref<16x32xf32, #tpu.memory_space<vmem>>, vector<2x32xf32>
    tpu.vector_store %arg15[%c12_63, %c0_64], %274 {strides = array<i32>} : memref<16x32xf32, #tpu.memory_space<vmem>>, vector<2x32xf32>,
    %276 = vector.extract_strided_slice %5 {offsets = [2, 128], sizes = [2, 128], strides = [1, 1]} : vector<16x256xf32> to vector<2x128xf32>
    %277 = arith.truncf %254 : vector<2x32xf32> to vector<2x32xbf16>
    %cst_65 = arith.constant dense<0.000000e+00> : vector<2x128xf32>
    %278 = tpu.matmul %277, %7, %cst_65 {dimension_numbers = #tpu.dot_dimension_numbers<[1], [0], [0], [1], [0, 0, 1, 1], [], []>} : vector<2x32xbf16>, vector<32x128xbf16>, vector<2x128xf32> -> vector<2x128xf32>
    %279 = arith.addf %276, %278 : vector<2x128xf32>
    %280 = arith.negf %279 : vector<2x128xf32>
    %281 = math.exp %280 : vector<2x128xf32>
    %cst_66 = arith.constant 1.000000e+00 : f32
    %282 = vector.broadcast %cst_66 : f32 to vector<2x128xf32>
    %283 = arith.addf %282, %281 : vector<2x128xf32>
    %284 = arith.divf %282, %283 : vector<2x128xf32>
    %285 = math.tanh %279 : vector<2x128xf32>
    %286 = vector.extract_strided_slice %284 {offsets = [0, 0], sizes = [2, 32], strides = [1, 1]} : vector<2x128xf32> to vector<2x32xf32>
    %287 = vector.extract_strided_slice %284 {offsets = [0, 32], sizes = [2, 32], strides = [1, 1]} : vector<2x128xf32> to vector<2x32xf32>
    %288 = vector.extract_strided_slice %285 {offsets = [0, 64], sizes = [2, 32], strides = [1, 1]} : vector<2x128xf32> to vector<2x32xf32>
    %289 = vector.extract_strided_slice %284 {offsets = [0, 96], sizes = [2, 32], strides = [1, 1]} : vector<2x128xf32> to vector<2x32xf32>
    %290 = arith.mulf %287, %252 : vector<2x32xf32>
    %291 = arith.mulf %286, %288 : vector<2x32xf32>
    %292 = arith.addf %290, %291 : vector<2x32xf32>
    %293 = math.tanh %292 : vector<2x32xf32>
    %294 = arith.mulf %289, %293 : vector<2x32xf32>
    %c2_67 = arith.constant 2 : index
    %c0_68 = arith.constant 0 : index
    %295 = vector.load %arg16[%c2_67, %c0_68] : memref<16x32xf32, #tpu.memory_space<vmem>>, vector<2x32xf32>
    tpu.vector_store %arg16[%c2_67, %c0_68], %294 {strides = array<i32>} : memref<16x32xf32, #tpu.memory_space<vmem>>, vector<2x32xf32>,
    %296 = vector.extract_strided_slice %5 {offsets = [14, 0], sizes = [2, 128], strides = [1, 1]} : vector<16x256xf32> to vector<2x128xf32>
    %297 = arith.truncf %274 : vector<2x32xf32> to vector<2x32xbf16>
    %cst_69 = arith.constant dense<0.000000e+00> : vector<2x128xf32>
    %298 = tpu.matmul %297, %6, %cst_69 {dimension_numbers = #tpu.dot_dimension_numbers<[1], [0], [0], [1], [0, 0, 1, 1], [], []>} : vector<2x32xbf16>, vector<32x128xbf16>, vector<2x128xf32> -> vector<2x128xf32>
    %299 = arith.addf %296, %298 : vector<2x128xf32>
    %300 = arith.negf %299 : vector<2x128xf32>
    %301 = math.exp %300 : vector<2x128xf32>
    %cst_70 = arith.constant 1.000000e+00 : f32
    %302 = vector.broadcast %cst_70 : f32 to vector<2x128xf32>
    %303 = arith.addf %302, %301 : vector<2x128xf32>
    %304 = arith.divf %302, %303 : vector<2x128xf32>
    %305 = math.tanh %299 : vector<2x128xf32>
    %306 = vector.extract_strided_slice %304 {offsets = [0, 0], sizes = [2, 32], strides = [1, 1]} : vector<2x128xf32> to vector<2x32xf32>
    %307 = vector.extract_strided_slice %304 {offsets = [0, 32], sizes = [2, 32], strides = [1, 1]} : vector<2x128xf32> to vector<2x32xf32>
    %308 = vector.extract_strided_slice %305 {offsets = [0, 64], sizes = [2, 32], strides = [1, 1]} : vector<2x128xf32> to vector<2x32xf32>
    %309 = vector.extract_strided_slice %304 {offsets = [0, 96], sizes = [2, 32], strides = [1, 1]} : vector<2x128xf32> to vector<2x32xf32>
    %310 = arith.mulf %307, %272 : vector<2x32xf32>
    %311 = arith.mulf %306, %308 : vector<2x32xf32>
    %312 = arith.addf %310, %311 : vector<2x32xf32>
    %313 = math.tanh %312 : vector<2x32xf32>
    %314 = arith.mulf %309, %313 : vector<2x32xf32>
    %c14_71 = arith.constant 14 : index
    %c0_72 = arith.constant 0 : index
    %315 = vector.load %arg15[%c14_71, %c0_72] : memref<16x32xf32, #tpu.memory_space<vmem>>, vector<2x32xf32>
    tpu.vector_store %arg15[%c14_71, %c0_72], %314 {strides = array<i32>} : memref<16x32xf32, #tpu.memory_space<vmem>>, vector<2x32xf32>,
    %316 = vector.extract_strided_slice %5 {offsets = [0, 128], sizes = [2, 128], strides = [1, 1]} : vector<16x256xf32> to vector<2x128xf32>
    %317 = arith.truncf %294 : vector<2x32xf32> to vector<2x32xbf16>
    %cst_73 = arith.constant dense<0.000000e+00> : vector<2x128xf32>
    %318 = tpu.matmul %317, %7, %cst_73 {dimension_numbers = #tpu.dot_dimension_numbers<[1], [0], [0], [1], [0, 0, 1, 1], [], []>} : vector<2x32xbf16>, vector<32x128xbf16>, vector<2x128xf32> -> vector<2x128xf32>
    %319 = arith.addf %316, %318 : vector<2x128xf32>
    %320 = arith.negf %319 : vector<2x128xf32>
    %321 = math.exp %320 : vector<2x128xf32>
    %cst_74 = arith.constant 1.000000e+00 : f32
    %322 = vector.broadcast %cst_74 : f32 to vector<2x128xf32>
    %323 = arith.addf %322, %321 : vector<2x128xf32>
    %324 = arith.divf %322, %323 : vector<2x128xf32>
    %325 = math.tanh %319 : vector<2x128xf32>
    %326 = vector.extract_strided_slice %324 {offsets = [0, 0], sizes = [2, 32], strides = [1, 1]} : vector<2x128xf32> to vector<2x32xf32>
    %327 = vector.extract_strided_slice %324 {offsets = [0, 32], sizes = [2, 32], strides = [1, 1]} : vector<2x128xf32> to vector<2x32xf32>
    %328 = vector.extract_strided_slice %325 {offsets = [0, 64], sizes = [2, 32], strides = [1, 1]} : vector<2x128xf32> to vector<2x32xf32>
    %329 = vector.extract_strided_slice %324 {offsets = [0, 96], sizes = [2, 32], strides = [1, 1]} : vector<2x128xf32> to vector<2x32xf32>
    %330 = arith.mulf %327, %292 : vector<2x32xf32>
    %331 = arith.mulf %326, %328 : vector<2x32xf32>
    %332 = arith.addf %330, %331 : vector<2x32xf32>
    %333 = math.tanh %332 : vector<2x32xf32>
    %334 = arith.mulf %329, %333 : vector<2x32xf32>
    %c0_75 = arith.constant 0 : index
    %c0_76 = arith.constant 0 : index
    %335 = vector.load %arg16[%c0_75, %c0_76] : memref<16x32xf32, #tpu.memory_space<vmem>>, vector<2x32xf32>
    tpu.vector_store %arg16[%c0_75, %c0_76], %334 {strides = array<i32>} : memref<16x32xf32, #tpu.memory_space<vmem>>, vector<2x32xf32>,
    %c0_77 = arith.constant 0 : index
    %c0_78 = arith.constant 0 : index
    %336 = vector.load %arg7[%c0_77, %c0_78] : memref<32x8xf32, #tpu.memory_space<vmem>>, vector<32x8xf32>
    %c0_79 = arith.constant 0 : index
    %c0_80 = arith.constant 0 : index
    %337 = vector.load %arg15[%c0_79, %c0_80] : memref<16x32xf32, #tpu.memory_space<vmem>>, vector<16x32xf32>
    %cst_81 = arith.constant dense<0.000000e+00> : vector<16x8xf32>
    %338 = tpu.matmul %337, %336, %cst_81 {dimension_numbers = #tpu.dot_dimension_numbers<[1], [0], [0], [1], [0, 0, 1, 1], [], []>} : vector<16x32xf32>, vector<32x8xf32>, vector<16x8xf32> -> vector<16x8xf32>
    %c0_82 = arith.constant 0 : index
    %c0_83 = arith.constant 0 : index
    %339 = vector.load %arg16[%c0_82, %c0_83] : memref<16x32xf32, #tpu.memory_space<vmem>>, vector<16x32xf32>
    %cst_84 = arith.constant dense<0.000000e+00> : vector<16x8xf32>
    %340 = tpu.matmul %339, %336, %cst_84 {dimension_numbers = #tpu.dot_dimension_numbers<[1], [0], [0], [1], [0, 0, 1, 1], [], []>} : vector<16x32xf32>, vector<32x8xf32>, vector<16x8xf32> -> vector<16x8xf32>
    %341 = arith.addf %338, %340 : vector<16x8xf32>
    %c0_85 = arith.constant 0 : index
    %c0_86 = arith.constant 0 : index
    %342 = vector.load %arg8[%c0_85, %c0_86] : memref<1x8xf32, #tpu.memory_space<vmem>>, vector<1x8xf32>
    %343 = vector.broadcast %342 : vector<1x8xf32> to vector<16x8xf32>
    %344 = arith.addf %341, %343 : vector<16x8xf32>
    %cst_87 = arith.constant dense<0xFF800000> : vector<16xf32>
    %345 = vector.multi_reduction <maximumf>, %344, %cst_87 [1] : vector<16x8xf32> to vector<16xf32>
    %346 = vector.shape_cast %345 : vector<16xf32> to vector<16x1xf32>
    %347 = vector.broadcast %346 : vector<16x1xf32> to vector<16x8xf32>
    %348 = arith.subf %344, %347 : vector<16x8xf32>
    %349 = math.exp %348 : vector<16x8xf32>
    %cst_88 = arith.constant dense<0.000000e+00> : vector<16xf32>
    %350 = vector.multi_reduction <add>, %349, %cst_88 [1] : vector<16x8xf32> to vector<16xf32>
    %351 = vector.shape_cast %350 : vector<16xf32> to vector<16x1xf32>
    %352 = math.log %351 : vector<16x1xf32>
    %353 = vector.broadcast %352 : vector<16x1xf32> to vector<16x8xf32>
    %354 = arith.subf %348, %353 : vector<16x8xf32>
    %c0_89 = arith.constant 0 : index
    %c0_90 = arith.constant 0 : index
    %355 = vector.load %arg13[%c0_89, %c0_90] : memref<16x8xf32, #tpu.memory_space<vmem>>, vector<16x8xf32>
    tpu.vector_store %arg13[%c0_89, %c0_90], %354 {strides = array<i32>} : memref<16x8xf32, #tpu.memory_space<vmem>>, vector<16x8xf32>,
    %c0_91 = arith.constant 0 : index
    %c0_92 = arith.constant 0 : index
    %356 = vector.load %arg10[%c0_91, %c0_92] : memref<1x8xf32, #tpu.memory_space<vmem>>, vector<1x8xf32>
    %c0_93 = arith.constant 0 : index
    %c0_94 = arith.constant 0 : index
    %357 = vector.load %arg11[%c0_93, %c0_94] : memref<1x8xf32, #tpu.memory_space<vmem>>, vector<1x8xf32>
    %c0_95 = arith.constant 0 : index
    %c0_96 = arith.constant 0 : index
    %358 = vector.load %arg12[%c0_95, %c0_96] : memref<8x8xf32, #tpu.memory_space<vmem>>, vector<8x8xf32>
    %359 = vector.extract_strided_slice %354 {offsets = [0, 0], sizes = [2, 8], strides = [1, 1]} : vector<16x8xf32> to vector<2x8xf32>
    %360 = vector.broadcast %356 : vector<1x8xf32> to vector<2x8xf32>
    %361 = arith.addf %360, %359 : vector<2x8xf32>
    %362 = vector.extract_strided_slice %354 {offsets = [2, 0], sizes = [2, 8], strides = [1, 1]} : vector<16x8xf32> to vector<2x8xf32>
    %c1_97 = arith.constant 1 : index
    %c0_98 = arith.constant 0 : index
    %c0_99 = arith.constant 0 : index
    %363 = vector.load %arg9[%c1_97, %c0_98, %c0_99] : memref<8x2x1xf32, #tpu.memory_space<vmem>>, vector<1x2x1xf32>
    %364 = vector.shape_cast %363 : vector<1x2x1xf32> to vector<2x1xf32>
    %365 = vector.shape_cast %361 : vector<2x8xf32> to vector<2x8x1xf32>
    %366 = vector.shape_cast %358 : vector<8x8xf32> to vector<1x8x8xf32>
    %367 = vector.broadcast %365 : vector<2x8x1xf32> to vector<2x8x8xf32>
    %368 = vector.broadcast %366 : vector<1x8x8xf32> to vector<2x8x8xf32>
    %369 = arith.addf %367, %368 : vector<2x8x8xf32>
    %370 = vector.shape_cast %362 : vector<2x8xf32> to vector<2x1x8xf32>
    %371 = vector.broadcast %370 : vector<2x1x8xf32> to vector<2x8x8xf32>
    %372 = arith.addf %369, %371 : vector<2x8x8xf32>
    %cst_100 = arith.constant dense<0xFF800000> : vector<2x8xf32>
    %373 = vector.multi_reduction <maximumf>, %372, %cst_100 [1] : vector<2x8x8xf32> to vector<2x8xf32>
    %374 = vector.shape_cast %373 : vector<2x8xf32> to vector<2x1x8xf32>
    %375 = vector.broadcast %374 : vector<2x1x8xf32> to vector<2x8x8xf32>
    %376 = arith.subf %372, %375 : vector<2x8x8xf32>
    %377 = math.exp %376 : vector<2x8x8xf32>
    %cst_101 = arith.constant dense<0.000000e+00> : vector<2x8xf32>
    %378 = vector.multi_reduction <add>, %377, %cst_101 [1] : vector<2x8x8xf32> to vector<2x8xf32>
    %379 = math.log %378 : vector<2x8xf32>
    %380 = vector.shape_cast %374 : vector<2x1x8xf32> to vector<2x8xf32>
    %381 = arith.addf %379, %380 : vector<2x8xf32>
    %cst_102 = arith.constant 5.000000e-01 : f32
    %382 = vector.broadcast %cst_102 : f32 to vector<2x1xf32>
    %383 = arith.cmpf ogt, %364, %382 : vector<2x1xf32>
    %384 = vector.shape_cast %383 : vector<2x1xi1> to vector<2x1xi1>
    %385 = vector.broadcast %384 : vector<2x1xi1> to vector<2x8xi1>
    %386 = arith.select %385, %381, %361 : vector<2x8xi1>, vector<2x8xf32>
    %387 = vector.extract_strided_slice %354 {offsets = [4, 0], sizes = [2, 8], strides = [1, 1]} : vector<16x8xf32> to vector<2x8xf32>
    %c2_103 = arith.constant 2 : index
    %c0_104 = arith.constant 0 : index
    %c0_105 = arith.constant 0 : index
    %388 = vector.load %arg9[%c2_103, %c0_104, %c0_105] : memref<8x2x1xf32, #tpu.memory_space<vmem>>, vector<1x2x1xf32>
    %389 = vector.shape_cast %388 : vector<1x2x1xf32> to vector<2x1xf32>
    %390 = vector.shape_cast %386 : vector<2x8xf32> to vector<2x8x1xf32>
    %391 = vector.shape_cast %358 : vector<8x8xf32> to vector<1x8x8xf32>
    %392 = vector.broadcast %390 : vector<2x8x1xf32> to vector<2x8x8xf32>
    %393 = vector.broadcast %391 : vector<1x8x8xf32> to vector<2x8x8xf32>
    %394 = arith.addf %392, %393 : vector<2x8x8xf32>
    %395 = vector.shape_cast %387 : vector<2x8xf32> to vector<2x1x8xf32>
    %396 = vector.broadcast %395 : vector<2x1x8xf32> to vector<2x8x8xf32>
    %397 = arith.addf %394, %396 : vector<2x8x8xf32>
    %cst_106 = arith.constant dense<0xFF800000> : vector<2x8xf32>
    %398 = vector.multi_reduction <maximumf>, %397, %cst_106 [1] : vector<2x8x8xf32> to vector<2x8xf32>
    %399 = vector.shape_cast %398 : vector<2x8xf32> to vector<2x1x8xf32>
    %400 = vector.broadcast %399 : vector<2x1x8xf32> to vector<2x8x8xf32>
    %401 = arith.subf %397, %400 : vector<2x8x8xf32>
    %402 = math.exp %401 : vector<2x8x8xf32>
    %cst_107 = arith.constant dense<0.000000e+00> : vector<2x8xf32>
    %403 = vector.multi_reduction <add>, %402, %cst_107 [1] : vector<2x8x8xf32> to vector<2x8xf32>
    %404 = math.log %403 : vector<2x8xf32>
    %405 = vector.shape_cast %399 : vector<2x1x8xf32> to vector<2x8xf32>
    %406 = arith.addf %404, %405 : vector<2x8xf32>
    %cst_108 = arith.constant 5.000000e-01 : f32
    %407 = vector.broadcast %cst_108 : f32 to vector<2x1xf32>
    %408 = arith.cmpf ogt, %389, %407 : vector<2x1xf32>
    %409 = vector.shape_cast %408 : vector<2x1xi1> to vector<2x1xi1>
    %410 = vector.broadcast %409 : vector<2x1xi1> to vector<2x8xi1>
    %411 = arith.select %410, %406, %386 : vector<2x8xi1>, vector<2x8xf32>
    %412 = vector.extract_strided_slice %354 {offsets = [6, 0], sizes = [2, 8], strides = [1, 1]} : vector<16x8xf32> to vector<2x8xf32>
    %c3 = arith.constant 3 : index
    %c0_109 = arith.constant 0 : index
    %c0_110 = arith.constant 0 : index
    %413 = vector.load %arg9[%c3, %c0_109, %c0_110] : memref<8x2x1xf32, #tpu.memory_space<vmem>>, vector<1x2x1xf32>
    %414 = vector.shape_cast %413 : vector<1x2x1xf32> to vector<2x1xf32>
    %415 = vector.shape_cast %411 : vector<2x8xf32> to vector<2x8x1xf32>
    %416 = vector.shape_cast %358 : vector<8x8xf32> to vector<1x8x8xf32>
    %417 = vector.broadcast %415 : vector<2x8x1xf32> to vector<2x8x8xf32>
    %418 = vector.broadcast %416 : vector<1x8x8xf32> to vector<2x8x8xf32>
    %419 = arith.addf %417, %418 : vector<2x8x8xf32>
    %420 = vector.shape_cast %412 : vector<2x8xf32> to vector<2x1x8xf32>
    %421 = vector.broadcast %420 : vector<2x1x8xf32> to vector<2x8x8xf32>
    %422 = arith.addf %419, %421 : vector<2x8x8xf32>
    %cst_111 = arith.constant dense<0xFF800000> : vector<2x8xf32>
    %423 = vector.multi_reduction <maximumf>, %422, %cst_111 [1] : vector<2x8x8xf32> to vector<2x8xf32>
    %424 = vector.shape_cast %423 : vector<2x8xf32> to vector<2x1x8xf32>
    %425 = vector.broadcast %424 : vector<2x1x8xf32> to vector<2x8x8xf32>
    %426 = arith.subf %422, %425 : vector<2x8x8xf32>
    %427 = math.exp %426 : vector<2x8x8xf32>
    %cst_112 = arith.constant dense<0.000000e+00> : vector<2x8xf32>
    %428 = vector.multi_reduction <add>, %427, %cst_112 [1] : vector<2x8x8xf32> to vector<2x8xf32>
    %429 = math.log %428 : vector<2x8xf32>
    %430 = vector.shape_cast %424 : vector<2x1x8xf32> to vector<2x8xf32>
    %431 = arith.addf %429, %430 : vector<2x8xf32>
    %cst_113 = arith.constant 5.000000e-01 : f32
    %432 = vector.broadcast %cst_113 : f32 to vector<2x1xf32>
    %433 = arith.cmpf ogt, %414, %432 : vector<2x1xf32>
    %434 = vector.shape_cast %433 : vector<2x1xi1> to vector<2x1xi1>
    %435 = vector.broadcast %434 : vector<2x1xi1> to vector<2x8xi1>
    %436 = arith.select %435, %431, %411 : vector<2x8xi1>, vector<2x8xf32>
    %437 = vector.extract_strided_slice %354 {offsets = [8, 0], sizes = [2, 8], strides = [1, 1]} : vector<16x8xf32> to vector<2x8xf32>
    %c4_114 = arith.constant 4 : index
    %c0_115 = arith.constant 0 : index
    %c0_116 = arith.constant 0 : index
    %438 = vector.load %arg9[%c4_114, %c0_115, %c0_116] : memref<8x2x1xf32, #tpu.memory_space<vmem>>, vector<1x2x1xf32>
    %439 = vector.shape_cast %438 : vector<1x2x1xf32> to vector<2x1xf32>
    %440 = vector.shape_cast %436 : vector<2x8xf32> to vector<2x8x1xf32>
    %441 = vector.shape_cast %358 : vector<8x8xf32> to vector<1x8x8xf32>
    %442 = vector.broadcast %440 : vector<2x8x1xf32> to vector<2x8x8xf32>
    %443 = vector.broadcast %441 : vector<1x8x8xf32> to vector<2x8x8xf32>
    %444 = arith.addf %442, %443 : vector<2x8x8xf32>
    %445 = vector.shape_cast %437 : vector<2x8xf32> to vector<2x1x8xf32>
    %446 = vector.broadcast %445 : vector<2x1x8xf32> to vector<2x8x8xf32>
    %447 = arith.addf %444, %446 : vector<2x8x8xf32>
    %cst_117 = arith.constant dense<0xFF800000> : vector<2x8xf32>
    %448 = vector.multi_reduction <maximumf>, %447, %cst_117 [1] : vector<2x8x8xf32> to vector<2x8xf32>
    %449 = vector.shape_cast %448 : vector<2x8xf32> to vector<2x1x8xf32>
    %450 = vector.broadcast %449 : vector<2x1x8xf32> to vector<2x8x8xf32>
    %451 = arith.subf %447, %450 : vector<2x8x8xf32>
    %452 = math.exp %451 : vector<2x8x8xf32>
    %cst_118 = arith.constant dense<0.000000e+00> : vector<2x8xf32>
    %453 = vector.multi_reduction <add>, %452, %cst_118 [1] : vector<2x8x8xf32> to vector<2x8xf32>
    %454 = math.log %453 : vector<2x8xf32>
    %455 = vector.shape_cast %449 : vector<2x1x8xf32> to vector<2x8xf32>
    %456 = arith.addf %454, %455 : vector<2x8xf32>
    %cst_119 = arith.constant 5.000000e-01 : f32
    %457 = vector.broadcast %cst_119 : f32 to vector<2x1xf32>
    %458 = arith.cmpf ogt, %439, %457 : vector<2x1xf32>
    %459 = vector.shape_cast %458 : vector<2x1xi1> to vector<2x1xi1>
    %460 = vector.broadcast %459 : vector<2x1xi1> to vector<2x8xi1>
    %461 = arith.select %460, %456, %436 : vector<2x8xi1>, vector<2x8xf32>
    %462 = vector.extract_strided_slice %354 {offsets = [10, 0], sizes = [2, 8], strides = [1, 1]} : vector<16x8xf32> to vector<2x8xf32>
    %c5 = arith.constant 5 : index
    %c0_120 = arith.constant 0 : index
    %c0_121 = arith.constant 0 : index
    %463 = vector.load %arg9[%c5, %c0_120, %c0_121] : memref<8x2x1xf32, #tpu.memory_space<vmem>>, vector<1x2x1xf32>
    %464 = vector.shape_cast %463 : vector<1x2x1xf32> to vector<2x1xf32>
    %465 = vector.shape_cast %461 : vector<2x8xf32> to vector<2x8x1xf32>
    %466 = vector.shape_cast %358 : vector<8x8xf32> to vector<1x8x8xf32>
    %467 = vector.broadcast %465 : vector<2x8x1xf32> to vector<2x8x8xf32>
    %468 = vector.broadcast %466 : vector<1x8x8xf32> to vector<2x8x8xf32>
    %469 = arith.addf %467, %468 : vector<2x8x8xf32>
    %470 = vector.shape_cast %462 : vector<2x8xf32> to vector<2x1x8xf32>
    %471 = vector.broadcast %470 : vector<2x1x8xf32> to vector<2x8x8xf32>
    %472 = arith.addf %469, %471 : vector<2x8x8xf32>
    %cst_122 = arith.constant dense<0xFF800000> : vector<2x8xf32>
    %473 = vector.multi_reduction <maximumf>, %472, %cst_122 [1] : vector<2x8x8xf32> to vector<2x8xf32>
    %474 = vector.shape_cast %473 : vector<2x8xf32> to vector<2x1x8xf32>
    %475 = vector.broadcast %474 : vector<2x1x8xf32> to vector<2x8x8xf32>
    %476 = arith.subf %472, %475 : vector<2x8x8xf32>
    %477 = math.exp %476 : vector<2x8x8xf32>
    %cst_123 = arith.constant dense<0.000000e+00> : vector<2x8xf32>
    %478 = vector.multi_reduction <add>, %477, %cst_123 [1] : vector<2x8x8xf32> to vector<2x8xf32>
    %479 = math.log %478 : vector<2x8xf32>
    %480 = vector.shape_cast %474 : vector<2x1x8xf32> to vector<2x8xf32>
    %481 = arith.addf %479, %480 : vector<2x8xf32>
    %cst_124 = arith.constant 5.000000e-01 : f32
    %482 = vector.broadcast %cst_124 : f32 to vector<2x1xf32>
    %483 = arith.cmpf ogt, %464, %482 : vector<2x1xf32>
    %484 = vector.shape_cast %483 : vector<2x1xi1> to vector<2x1xi1>
    %485 = vector.broadcast %484 : vector<2x1xi1> to vector<2x8xi1>
    %486 = arith.select %485, %481, %461 : vector<2x8xi1>, vector<2x8xf32>
    %487 = vector.extract_strided_slice %354 {offsets = [12, 0], sizes = [2, 8], strides = [1, 1]} : vector<16x8xf32> to vector<2x8xf32>
    %c6_125 = arith.constant 6 : index
    %c0_126 = arith.constant 0 : index
    %c0_127 = arith.constant 0 : index
    %488 = vector.load %arg9[%c6_125, %c0_126, %c0_127] : memref<8x2x1xf32, #tpu.memory_space<vmem>>, vector<1x2x1xf32>
    %489 = vector.shape_cast %488 : vector<1x2x1xf32> to vector<2x1xf32>
    %490 = vector.shape_cast %486 : vector<2x8xf32> to vector<2x8x1xf32>
    %491 = vector.shape_cast %358 : vector<8x8xf32> to vector<1x8x8xf32>
    %492 = vector.broadcast %490 : vector<2x8x1xf32> to vector<2x8x8xf32>
    %493 = vector.broadcast %491 : vector<1x8x8xf32> to vector<2x8x8xf32>
    %494 = arith.addf %492, %493 : vector<2x8x8xf32>
    %495 = vector.shape_cast %487 : vector<2x8xf32> to vector<2x1x8xf32>
    %496 = vector.broadcast %495 : vector<2x1x8xf32> to vector<2x8x8xf32>
    %497 = arith.addf %494, %496 : vector<2x8x8xf32>
    %cst_128 = arith.constant dense<0xFF800000> : vector<2x8xf32>
    %498 = vector.multi_reduction <maximumf>, %497, %cst_128 [1] : vector<2x8x8xf32> to vector<2x8xf32>
    %499 = vector.shape_cast %498 : vector<2x8xf32> to vector<2x1x8xf32>
    %500 = vector.broadcast %499 : vector<2x1x8xf32> to vector<2x8x8xf32>
    %501 = arith.subf %497, %500 : vector<2x8x8xf32>
    %502 = math.exp %501 : vector<2x8x8xf32>
    %cst_129 = arith.constant dense<0.000000e+00> : vector<2x8xf32>
    %503 = vector.multi_reduction <add>, %502, %cst_129 [1] : vector<2x8x8xf32> to vector<2x8xf32>
    %504 = math.log %503 : vector<2x8xf32>
    %505 = vector.shape_cast %499 : vector<2x1x8xf32> to vector<2x8xf32>
    %506 = arith.addf %504, %505 : vector<2x8xf32>
    %cst_130 = arith.constant 5.000000e-01 : f32
    %507 = vector.broadcast %cst_130 : f32 to vector<2x1xf32>
    %508 = arith.cmpf ogt, %489, %507 : vector<2x1xf32>
    %509 = vector.shape_cast %508 : vector<2x1xi1> to vector<2x1xi1>
    %510 = vector.broadcast %509 : vector<2x1xi1> to vector<2x8xi1>
    %511 = arith.select %510, %506, %486 : vector<2x8xi1>, vector<2x8xf32>
    %512 = vector.extract_strided_slice %354 {offsets = [14, 0], sizes = [2, 8], strides = [1, 1]} : vector<16x8xf32> to vector<2x8xf32>
    %c7 = arith.constant 7 : index
    %c0_131 = arith.constant 0 : index
    %c0_132 = arith.constant 0 : index
    %513 = vector.load %arg9[%c7, %c0_131, %c0_132] : memref<8x2x1xf32, #tpu.memory_space<vmem>>, vector<1x2x1xf32>
    %514 = vector.shape_cast %513 : vector<1x2x1xf32> to vector<2x1xf32>
    %515 = vector.shape_cast %511 : vector<2x8xf32> to vector<2x8x1xf32>
    %516 = vector.shape_cast %358 : vector<8x8xf32> to vector<1x8x8xf32>
    %517 = vector.broadcast %515 : vector<2x8x1xf32> to vector<2x8x8xf32>
    %518 = vector.broadcast %516 : vector<1x8x8xf32> to vector<2x8x8xf32>
    %519 = arith.addf %517, %518 : vector<2x8x8xf32>
    %520 = vector.shape_cast %512 : vector<2x8xf32> to vector<2x1x8xf32>
    %521 = vector.broadcast %520 : vector<2x1x8xf32> to vector<2x8x8xf32>
    %522 = arith.addf %519, %521 : vector<2x8x8xf32>
    %cst_133 = arith.constant dense<0xFF800000> : vector<2x8xf32>
    %523 = vector.multi_reduction <maximumf>, %522, %cst_133 [1] : vector<2x8x8xf32> to vector<2x8xf32>
    %524 = vector.shape_cast %523 : vector<2x8xf32> to vector<2x1x8xf32>
    %525 = vector.broadcast %524 : vector<2x1x8xf32> to vector<2x8x8xf32>
    %526 = arith.subf %522, %525 : vector<2x8x8xf32>
    %527 = math.exp %526 : vector<2x8x8xf32>
    %cst_134 = arith.constant dense<0.000000e+00> : vector<2x8xf32>
    %528 = vector.multi_reduction <add>, %527, %cst_134 [1] : vector<2x8x8xf32> to vector<2x8xf32>
    %529 = math.log %528 : vector<2x8xf32>
    %530 = vector.shape_cast %524 : vector<2x1x8xf32> to vector<2x8xf32>
    %531 = arith.addf %529, %530 : vector<2x8xf32>
    %cst_135 = arith.constant 5.000000e-01 : f32
    %532 = vector.broadcast %cst_135 : f32 to vector<2x1xf32>
    %533 = arith.cmpf ogt, %514, %532 : vector<2x1xf32>
    %534 = vector.shape_cast %533 : vector<2x1xi1> to vector<2x1xi1>
    %535 = vector.broadcast %534 : vector<2x1xi1> to vector<2x8xi1>
    %536 = arith.select %535, %531, %511 : vector<2x8xi1>, vector<2x8xf32>
    %537 = vector.broadcast %357 : vector<1x8xf32> to vector<2x8xf32>
    %538 = arith.addf %536, %537 : vector<2x8xf32>
    %cst_136 = arith.constant dense<0xFF800000> : vector<2xf32>
    %539 = vector.multi_reduction <maximumf>, %538, %cst_136 [1] : vector<2x8xf32> to vector<2xf32>
    %540 = vector.shape_cast %539 : vector<2xf32> to vector<2x1xf32>
    %541 = vector.broadcast %540 : vector<2x1xf32> to vector<2x8xf32>
    %542 = arith.subf %538, %541 : vector<2x8xf32>
    %543 = math.exp %542 : vector<2x8xf32>
    %cst_137 = arith.constant dense<0.000000e+00> : vector<2xf32>
    %544 = vector.multi_reduction <add>, %543, %cst_137 [1] : vector<2x8xf32> to vector<2xf32>
    %545 = vector.shape_cast %544 : vector<2xf32> to vector<2x1xf32>
    %546 = math.log %545 : vector<2x1xf32>
    %547 = arith.addf %546, %540 : vector<2x1xf32>
    %c0_138 = arith.constant 0 : index
    %c0_139 = arith.constant 0 : index
    %548 = vector.load %arg14[%c0_138, %c0_139] : memref<2x1xf32, #tpu.memory_space<vmem>>, vector<2x1xf32>
    tpu.vector_store %arg14[%c0_138, %c0_139], %547 {strides = array<i32>} : memref<2x1xf32, #tpu.memory_space<vmem>>, vector<2x1xf32>,
    return
  }
}

</mosaic_0001>

<llo_original>
// kernel: lstm_crf_forward.1
$region0: #{lstm_crf_forward.1}
  #allocation0 [shape = 'u32[]', space=smem, size = 0x4, offset = 0x4, fixed_abs, tag = 'smem constant byte address 0x4 - core index']
  #allocation1 [shape = 'u32[144,128]{1,0:T(1,128)}', space=vmem, size = 0x12000, scoped, tag = 'internal scratch']
  #allocation2 [shape = 'f32[16,32]{1,0:T(8,128)}', space=vmem, size = 0x2000, scoped, tag = 'scratch operand']
  #allocation3 [shape = 'f32[16,32]{1,0:T(8,128)}', space=vmem, size = 0x2000, scoped, tag = 'scratch operand']
  %s0 = inlined_call_operand.vmem [shape: bf16[16,16], index: 0, kind: input, shape index: {}]
  %s1 = inlined_call_operand.vmem [shape: f32[2,2,32], index: 1, kind: input, shape index: {}]
  %s2 = inlined_call_operand.vmem [shape: f32[2,2,32], index: 2, kind: input, shape index: {}]
  %s3 = inlined_call_operand.vmem [shape: bf16[16,256], index: 3, kind: input, shape index: {}]
  %s4 = inlined_call_operand.vmem [shape: f32[1,256], index: 4, kind: input, shape index: {}]
  %s5 = inlined_call_operand.vmem [shape: bf16[32,128], index: 5, kind: input, shape index: {}]
  %s6 = inlined_call_operand.vmem [shape: bf16[32,128], index: 6, kind: input, shape index: {}]
  %s7 = inlined_call_operand.vmem [shape: f32[32,8], index: 7, kind: input, shape index: {}]
  %s8 = inlined_call_operand.vmem [shape: f32[1,8], index: 8, kind: input, shape index: {}]
  %s9 = inlined_call_operand.vmem [shape: f32[8,2,1], index: 9, kind: input, shape index: {}]
  %s10 = inlined_call_operand.vmem [shape: f32[1,8], index: 10, kind: input, shape index: {}]
  %s11 = inlined_call_operand.vmem [shape: f32[1,8], index: 11, kind: input, shape index: {}]
  %s12 = inlined_call_operand.vmem [shape: f32[8,8], index: 12, kind: input, shape index: {}]
  %s13 = inlined_call_operand.vmem [shape: f32[16,8], index: 13, kind: output, shape index: {0}]
  %s14 = inlined_call_operand.vmem [shape: f32[2,1], index: 14, kind: output, shape index: {1}]
  %15 = xla_tuple %s13, %s14
  %s16 = sld [smem:[#allocation0]]
  $region70: #{lstm_crf_forward.1} parent=0
    _
  %s18 = ssub.s32 1, %s16
  %s19 = scalar_select 0, %s18, %s16
  // Predicated region
  $region2: #{lstm_crf_forward.1} parent=0 // pred_check
    _
  $region3: #{lstm_crf_forward.1} parent=0 // pred_check_branch
    %21 = sbr.rel (0) target = $region5
  $region4: #{lstm_crf_forward.1} parent=0 // pred_region
    _
  $region5: #{lstm_crf_forward.1} parent=0 // pred_fallthru
    _
  // Predicated region
  $region6: #{lstm_crf_forward.1} parent=0 // pred_check
    _
  $region7: #{lstm_crf_forward.1} parent=0 // pred_check_branch
    %23 = sbr.rel (0) target = $region9
  $region8: #{lstm_crf_forward.1} parent=0 // pred_region
    _
  $region9: #{lstm_crf_forward.1} parent=0 // pred_fallthru
    _
  // Predicated region
  $region10: #{lstm_crf_forward.1} parent=0 // pred_check
    _
  $region11: #{lstm_crf_forward.1} parent=0 // pred_check_branch
    %25 = sbr.rel (0) target = $region13
  $region12: #{lstm_crf_forward.1} parent=0 // pred_region
    _
  $region13: #{lstm_crf_forward.1} parent=0 // pred_fallthru
    _
  // Predicated region
  $region14: #{lstm_crf_forward.1} parent=0 // pred_check
    _
  $region15: #{lstm_crf_forward.1} parent=0 // pred_check_branch
    %27 = sbr.rel (0) target = $region17
  $region16: #{lstm_crf_forward.1} parent=0 // pred_region
    _
  $region17: #{lstm_crf_forward.1} parent=0 // pred_fallthru
    _
  // Predicated region
  $region18: #{lstm_crf_forward.1} parent=0 // pred_check
    _
  $region19: #{lstm_crf_forward.1} parent=0 // pred_check_branch
    %29 = sbr.rel (0) target = $region21
  $region20: #{lstm_crf_forward.1} parent=0 // pred_region
    _
  $region21: #{lstm_crf_forward.1} parent=0 // pred_fallthru
    _
  // Predicated region
  $region22: #{lstm_crf_forward.1} parent=0 // pred_check
    _
  $region23: #{lstm_crf_forward.1} parent=0 // pred_check_branch
    %31 = sbr.rel (0) target = $region25
  $region24: #{lstm_crf_forward.1} parent=0 // pred_region
    _
  $region25: #{lstm_crf_forward.1} parent=0 // pred_fallthru
    _
  // Predicated region
  $region26: #{lstm_crf_forward.1} parent=0 // pred_check
    _
  $region27: #{lstm_crf_forward.1} parent=0 // pred_check_branch
    %33 = sbr.rel (0) target = $region29
  $region28: #{lstm_crf_forward.1} parent=0 // pred_region
    _
  $region29: #{lstm_crf_forward.1} parent=0 // pred_fallthru
    _
  // Predicated region
  $region30: #{lstm_crf_forward.1} parent=0 // pred_check
    _
  $region31: #{lstm_crf_forward.1} parent=0 // pred_check_branch
    %35 = sbr.rel (0) target = $region33
  $region32: #{lstm_crf_forward.1} parent=0 // pred_region
    _
  $region33: #{lstm_crf_forward.1} parent=0 // pred_fallthru
    _
  // Predicated region
  $region34: #{lstm_crf_forward.1} parent=0 // pred_check
    _
  $region35: #{lstm_crf_forward.1} parent=0 // pred_check_branch
    %37 = sbr.rel (0) target = $region37
  $region36: #{lstm_crf_forward.1} parent=0 // pred_region
    _
  $region37: #{lstm_crf_forward.1} parent=0 // pred_fallthru
    _
  // Predicated region
  $region38: #{lstm_crf_forward.1} parent=0 // pred_check
    _
  $region39: #{lstm_crf_forward.1} parent=0 // pred_check_branch
    %39 = sbr.rel (0) target = $region41
  $region40: #{lstm_crf_forward.1} parent=0 // pred_region
    _
  $region41: #{lstm_crf_forward.1} parent=0 // pred_fallthru
    _
  // Predicated region
  $region42: #{lstm_crf_forward.1} parent=0 // pred_check
    _
  $region43: #{lstm_crf_forward.1} parent=0 // pred_check_branch
    %41 = sbr.rel (0) target = $region45
  $region44: #{lstm_crf_forward.1} parent=0 // pred_region
    _
  $region45: #{lstm_crf_forward.1} parent=0 // pred_fallthru
    _
  // Predicated region
  $region46: #{lstm_crf_forward.1} parent=0 // pred_check
    _
  $region47: #{lstm_crf_forward.1} parent=0 // pred_check_branch
    %43 = sbr.rel (0) target = $region49
  $region48: #{lstm_crf_forward.1} parent=0 // pred_region
    _
  $region49: #{lstm_crf_forward.1} parent=0 // pred_fallthru
    _
  // Predicated region
  $region50: #{lstm_crf_forward.1} parent=0 // pred_check
    _
  $region51: #{lstm_crf_forward.1} parent=0 // pred_check_branch
    %45 = sbr.rel (0) target = $region53
  $region52: #{lstm_crf_forward.1} parent=0 // pred_region
    _
  $region53: #{lstm_crf_forward.1} parent=0 // pred_fallthru
    _
  %v47 = vld [vmem:[%s0] sm:$0xf]
  %v48 = vld [vmem:[%s0 + $0x4] sm:$0xf]
  %v49 = vld [vmem:[%s3] sm:$0xff]
  %v50 = vld [vmem:[%s3 + $0x8] sm:$0xff]
  %v51 = vld [vmem:[%s4] sm:$0x3]
  %v53 = vlaneseq
  %v54 = vshrl.u32 %v53, 7
  %v55 = vsub.s32 0, %v54
  %v56 = vrot.slane %v51, %v55
  %v57 = vlaneseq
  %v58 = vshrl.u32 %v57, 7
  %v59 = vsub.s32 1, %v58
  %v60 = vrot.slane %v51, %v59
  %v65 = vunpack.c.l.b16 %v47
  %v66 = vunpack.c.l.b16 %v48
  %v67 = vpack.c.b16 %v66, %v65
  %v70 = vunpack.c.l.b16 %v49
  %v71 = vunpack.c.h.b16 %v49
  %v72 = vunpack.c.l.b16 %v50
  %v73 = vunpack.c.h.b16 %v50
  %v74 = vpack.c.b16 %v72, %v70
  %v75 = vpack.c.b16 %v73, %v71
  %vm78 = vcmask 130048
  %v80 = vsel %vm78, %v67, 0
  %82 = vmatprep.subr.bf16.mxu0 %v75
  %83 = vmatpush1.bf16.msra.mxu0 %v74
  %84 = vmatprep.subr.bf16.mxu0 0
  %85 = vmatpush1.bf16.msra.mxu0 0
  %86 = vmatprep.subr.bf16.mxu0 0
  %87 = vmatpush1.bf16.msra.mxu0 0
  %88 = vmatprep.subr.bf16.mxu0 0
  %89 = vmatpush1.bf16.msra.mxu0 0
  %90 = vmatprep.subr.bf16.mxu0 0
  %91 = vmatpush1.bf16.msra.mxu0 0
  %92 = vmatprep.subr.bf16.mxu0 0
  %93 = vmatpush1.bf16.msra.mxu0 0
  %94 = vmatprep.subr.bf16.mxu0 0
  %95 = vmatpush1.bf16.msra.mxu0 0
  %96 = vmatprep.subr.bf16.mxu0 0
  %97 = vmatpush1.bf16.msra.mxu0 0
  %98 = vmatprep.subr.bf16.mxu0 0
  %99 = vmatpush1.bf16.msra.mxu0 0
  %100 = vmatprep.subr.bf16.mxu0 0
  %101 = vmatpush1.bf16.msra.mxu0 0
  %102 = vmatprep.subr.bf16.mxu0 0
  %103 = vmatpush1.bf16.msra.mxu0 0
  %104 = vmatprep.subr.bf16.mxu0 0
  %105 = vmatpush1.bf16.msra.mxu0 0
  %106 = vmatprep.subr.bf16.mxu0 0
  %107 = vmatpush1.bf16.msra.mxu0 0
  %108 = vmatprep.subr.bf16.mxu0 0
  %109 = vmatpush1.bf16.msra.mxu0 0
  %110 = vmatprep.subr.bf16.mxu0 0
  %111 = vmatpush1.bf16.msra.mxu0 0
  %112 = vmatprep.subr.bf16.mxu0 0
  %113 = vmatpush1.bf16.msra.mxu0 0
  %114 = vmatprep.mubr.bf16.mxu0 0
  %115 = vmatmul.mubr.bf16.gmra.mrb[0].mxu0 %v80
  %v116 = vpop.f32.mrb[0].mxu0
  %v117 = vadd.f32 %v56, %v116
  %v118 = vpop.f32.mrb[0].mxu0
  %v119 = vadd.f32 %v60, %v118
  %v120 = vpop.f32.mrb[0].mxu0
  %v121 = vadd.f32 %v56, %v120
  %v122 = vpop.f32.mrb[0].mxu0
  %v123 = vadd.f32 %v60, %v122
  %124 = vdwg.mxu0
  %v125 = vld [vmem:[%s5] sm:$0xf]
  %v126 = vld [vmem:[%s5 + $0x4] sm:$0xf]
  %v127 = vld [vmem:[%s5 + $0x8] sm:$0xf]
  %v128 = vld [vmem:[%s5 + $0xc] sm:$0xf]
  %v129 = vld [vmem:[%s6] sm:$0xf]
  %v130 = vld [vmem:[%s6 + $0x4] sm:$0xf]
  %v131 = vld [vmem:[%s6 + $0x8] sm:$0xf]
  %v132 = vld [vmem:[%s6 + $0xc] sm:$0xf]
  %v133 = vld [vmem:[%s1] sm:$0x3]
  %v134 = vld [vmem:[%s2] sm:$0x3]
  %s135 = scalar_lea.vmem %s1, 2
  %v136 = vld [vmem:[%s135] sm:$0x3]
  %s137 = scalar_lea.vmem %s2, 2
  %v138 = vld [vmem:[%s137] sm:$0x3]
  %v139 = vpack.c.bf16 %v133, %v133
  %v144 = vunpack.c.l.b16 %v125
  %v145 = vunpack.c.l.b16 %v126
  %v146 = vunpack.c.l.b16 %v127
  %v147 = vunpack.c.l.b16 %v128
  %v148 = vpack.c.b16 %v145, %v144
  %v149 = vpack.c.b16 %v147, %v146
  %vm152 = vcmask 261120
  %v154 = vsel %vm152, %v139, 0
  %156 = vmatprep.subr.bf16.mxu0 0
  %157 = vmatpush1.bf16.msra.mxu0 %v148
  %158 = vmatprep.subr.bf16.mxu0 0
  %159 = vmatpush1.bf16.msra.mxu0 %v149
  %160 = vmatprep.subr.bf16.mxu0 0
  %161 = vmatpush1.bf16.msra.mxu0 0
  %162 = vmatprep.subr.bf16.mxu0 0
  %163 = vmatpush1.bf16.msra.mxu0 0
  %164 = vmatprep.subr.bf16.mxu0 0
  %165 = vmatpush1.bf16.msra.mxu0 0
  %166 = vmatprep.subr.bf16.mxu0 0
  %167 = vmatpush1.bf16.msra.mxu0 0
  %168 = vmatprep.subr.bf16.mxu0 0
  %169 = vmatpush1.bf16.msra.mxu0 0
  %170 = vmatprep.subr.bf16.mxu0 0
  %171 = vmatpush1.bf16.msra.mxu0 0
  %172 = vmatprep.subr.bf16.mxu0 0
  %173 = vmatpush1.bf16.msra.mxu0 0
  %174 = vmatprep.subr.bf16.mxu0 0
  %175 = vmatpush1.bf16.msra.mxu0 0
  %176 = vmatprep.subr.bf16.mxu0 0
  %177 = vmatpush1.bf16.msra.mxu0 0
  %178 = vmatprep.subr.bf16.mxu0 0
  %179 = vmatpush1.bf16.msra.mxu0 0
  %180 = vmatprep.subr.bf16.mxu0 0
  %181 = vmatpush1.bf16.msra.mxu0 0
  %182 = vmatprep.subr.bf16.mxu0 0
  %183 = vmatpush1.bf16.msra.mxu0 0
  %184 = vmatprep.subr.bf16.mxu0 0
  %185 = vmatpush1.bf16.msra.mxu0 0
  %186 = vmatprep.subr.bf16.mxu0 0
  %187 = vmatpush1.bf16.msra.mxu0 0
  %188 = vmatprep.mubr.bf16.mxu0 0
  %189 = vmatmul.mubr.bf16.gmra.mrb[0].mxu0 %v154
  %v190 = vpop.f32.mrb[0].mxu0
  %v191 = vadd.f32 0.0, %v190
  %v192 = vpop.f32.mrb[0].mxu0
  %v193 = vpop.f32.mrb[0].mxu0
  %v194 = vpop.f32.mrb[0].mxu0
  %195 = vdwg.mxu0
  %v196 = vadd.f32 %v117, %v191
  %v197 = vxor.u32 %v196, 2147483648
  %v198 = vmul.f32 %v197, 1.442695
  %v199 = vpow.pop %v198
  %v200 = vadd.f32 %v199, 1.0
  %v201 = vrcp.pop %v200
  %v202 = vmul.f32 1.0, %v201
  %v203 = vtanh.pop %v196
  %205 = vrot.lane.b32.xlu0 %v134, 32
  %v206 = vpop.permute.xlu0 %205
  %v208 = vmul.f32 %v202, %v206
  %210 = vrot.lane.b32.xlu0 %v203, 64
  %v211 = vpop.permute.xlu0 %210
  %v213 = vmul.f32 %v202, %v211
  %215 = vrot.lane.b32.xlu0 %v213, 32
  %v216 = vpop.permute.xlu0 %215
  %v218 = vadd.f32 %v208, %v216
  %v219 = vtanh.pop %v218
  %221 = vrot.lane.b32.xlu0 %v219, 64
  %v222 = vpop.permute.xlu0 %221
  %v224 = vmul.f32 %v202, %v222
  %226 = vrot.lane.b32.xlu0 %v224, 32
  %v227 = vpop.permute.xlu0 %226
  %vm229 = vcmask 254976
  %230 = vst.msk [vmem:[#allocation2] sm:$0x3] %vm229, %v227
  %v231 = vpack.c.bf16 %v136, %v136
  %v236 = vunpack.c.l.b16 %v129
  %v237 = vunpack.c.l.b16 %v130
  %v238 = vunpack.c.l.b16 %v131
  %v239 = vunpack.c.l.b16 %v132
  %v240 = vpack.c.b16 %v237, %v236
  %v241 = vpack.c.b16 %v239, %v238
  %v245 = vsel %vm152, %v231, 0
  %247 = vmatprep.subr.bf16.mxu0 0
  %248 = vmatpush1.bf16.msra.mxu0 %v240
  %249 = vmatprep.subr.bf16.mxu0 0
  %250 = vmatpush1.bf16.msra.mxu0 %v241
  %251 = vmatprep.subr.bf16.mxu0 0
  %252 = vmatpush1.bf16.msra.mxu0 0
  %253 = vmatprep.subr.bf16.mxu0 0
  %254 = vmatpush1.bf16.msra.mxu0 0
  %255 = vmatprep.subr.bf16.mxu0 0
  %256 = vmatpush1.bf16.msra.mxu0 0
  %257 = vmatprep.subr.bf16.mxu0 0
  %258 = vmatpush1.bf16.msra.mxu0 0
  %259 = vmatprep.subr.bf16.mxu0 0
  %260 = vmatpush1.bf16.msra.mxu0 0
  %261 = vmatprep.subr.bf16.mxu0 0
  %262 = vmatpush1.bf16.msra.mxu0 0
  %263 = vmatprep.subr.bf16.mxu0 0
  %264 = vmatpush1.bf16.msra.mxu0 0
  %265 = vmatprep.subr.bf16.mxu0 0
  %266 = vmatpush1.bf16.msra.mxu0 0
  %267 = vmatprep.subr.bf16.mxu0 0
  %268 = vmatpush1.bf16.msra.mxu0 0
  %269 = vmatprep.subr.bf16.mxu0 0
  %270 = vmatpush1.bf16.msra.mxu0 0
  %271 = vmatprep.subr.bf16.mxu0 0
  %272 = vmatpush1.bf16.msra.mxu0 0
  %273 = vmatprep.subr.bf16.mxu0 0
  %274 = vmatpush1.bf16.msra.mxu0 0
  %275 = vmatprep.subr.bf16.mxu0 0
  %276 = vmatpush1.bf16.msra.mxu0 0
  %277 = vmatprep.subr.bf16.mxu0 0
  %278 = vmatpush1.bf16.msra.mxu0 0
  %279 = vmatprep.mubr.bf16.mxu0 0
  %280 = vmatmul.mubr.bf16.gmra.mrb[0].mxu0 %v245
  %v281 = vpop.f32.mrb[0].mxu0
  %v282 = vadd.f32 0.0, %v281
  %v283 = vpop.f32.mrb[0].mxu0
  %v284 = vpop.f32.mrb[0].mxu0
  %v285 = vpop.f32.mrb[0].mxu0
  %286 = vdwg.mxu0
  %v288 = vrot.slane %v282, 2
  %v290 = vadd.f32 %v123, %v288
  %v291 = vxor.u32 %v290, 2147483648
  %v292 = vmul.f32 %v291, 1.442695
  %v293 = vpow.pop %v292
  %v294 = vadd.f32 %v293, 1.0
  %v295 = vrcp.pop %v294
  %v296 = vmul.f32 1.0, %v295
  %v297 = vtanh.pop %v290
  %v299 = vrot.slane %v138, 2
  %300 = vrot.lane.b32.xlu0 %v299, 32
  %v301 = vpop.permute.xlu0 %300
  %v303 = vmul.f32 %v296, %v301
  %305 = vrot.lane.b32.xlu0 %v297, 64
  %v306 = vpop.permute.xlu0 %305
  %v308 = vmul.f32 %v296, %v306
  %310 = vrot.lane.b32.xlu0 %v308, 32
  %v311 = vpop.permute.xlu0 %310
  %v313 = vadd.f32 %v303, %v311
  %v314 = vtanh.pop %v313
  %316 = vrot.lane.b32.xlu0 %v314, 64
  %v317 = vpop.permute.xlu0 %316
  %v319 = vmul.f32 %v296, %v317
  %321 = vrot.lane.b32.xlu0 %v319, 32
  %v322 = vpop.permute.xlu0 %321
  %vm324 = vcmask 261126
  %325 = vst.msk [vmem:[#allocation3 + $0x8] sm:$0xc0] %vm324, %v322
  %v326 = vpack.c.bf16 %v224, %v224
  %328 = vrot.lane.b32.xlu0 %v326, 32
  %v329 = vpop.permute.xlu0 %328
  %v331 = vsel %vm152, %v329, 0
  %333 = vmatprep.subr.bf16.mxu0 0
  %334 = vmatpush1.bf16.msra.mxu0 %v148
  %335 = vmatprep.subr.bf16.mxu0 0
  %336 = vmatpush1.bf16.msra.mxu0 %v149
  %337 = vmatprep.subr.bf16.mxu0 0
  %338 = vmatpush1.bf16.msra.mxu0 0
  %339 = vmatprep.subr.bf16.mxu0 0
  %340 = vmatpush1.bf16.msra.mxu0 0
  %341 = vmatprep.subr.bf16.mxu0 0
  %342 = vmatpush1.bf16.msra.mxu0 0
  %343 = vmatprep.subr.bf16.mxu0 0
  %344 = vmatpush1.bf16.msra.mxu0 0
  %345 = vmatprep.subr.bf16.mxu0 0
  %346 = vmatpush1.bf16.msra.mxu0 0
  %347 = vmatprep.subr.bf16.mxu0 0
  %348 = vmatpush1.bf16.msra.mxu0 0
  %349 = vmatprep.subr.bf16.mxu0 0
  %350 = vmatpush1.bf16.msra.mxu0 0
  %351 = vmatprep.subr.bf16.mxu0 0
  %352 = vmatpush1.bf16.msra.mxu0 0
  %353 = vmatprep.subr.bf16.mxu0 0
  %354 = vmatpush1.bf16.msra.mxu0 0
  %355 = vmatprep.subr.bf16.mxu0 0
  %356 = vmatpush1.bf16.msra.mxu0 0
  %357 = vmatprep.subr.bf16.mxu0 0
  %358 = vmatpush1.bf16.msra.mxu0 0
  %359 = vmatprep.subr.bf16.mxu0 0
  %360 = vmatpush1.bf16.msra.mxu0 0
  %361 = vmatprep.subr.bf16.mxu0 0
  %362 = vmatpush1.bf16.msra.mxu0 0
  %363 = vmatprep.subr.bf16.mxu0 0
  %364 = vmatpush1.bf16.msra.mxu0 0
  %365 = vmatprep.mubr.bf16.mxu0 0
  %366 = vmatmul.mubr.bf16.gmra.mrb[0].mxu0 %v331
  %v367 = vpop.f32.mrb[0].mxu0
  %v368 = vadd.f32 0.0, %v367
  %v369 = vpop.f32.mrb[0].mxu0
  %v370 = vpop.f32.mrb[0].mxu0
  %v371 = vpop.f32.mrb[0].mxu0
  %372 = vdwg.mxu0
  %v374 = vrot.slane %v368, 6
  %v376 = vadd.f32 %v117, %v374
  %v377 = vxor.u32 %v376, 2147483648
  %v378 = vmul.f32 %v377, 1.442695
  %v379 = vpow.pop %v378
  %v380 = vadd.f32 %v379, 1.0
  %v381 = vrcp.pop %v380
  %v382 = vmul.f32 1.0, %v381
  %v383 = vtanh.pop %v376
  %v385 = vrot.slane %v218, 6
  %v387 = vmul.f32 %v382, %v385
  %389 = vrot.lane.b32.xlu0 %v383, 64
  %v390 = vpop.permute.xlu0 %389
  %v392 = vmul.f32 %v382, %v390
  %394 = vrot.lane.b32.xlu0 %v392, 32
  %v395 = vpop.permute.xlu0 %394
  %v397 = vadd.f32 %v387, %v395
  %v398 = vtanh.pop %v397
  %400 = vrot.lane.b32.xlu0 %v398, 64
  %v401 = vpop.permute.xlu0 %400
  %v403 = vmul.f32 %v382, %v401
  %405 = vrot.lane.b32.xlu0 %v403, 32
  %v406 = vpop.permute.xlu0 %405
  %vm408 = vcmask 257026
  %409 = vst.msk [vmem:[#allocation2] sm:$0xc] %vm408, %v406
  %v410 = vpack.c.bf16 %v319, %v319
  %v412 = vrot.slane %v410, 3
  %413 = vrot.lane.b32.xlu0 %v412, 32
  %v414 = vpop.permute.xlu0 %413
  %v416 = vsel %vm152, %v414, 0
  %418 = vmatprep.subr.bf16.mxu0 0
  %419 = vmatpush1.bf16.msra.mxu0 %v240
  %420 = vmatprep.subr.bf16.mxu0 0
  %421 = vmatpush1.bf16.msra.mxu0 %v241
  %422 = vmatprep.subr.bf16.mxu0 0
  %423 = vmatpush1.bf16.msra.mxu0 0
  %424 = vmatprep.subr.bf16.mxu0 0
  %425 = vmatpush1.bf16.msra.mxu0 0
  %426 = vmatprep.subr.bf16.mxu0 0
  %427 = vmatpush1.bf16.msra.mxu0 0
  %428 = vmatprep.subr.bf16.mxu0 0
  %429 = vmatpush1.bf16.msra.mxu0 0
  %430 = vmatprep.subr.bf16.mxu0 0
  %431 = vmatpush1.bf16.msra.mxu0 0
  %432 = vmatprep.subr.bf16.mxu0 0
  %433 = vmatpush1.bf16.msra.mxu0 0
  %434 = vmatprep.subr.bf16.mxu0 0
  %435 = vmatpush1.bf16.msra.mxu0 0
  %436 = vmatprep.subr.bf16.mxu0 0
  %437 = vmatpush1.bf16.msra.mxu0 0
  %438 = vmatprep.subr.bf16.mxu0 0
  %439 = vmatpush1.bf16.msra.mxu0 0
  %440 = vmatprep.subr.bf16.mxu0 0
  %441 = vmatpush1.bf16.msra.mxu0 0
  %442 = vmatprep.subr.bf16.mxu0 0
  %443 = vmatpush1.bf16.msra.mxu0 0
  %444 = vmatprep.subr.bf16.mxu0 0
  %445 = vmatpush1.bf16.msra.mxu0 0
  %446 = vmatprep.subr.bf16.mxu0 0
  %447 = vmatpush1.bf16.msra.mxu0 0
  %448 = vmatprep.subr.bf16.mxu0 0
  %449 = vmatpush1.bf16.msra.mxu0 0
  %450 = vmatprep.mubr.bf16.mxu0 0
  %451 = vmatmul.mubr.bf16.gmra.mrb[0].mxu0 %v416
  %v452 = vpop.f32.mrb[0].mxu0
  %v453 = vadd.f32 0.0, %v452
  %v454 = vpop.f32.mrb[0].mxu0
  %v455 = vpop.f32.mrb[0].mxu0
  %v456 = vpop.f32.mrb[0].mxu0
  %457 = vdwg.mxu0
  %v459 = vrot.slane %v453, 4
  %v461 = vadd.f32 %v123, %v459
  %v462 = vxor.u32 %v461, 2147483648
  %v463 = vmul.f32 %v462, 1.442695
  %v464 = vpow.pop %v463
  %v465 = vadd.f32 %v464, 1.0
  %v466 = vrcp.pop %v465
  %v467 = vmul.f32 1.0, %v466
  %v468 = vtanh.pop %v461
  %v470 = vrot.slane %v313, 2
  %v472 = vmul.f32 %v467, %v470
  %474 = vrot.lane.b32.xlu0 %v468, 64
  %v475 = vpop.permute.xlu0 %474
  %v477 = vmul.f32 %v467, %v475
  %479 = vrot.lane.b32.xlu0 %v477, 32
  %v480 = vpop.permute.xlu0 %479
  %v482 = vadd.f32 %v472, %v480
  %v483 = vtanh.pop %v482
  %485 = vrot.lane.b32.xlu0 %v483, 64
  %v486 = vpop.permute.xlu0 %485
  %v488 = vmul.f32 %v467, %v486
  %490 = vrot.lane.b32.xlu0 %v488, 32
  %v491 = vpop.permute.xlu0 %490
  %vm493 = vcmask 259076
  %494 = vst.msk [vmem:[#allocation3 + $0x8] sm:$0x30] %vm493, %v491
  %v495 = vpack.c.bf16 %v403, %v403
  %v497 = vrot.slane %v495, 1
  %498 = vrot.lane.b32.xlu0 %v497, 32
  %v499 = vpop.permute.xlu0 %498
  %v501 = vsel %vm152, %v499, 0
  %503 = vmatprep.subr.bf16.mxu0 0
  %504 = vmatpush1.bf16.msra.mxu0 %v148
  %505 = vmatprep.subr.bf16.mxu0 0
  %506 = vmatpush1.bf16.msra.mxu0 %v149
  %507 = vmatprep.subr.bf16.mxu0 0
  %508 = vmatpush1.bf16.msra.mxu0 0
  %509 = vmatprep.subr.bf16.mxu0 0
  %510 = vmatpush1.bf16.msra.mxu0 0
  %511 = vmatprep.subr.bf16.mxu0 0
  %512 = vmatpush1.bf16.msra.mxu0 0
  %513 = vmatprep.subr.bf16.mxu0 0
  %514 = vmatpush1.bf16.msra.mxu0 0
  %515 = vmatprep.subr.bf16.mxu0 0
  %516 = vmatpush1.bf16.msra.mxu0 0
  %517 = vmatprep.subr.bf16.mxu0 0
  %518 = vmatpush1.bf16.msra.mxu0 0
  %519 = vmatprep.subr.bf16.mxu0 0
  %520 = vmatpush1.bf16.msra.mxu0 0
  %521 = vmatprep.subr.bf16.mxu0 0
  %522 = vmatpush1.bf16.msra.mxu0 0
  %523 = vmatprep.subr.bf16.mxu0 0
  %524 = vmatpush1.bf16.msra.mxu0 0
  %525 = vmatprep.subr.bf16.mxu0 0
  %526 = vmatpush1.bf16.msra.mxu0 0
  %527 = vmatprep.subr.bf16.mxu0 0
  %528 = vmatpush1.bf16.msra.mxu0 0
  %529 = vmatprep.subr.bf16.mxu0 0
  %530 = vmatpush1.bf16.msra.mxu0 0
  %531 = vmatprep.subr.bf16.mxu0 0
  %532 = vmatpush1.bf16.msra.mxu0 0
  %533 = vmatprep.subr.bf16.mxu0 0
  %534 = vmatpush1.bf16.msra.mxu0 0
  %535 = vmatprep.mubr.bf16.mxu0 0
  %536 = vmatmul.mubr.bf16.gmra.mrb[0].mxu0 %v501
  %v537 = vpop.f32.mrb[0].mxu0
  %v538 = vadd.f32 0.0, %v537
  %v539 = vpop.f32.mrb[0].mxu0
  %v540 = vpop.f32.mrb[0].mxu0
  %v541 = vpop.f32.mrb[0].mxu0
  %542 = vdwg.mxu0
  %v544 = vrot.slane %v538, 4
  %v546 = vadd.f32 %v117, %v544
  %v547 = vxor.u32 %v546, 2147483648
  %v548 = vmul.f32 %v547, 1.442695
  %v549 = vpow.pop %v548
  %v550 = vadd.f32 %v549, 1.0
  %v551 = vrcp.pop %v550
  %v552 = vmul.f32 1.0, %v551
  %v553 = vtanh.pop %v546
  %v555 = vrot.slane %v397, 6
  %v557 = vmul.f32 %v552, %v555
  %559 = vrot.lane.b32.xlu0 %v553, 64
  %v560 = vpop.permute.xlu0 %559
  %v562 = vmul.f32 %v552, %v560
  %564 = vrot.lane.b32.xlu0 %v562, 32
  %v565 = vpop.permute.xlu0 %564
  %v567 = vadd.f32 %v557, %v565
  %v568 = vtanh.pop %v567
  %570 = vrot.lane.b32.xlu0 %v568, 64
  %v571 = vpop.permute.xlu0 %570
  %v573 = vmul.f32 %v552, %v571
  %575 = vrot.lane.b32.xlu0 %v573, 32
  %v576 = vpop.permute.xlu0 %575
  %578 = vst.msk [vmem:[#allocation2] sm:$0x30] %vm493, %v576
  %v579 = vpack.c.bf16 %v488, %v488
  %v581 = vrot.slane %v579, 2
  %582 = vrot.lane.b32.xlu0 %v581, 32
  %v583 = vpop.permute.xlu0 %582
  %v585 = vsel %vm152, %v583, 0
  %587 = vmatprep.subr.bf16.mxu0 0
  %588 = vmatpush1.bf16.msra.mxu0 %v240
  %589 = vmatprep.subr.bf16.mxu0 0
  %590 = vmatpush1.bf16.msra.mxu0 %v241
  %591 = vmatprep.subr.bf16.mxu0 0
  %592 = vmatpush1.bf16.msra.mxu0 0
  %593 = vmatprep.subr.bf16.mxu0 0
  %594 = vmatpush1.bf16.msra.mxu0 0
  %595 = vmatprep.subr.bf16.mxu0 0
  %596 = vmatpush1.bf16.msra.mxu0 0
  %597 = vmatprep.subr.bf16.mxu0 0
  %598 = vmatpush1.bf16.msra.mxu0 0
  %599 = vmatprep.subr.bf16.mxu0 0
  %600 = vmatpush1.bf16.msra.mxu0 0
  %601 = vmatprep.subr.bf16.mxu0 0
  %602 = vmatpush1.bf16.msra.mxu0 0
  %603 = vmatprep.subr.bf16.mxu0 0
  %604 = vmatpush1.bf16.msra.mxu0 0
  %605 = vmatprep.subr.bf16.mxu0 0
  %606 = vmatpush1.bf16.msra.mxu0 0
  %607 = vmatprep.subr.bf16.mxu0 0
  %608 = vmatpush1.bf16.msra.mxu0 0
  %609 = vmatprep.subr.bf16.mxu0 0
  %610 = vmatpush1.bf16.msra.mxu0 0
  %611 = vmatprep.subr.bf16.mxu0 0
  %612 = vmatpush1.bf16.msra.mxu0 0
  %613 = vmatprep.subr.bf16.mxu0 0
  %614 = vmatpush1.bf16.msra.mxu0 0
  %615 = vmatprep.subr.bf16.mxu0 0
  %616 = vmatpush1.bf16.msra.mxu0 0
  %617 = vmatprep.subr.bf16.mxu0 0
  %618 = vmatpush1.bf16.msra.mxu0 0
  %619 = vmatprep.mubr.bf16.mxu0 0
  %620 = vmatmul.mubr.bf16.gmra.mrb[0].mxu0 %v585
  %v621 = vpop.f32.mrb[0].mxu0
  %v622 = vadd.f32 0.0, %v621
  %v623 = vpop.f32.mrb[0].mxu0
  %v624 = vpop.f32.mrb[0].mxu0
  %v625 = vpop.f32.mrb[0].mxu0
  %626 = vdwg.mxu0
  %v628 = vrot.slane %v622, 6
  %v630 = vadd.f32 %v123, %v628
  %v631 = vxor.u32 %v630, 2147483648
  %v632 = vmul.f32 %v631, 1.442695
  %v633 = vpow.pop %v632
  %v634 = vadd.f32 %v633, 1.0
  %v635 = vrcp.pop %v634
  %v636 = vmul.f32 1.0, %v635
  %v637 = vtanh.pop %v630
  %v639 = vrot.slane %v482, 2
  %v641 = vmul.f32 %v636, %v639
  %643 = vrot.lane.b32.xlu0 %v637, 64
  %v644 = vpop.permute.xlu0 %643
  %v646 = vmul.f32 %v636, %v644
  %648 = vrot.lane.b32.xlu0 %v646, 32
  %v649 = vpop.permute.xlu0 %648
  %v651 = vadd.f32 %v641, %v649
  %v652 = vtanh.pop %v651
  %654 = vrot.lane.b32.xlu0 %v652, 64
  %v655 = vpop.permute.xlu0 %654
  %v657 = vmul.f32 %v636, %v655
  %659 = vrot.lane.b32.xlu0 %v657, 32
  %v660 = vpop.permute.xlu0 %659
  %662 = vst.msk [vmem:[#allocation3 + $0x8] sm:$0xc] %vm408, %v660
  %v663 = vpack.c.bf16 %v573, %v573
  %v665 = vrot.slane %v663, 2
  %666 = vrot.lane.b32.xlu0 %v665, 32
  %v667 = vpop.permute.xlu0 %666
  %v669 = vsel %vm152, %v667, 0
  %671 = vmatprep.subr.bf16.mxu0 0
  %672 = vmatpush1.bf16.msra.mxu0 %v148
  %673 = vmatprep.subr.bf16.mxu0 0
  %674 = vmatpush1.bf16.msra.mxu0 %v149
  %675 = vmatprep.subr.bf16.mxu0 0
  %676 = vmatpush1.bf16.msra.mxu0 0
  %677 = vmatprep.subr.bf16.mxu0 0
  %678 = vmatpush1.bf16.msra.mxu0 0
  %679 = vmatprep.subr.bf16.mxu0 0
  %680 = vmatpush1.bf16.msra.mxu0 0
  %681 = vmatprep.subr.bf16.mxu0 0
  %682 = vmatpush1.bf16.msra.mxu0 0
  %683 = vmatprep.subr.bf16.mxu0 0
  %684 = vmatpush1.bf16.msra.mxu0 0
  %685 = vmatprep.subr.bf16.mxu0 0
  %686 = vmatpush1.bf16.msra.mxu0 0
  %687 = vmatprep.subr.bf16.mxu0 0
  %688 = vmatpush1.bf16.msra.mxu0 0
  %689 = vmatprep.subr.bf16.mxu0 0
  %690 = vmatpush1.bf16.msra.mxu0 0
  %691 = vmatprep.subr.bf16.mxu0 0
  %692 = vmatpush1.bf16.msra.mxu0 0
  %693 = vmatprep.subr.bf16.mxu0 0
  %694 = vmatpush1.bf16.msra.mxu0 0
  %695 = vmatprep.subr.bf16.mxu0 0
  %696 = vmatpush1.bf16.msra.mxu0 0
  %697 = vmatprep.subr.bf16.mxu0 0
  %698 = vmatpush1.bf16.msra.mxu0 0
  %699 = vmatprep.subr.bf16.mxu0 0
  %700 = vmatpush1.bf16.msra.mxu0 0
  %701 = vmatprep.subr.bf16.mxu0 0
  %702 = vmatpush1.bf16.msra.mxu0 0
  %703 = vmatprep.mubr.bf16.mxu0 0
  %704 = vmatmul.mubr.bf16.gmra.mrb[0].mxu0 %v669
  %v705 = vpop.f32.mrb[0].mxu0
  %v706 = vadd.f32 0.0, %v705
  %v707 = vpop.f32.mrb[0].mxu0
  %v708 = vpop.f32.mrb[0].mxu0
  %v709 = vpop.f32.mrb[0].mxu0
  %710 = vdwg.mxu0
  %v712 = vrot.slane %v706, 2
  %v714 = vadd.f32 %v117, %v712
  %v715 = vxor.u32 %v714, 2147483648
  %v716 = vmul.f32 %v715, 1.442695
  %v717 = vpow.pop %v716
  %v718 = vadd.f32 %v717, 1.0
  %v719 = vrcp.pop %v718
  %v720 = vmul.f32 1.0, %v719
  %v721 = vtanh.pop %v714
  %v723 = vrot.slane %v567, 6
  %v725 = vmul.f32 %v720, %v723
  %727 = vrot.lane.b32.xlu0 %v721, 64
  %v728 = vpop.permute.xlu0 %727
  %v730 = vmul.f32 %v720, %v728
  %732 = vrot.lane.b32.xlu0 %v730, 32
  %v733 = vpop.permute.xlu0 %732
  %v735 = vadd.f32 %v725, %v733
  %v736 = vtanh.pop %v735
  %738 = vrot.lane.b32.xlu0 %v736, 64
  %v739 = vpop.permute.xlu0 %738
  %v741 = vmul.f32 %v720, %v739
  %743 = vrot.lane.b32.xlu0 %v741, 32
  %v744 = vpop.permute.xlu0 %743
  %746 = vst.msk [vmem:[#allocation2] sm:$0xc0] %vm324, %v744
  %v747 = vpack.c.bf16 %v657, %v657
  %v749 = vrot.slane %v747, 1
  %750 = vrot.lane.b32.xlu0 %v749, 32
  %v751 = vpop.permute.xlu0 %750
  %v753 = vsel %vm152, %v751, 0
  %755 = vmatprep.subr.bf16.mxu0 0
  %756 = vmatpush1.bf16.msra.mxu0 %v240
  %757 = vmatprep.subr.bf16.mxu0 0
  %758 = vmatpush1.bf16.msra.mxu0 %v241
  %759 = vmatprep.subr.bf16.mxu0 0
  %760 = vmatpush1.bf16.msra.mxu0 0
  %761 = vmatprep.subr.bf16.mxu0 0
  %762 = vmatpush1.bf16.msra.mxu0 0
  %763 = vmatprep.subr.bf16.mxu0 0
  %764 = vmatpush1.bf16.msra.mxu0 0
  %765 = vmatprep.subr.bf16.mxu0 0
  %766 = vmatpush1.bf16.msra.mxu0 0
  %767 = vmatprep.subr.bf16.mxu0 0
  %768 = vmatpush1.bf16.msra.mxu0 0
  %769 = vmatprep.subr.bf16.mxu0 0
  %770 = vmatpush1.bf16.msra.mxu0 0
  %771 = vmatprep.subr.bf16.mxu0 0
  %772 = vmatpush1.bf16.msra.mxu0 0
  %773 = vmatprep.subr.bf16.mxu0 0
  %774 = vmatpush1.bf16.msra.mxu0 0
  %775 = vmatprep.subr.bf16.mxu0 0
  %776 = vmatpush1.bf16.msra.mxu0 0
  %777 = vmatprep.subr.bf16.mxu0 0
  %778 = vmatpush1.bf16.msra.mxu0 0
  %779 = vmatprep.subr.bf16.mxu0 0
  %780 = vmatpush1.bf16.msra.mxu0 0
  %781 = vmatprep.subr.bf16.mxu0 0
  %782 = vmatpush1.bf16.msra.mxu0 0
  %783 = vmatprep.subr.bf16.mxu0 0
  %784 = vmatpush1.bf16.msra.mxu0 0
  %785 = vmatprep.subr.bf16.mxu0 0
  %786 = vmatpush1.bf16.msra.mxu0 0
  %787 = vmatprep.mubr.bf16.mxu0 0
  %788 = vmatmul.mubr.bf16.gmra.mrb[0].mxu0 %v753
  %v789 = vpop.f32.mrb[0].mxu0
  %v790 = vadd.f32 0.0, %v789
  %v791 = vpop.f32.mrb[0].mxu0
  %v792 = vpop.f32.mrb[0].mxu0
  %v793 = vpop.f32.mrb[0].mxu0
  %794 = vdwg.mxu0
  %v795 = vadd.f32 %v123, %v790
  %v796 = vxor.u32 %v795, 2147483648
  %v797 = vmul.f32 %v796, 1.442695
  %v798 = vpow.pop %v797
  %v799 = vadd.f32 %v798, 1.0
  %v800 = vrcp.pop %v799
  %v801 = vmul.f32 1.0, %v800
  %v802 = vtanh.pop %v795
  %v804 = vrot.slane %v651, 2
  %v806 = vmul.f32 %v801, %v804
  %808 = vrot.lane.b32.xlu0 %v802, 64
  %v809 = vpop.permute.xlu0 %808
  %v811 = vmul.f32 %v801, %v809
  %813 = vrot.lane.b32.xlu0 %v811, 32
  %v814 = vpop.permute.xlu0 %813
  %v816 = vadd.f32 %v806, %v814
  %v817 = vtanh.pop %v816
  %819 = vrot.lane.b32.xlu0 %v817, 64
  %v820 = vpop.permute.xlu0 %819
  %v822 = vmul.f32 %v801, %v820
  %824 = vrot.lane.b32.xlu0 %v822, 32
  %v825 = vpop.permute.xlu0 %824
  %827 = vst.msk [vmem:[#allocation3 + $0x8] sm:$0x3] %vm229, %v825
  %v828 = vpack.c.bf16 %v741, %v741
  %v830 = vrot.slane %v828, 3
  %831 = vrot.lane.b32.xlu0 %v830, 32
  %v832 = vpop.permute.xlu0 %831
  %v834 = vsel %vm152, %v832, 0
  %836 = vmatprep.subr.bf16.mxu0 0
  %837 = vmatpush1.bf16.msra.mxu0 %v148
  %838 = vmatprep.subr.bf16.mxu0 0
  %839 = vmatpush1.bf16.msra.mxu0 %v149
  %840 = vmatprep.subr.bf16.mxu0 0
  %841 = vmatpush1.bf16.msra.mxu0 0
  %842 = vmatprep.subr.bf16.mxu0 0
  %843 = vmatpush1.bf16.msra.mxu0 0
  %844 = vmatprep.subr.bf16.mxu0 0
  %845 = vmatpush1.bf16.msra.mxu0 0
  %846 = vmatprep.subr.bf16.mxu0 0
  %847 = vmatpush1.bf16.msra.mxu0 0
  %848 = vmatprep.subr.bf16.mxu0 0
  %849 = vmatpush1.bf16.msra.mxu0 0
  %850 = vmatprep.subr.bf16.mxu0 0
  %851 = vmatpush1.bf16.msra.mxu0 0
  %852 = vmatprep.subr.bf16.mxu0 0
  %853 = vmatpush1.bf16.msra.mxu0 0
  %854 = vmatprep.subr.bf16.mxu0 0
  %855 = vmatpush1.bf16.msra.mxu0 0
  %856 = vmatprep.subr.bf16.mxu0 0
  %857 = vmatpush1.bf16.msra.mxu0 0
  %858 = vmatprep.subr.bf16.mxu0 0
  %859 = vmatpush1.bf16.msra.mxu0 0
  %860 = vmatprep.subr.bf16.mxu0 0
  %861 = vmatpush1.bf16.msra.mxu0 0
  %862 = vmatprep.subr.bf16.mxu0 0
  %863 = vmatpush1.bf16.msra.mxu0 0
  %864 = vmatprep.subr.bf16.mxu0 0
  %865 = vmatpush1.bf16.msra.mxu0 0
  %866 = vmatprep.subr.bf16.mxu0 0
  %867 = vmatpush1.bf16.msra.mxu0 0
  %868 = vmatprep.mubr.bf16.mxu0 0
  %869 = vmatmul.mubr.bf16.gmra.mrb[0].mxu0 %v834
  %v870 = vpop.f32.mrb[0].mxu0
  %v871 = vadd.f32 0.0, %v870
  %v872 = vpop.f32.mrb[0].mxu0
  %v873 = vpop.f32.mrb[0].mxu0
  %v874 = vpop.f32.mrb[0].mxu0
  %875 = vdwg.mxu0
  %v876 = vadd.f32 %v121, %v871
  %v877 = vxor.u32 %v876, 2147483648
  %v878 = vmul.f32 %v877, 1.442695
  %v879 = vpow.pop %v878
  %v880 = vadd.f32 %v879, 1.0
  %v881 = vrcp.pop %v880
  %v882 = vmul.f32 1.0, %v881
  %v883 = vtanh.pop %v876
  %v885 = vrot.slane %v735, 6
  %v887 = vmul.f32 %v882, %v885
  %889 = vrot.lane.b32.xlu0 %v883, 64
  %v890 = vpop.permute.xlu0 %889
  %v892 = vmul.f32 %v882, %v890
  %894 = vrot.lane.b32.xlu0 %v892, 32
  %v895 = vpop.permute.xlu0 %894
  %v897 = vadd.f32 %v887, %v895
  %v898 = vtanh.pop %v897
  %900 = vrot.lane.b32.xlu0 %v898, 64
  %v901 = vpop.permute.xlu0 %900
  %v903 = vmul.f32 %v882, %v901
  %905 = vrot.lane.b32.xlu0 %v903, 32
  %v906 = vpop.permute.xlu0 %905
  %908 = vst.msk [vmem:[#allocation2 + $0x8] sm:$0x3] %vm229, %v906
  %v909 = vpack.c.bf16 %v822, %v822
  %911 = vrot.lane.b32.xlu0 %v909, 32
  %v912 = vpop.permute.xlu0 %911
  %v914 = vsel %vm152, %v912, 0
  %916 = vmatprep.subr.bf16.mxu0 0
  %917 = vmatpush1.bf16.msra.mxu0 %v240
  %918 = vmatprep.subr.bf16.mxu0 0
  %919 = vmatpush1.bf16.msra.mxu0 %v241
  %920 = vmatprep.subr.bf16.mxu0 0
  %921 = vmatpush1.bf16.msra.mxu0 0
  %922 = vmatprep.subr.bf16.mxu0 0
  %923 = vmatpush1.bf16.msra.mxu0 0
  %924 = vmatprep.subr.bf16.mxu0 0
  %925 = vmatpush1.bf16.msra.mxu0 0
  %926 = vmatprep.subr.bf16.mxu0 0
  %927 = vmatpush1.bf16.msra.mxu0 0
  %928 = vmatprep.subr.bf16.mxu0 0
  %929 = vmatpush1.bf16.msra.mxu0 0
  %930 = vmatprep.subr.bf16.mxu0 0
  %931 = vmatpush1.bf16.msra.mxu0 0
  %932 = vmatprep.subr.bf16.mxu0 0
  %933 = vmatpush1.bf16.msra.mxu0 0
  %934 = vmatprep.subr.bf16.mxu0 0
  %935 = vmatpush1.bf16.msra.mxu0 0
  %936 = vmatprep.subr.bf16.mxu0 0
  %937 = vmatpush1.bf16.msra.mxu0 0
  %938 = vmatprep.subr.bf16.mxu0 0
  %939 = vmatpush1.bf16.msra.mxu0 0
  %940 = vmatprep.subr.bf16.mxu0 0
  %941 = vmatpush1.bf16.msra.mxu0 0
  %942 = vmatprep.subr.bf16.mxu0 0
  %943 = vmatpush1.bf16.msra.mxu0 0
  %944 = vmatprep.subr.bf16.mxu0 0
  %945 = vmatpush1.bf16.msra.mxu0 0
  %946 = vmatprep.subr.bf16.mxu0 0
  %947 = vmatpush1.bf16.msra.mxu0 0
  %948 = vmatprep.mubr.bf16.mxu0 0
  %949 = vmatmul.mubr.bf16.gmra.mrb[0].mxu0 %v914
  %v950 = vpop.f32.mrb[0].mxu0
  %v951 = vadd.f32 0.0, %v950
  %v952 = vpop.f32.mrb[0].mxu0
  %v953 = vpop.f32.mrb[0].mxu0
  %v954 = vpop.f32.mrb[0].mxu0
  %955 = vdwg.mxu0
  %v957 = vrot.slane %v951, 2
  %v959 = vadd.f32 %v119, %v957
  %v960 = vxor.u32 %v959, 2147483648
  %v961 = vmul.f32 %v960, 1.442695
  %v962 = vpow.pop %v961
  %v963 = vadd.f32 %v962, 1.0
  %v964 = vrcp.pop %v963
  %v965 = vmul.f32 1.0, %v964
  %v966 = vtanh.pop %v959
  %v968 = vrot.slane %v816, 2
  %v970 = vmul.f32 %v965, %v968
  %972 = vrot.lane.b32.xlu0 %v966, 64
  %v973 = vpop.permute.xlu0 %972
  %v975 = vmul.f32 %v965, %v973
  %977 = vrot.lane.b32.xlu0 %v975, 32
  %v978 = vpop.permute.xlu0 %977
  %v980 = vadd.f32 %v970, %v978
  %v981 = vtanh.pop %v980
  %983 = vrot.lane.b32.xlu0 %v981, 64
  %v984 = vpop.permute.xlu0 %983
  %v986 = vmul.f32 %v965, %v984
  %988 = vrot.lane.b32.xlu0 %v986, 32
  %v989 = vpop.permute.xlu0 %988
  %991 = vst.msk [vmem:[#allocation3] sm:$0xc0] %vm324, %v989
  %v992 = vpack.c.bf16 %v903, %v903
  %994 = vrot.lane.b32.xlu0 %v992, 32
  %v995 = vpop.permute.xlu0 %994
  %v997 = vsel %vm152, %v995, 0
  %999 = vmatprep.subr.bf16.mxu0 0
  %1000 = vmatpush1.bf16.msra.mxu0 %v148
  %1001 = vmatprep.subr.bf16.mxu0 0
  %1002 = vmatpush1.bf16.msra.mxu0 %v149
  %1003 = vmatprep.subr.bf16.mxu0 0
  %1004 = vmatpush1.bf16.msra.mxu0 0
  %1005 = vmatprep.subr.bf16.mxu0 0
  %1006 = vmatpush1.bf16.msra.mxu0 0
  %1007 = vmatprep.subr.bf16.mxu0 0
  %1008 = vmatpush1.bf16.msra.mxu0 0
  %1009 = vmatprep.subr.bf16.mxu0 0
  %1010 = vmatpush1.bf16.msra.mxu0 0
  %1011 = vmatprep.subr.bf16.mxu0 0
  %1012 = vmatpush1.bf16.msra.mxu0 0
  %1013 = vmatprep.subr.bf16.mxu0 0
  %1014 = vmatpush1.bf16.msra.mxu0 0
  %1015 = vmatprep.subr.bf16.mxu0 0
  %1016 = vmatpush1.bf16.msra.mxu0 0
  %1017 = vmatprep.subr.bf16.mxu0 0
  %1018 = vmatpush1.bf16.msra.mxu0 0
  %1019 = vmatprep.subr.bf16.mxu0 0
  %1020 = vmatpush1.bf16.msra.mxu0 0
  %1021 = vmatprep.subr.bf16.mxu0 0
  %1022 = vmatpush1.bf16.msra.mxu0 0
  %1023 = vmatprep.subr.bf16.mxu0 0
  %1024 = vmatpush1.bf16.msra.mxu0 0
  %1025 = vmatprep.subr.bf16.mxu0 0
  %1026 = vmatpush1.bf16.msra.mxu0 0
  %1027 = vmatprep.subr.bf16.mxu0 0
  %1028 = vmatpush1.bf16.msra.mxu0 0
  %1029 = vmatprep.subr.bf16.mxu0 0
  %1030 = vmatpush1.bf16.msra.mxu0 0
  %1031 = vmatprep.mubr.bf16.mxu0 0
  %1032 = vmatmul.mubr.bf16.gmra.mrb[0].mxu0 %v997
  %v1033 = vpop.f32.mrb[0].mxu0
  %v1034 = vadd.f32 0.0, %v1033
  %v1035 = vpop.f32.mrb[0].mxu0
  %v1036 = vpop.f32.mrb[0].mxu0
  %v1037 = vpop.f32.mrb[0].mxu0
  %1038 = vdwg.mxu0
  %v1040 = vrot.slane %v1034, 6
  %v1042 = vadd.f32 %v121, %v1040
  %v1043 = vxor.u32 %v1042, 2147483648
  %v1044 = vmul.f32 %v1043, 1.442695
  %v1045 = vpow.pop %v1044
  %v1046 = vadd.f32 %v1045, 1.0
  %v1047 = vrcp.pop %v1046
  %v1048 = vmul.f32 1.0, %v1047
  %v1049 = vtanh.pop %v1042
  %v1051 = vrot.slane %v897, 6
  %v1053 = vmul.f32 %v1048, %v1051
  %1055 = vrot.lane.b32.xlu0 %v1049, 64
  %v1056 = vpop.permute.xlu0 %1055
  %v1058 = vmul.f32 %v1048, %v1056
  %1060 = vrot.lane.b32.xlu0 %v1058, 32
  %v1061 = vpop.permute.xlu0 %1060
  %v1063 = vadd.f32 %v1053, %v1061
  %v1064 = vtanh.pop %v1063
  %1066 = vrot.lane.b32.xlu0 %v1064, 64
  %v1067 = vpop.permute.xlu0 %1066
  %v1069 = vmul.f32 %v1048, %v1067
  %1071 = vrot.lane.b32.xlu0 %v1069, 32
  %v1072 = vpop.permute.xlu0 %1071
  %1074 = vst.msk [vmem:[#allocation2 + $0x8] sm:$0xc] %vm408, %v1072
  %v1075 = vpack.c.bf16 %v986, %v986
  %v1077 = vrot.slane %v1075, 3
  %1078 = vrot.lane.b32.xlu0 %v1077, 32
  %v1079 = vpop.permute.xlu0 %1078
  %v1081 = vsel %vm152, %v1079, 0
  %1083 = vmatprep.subr.bf16.mxu0 0
  %1084 = vmatpush1.bf16.msra.mxu0 %v240
  %1085 = vmatprep.subr.bf16.mxu0 0
  %1086 = vmatpush1.bf16.msra.mxu0 %v241
  %1087 = vmatprep.subr.bf16.mxu0 0
  %1088 = vmatpush1.bf16.msra.mxu0 0
  %1089 = vmatprep.subr.bf16.mxu0 0
  %1090 = vmatpush1.bf16.msra.mxu0 0
  %1091 = vmatprep.subr.bf16.mxu0 0
  %1092 = vmatpush1.bf16.msra.mxu0 0
  %1093 = vmatprep.subr.bf16.mxu0 0
  %1094 = vmatpush1.bf16.msra.mxu0 0
  %1095 = vmatprep.subr.bf16.mxu0 0
  %1096 = vmatpush1.bf16.msra.mxu0 0
  %1097 = vmatprep.subr.bf16.mxu0 0
  %1098 = vmatpush1.bf16.msra.mxu0 0
  %1099 = vmatprep.subr.bf16.mxu0 0
  %1100 = vmatpush1.bf16.msra.mxu0 0
  %1101 = vmatprep.subr.bf16.mxu0 0
  %1102 = vmatpush1.bf16.msra.mxu0 0
  %1103 = vmatprep.subr.bf16.mxu0 0
  %1104 = vmatpush1.bf16.msra.mxu0 0
  %1105 = vmatprep.subr.bf16.mxu0 0
  %1106 = vmatpush1.bf16.msra.mxu0 0
  %1107 = vmatprep.subr.bf16.mxu0 0
  %1108 = vmatpush1.bf16.msra.mxu0 0
  %1109 = vmatprep.subr.bf16.mxu0 0
  %1110 = vmatpush1.bf16.msra.mxu0 0
  %1111 = vmatprep.subr.bf16.mxu0 0
  %1112 = vmatpush1.bf16.msra.mxu0 0
  %1113 = vmatprep.subr.bf16.mxu0 0
  %1114 = vmatpush1.bf16.msra.mxu0 0
  %1115 = vmatprep.mubr.bf16.mxu0 0
  %1116 = vmatmul.mubr.bf16.gmra.mrb[0].mxu0 %v1081
  %v1117 = vpop.f32.mrb[0].mxu0
  %v1118 = vadd.f32 0.0, %v1117
  %v1119 = vpop.f32.mrb[0].mxu0
  %v1120 = vpop.f32.mrb[0].mxu0
  %v1121 = vpop.f32.mrb[0].mxu0
  %1122 = vdwg.mxu0
  %v1124 = vrot.slane %v1118, 4
  %v1126 = vadd.f32 %v119, %v1124
  %v1127 = vxor.u32 %v1126, 2147483648
  %v1128 = vmul.f32 %v1127, 1.442695
  %v1129 = vpow.pop %v1128
  %v1130 = vadd.f32 %v1129, 1.0
  %v1131 = vrcp.pop %v1130
  %v1132 = vmul.f32 1.0, %v1131
  %v1133 = vtanh.pop %v1126
  %v1135 = vrot.slane %v980, 2
  %v1137 = vmul.f32 %v1132, %v1135
  %1139 = vrot.lane.b32.xlu0 %v1133, 64
  %v1140 = vpop.permute.xlu0 %1139
  %v1142 = vmul.f32 %v1132, %v1140
  %1144 = vrot.lane.b32.xlu0 %v1142, 32
  %v1145 = vpop.permute.xlu0 %1144
  %v1147 = vadd.f32 %v1137, %v1145
  %v1148 = vtanh.pop %v1147
  %1150 = vrot.lane.b32.xlu0 %v1148, 64
  %v1151 = vpop.permute.xlu0 %1150
  %v1153 = vmul.f32 %v1132, %v1151
  %1155 = vrot.lane.b32.xlu0 %v1153, 32
  %v1156 = vpop.permute.xlu0 %1155
  %1158 = vst.msk [vmem:[#allocation3] sm:$0x30] %vm493, %v1156
  %v1159 = vpack.c.bf16 %v1069, %v1069
  %v1161 = vrot.slane %v1159, 1
  %1162 = vrot.lane.b32.xlu0 %v1161, 32
  %v1163 = vpop.permute.xlu0 %1162
  %v1165 = vsel %vm152, %v1163, 0
  %1167 = vmatprep.subr.bf16.mxu0 0
  %1168 = vmatpush1.bf16.msra.mxu0 %v148
  %1169 = vmatprep.subr.bf16.mxu0 0
  %1170 = vmatpush1.bf16.msra.mxu0 %v149
  %1171 = vmatprep.subr.bf16.mxu0 0
  %1172 = vmatpush1.bf16.msra.mxu0 0
  %1173 = vmatprep.subr.bf16.mxu0 0
  %1174 = vmatpush1.bf16.msra.mxu0 0
  %1175 = vmatprep.subr.bf16.mxu0 0
  %1176 = vmatpush1.bf16.msra.mxu0 0
  %1177 = vmatprep.subr.bf16.mxu0 0
  %1178 = vmatpush1.bf16.msra.mxu0 0
  %1179 = vmatprep.subr.bf16.mxu0 0
  %1180 = vmatpush1.bf16.msra.mxu0 0
  %1181 = vmatprep.subr.bf16.mxu0 0
  %1182 = vmatpush1.bf16.msra.mxu0 0
  %1183 = vmatprep.subr.bf16.mxu0 0
  %1184 = vmatpush1.bf16.msra.mxu0 0
  %1185 = vmatprep.subr.bf16.mxu0 0
  %1186 = vmatpush1.bf16.msra.mxu0 0
  %1187 = vmatprep.subr.bf16.mxu0 0
  %1188 = vmatpush1.bf16.msra.mxu0 0
  %1189 = vmatprep.subr.bf16.mxu0 0
  %1190 = vmatpush1.bf16.msra.mxu0 0
  %1191 = vmatprep.subr.bf16.mxu0 0
  %1192 = vmatpush1.bf16.msra.mxu0 0
  %1193 = vmatprep.subr.bf16.mxu0 0
  %1194 = vmatpush1.bf16.msra.mxu0 0
  %1195 = vmatprep.subr.bf16.mxu0 0
  %1196 = vmatpush1.bf16.msra.mxu0 0
  %1197 = vmatprep.subr.bf16.mxu0 0
  %1198 = vmatpush1.bf16.msra.mxu0 0
  %1199 = vmatprep.mubr.bf16.mxu0 0
  %1200 = vmatmul.mubr.bf16.gmra.mrb[0].mxu0 %v1165
  %v1201 = vpop.f32.mrb[0].mxu0
  %v1202 = vadd.f32 0.0, %v1201
  %v1203 = vpop.f32.mrb[0].mxu0
  %v1204 = vpop.f32.mrb[0].mxu0
  %v1205 = vpop.f32.mrb[0].mxu0
  %1206 = vdwg.mxu0
  %v1208 = vrot.slane %v1202, 4
  %v1210 = vadd.f32 %v121, %v1208
  %v1211 = vxor.u32 %v1210, 2147483648
  %v1212 = vmul.f32 %v1211, 1.442695
  %v1213 = vpow.pop %v1212
  %v1214 = vadd.f32 %v1213, 1.0
  %v1215 = vrcp.pop %v1214
  %v1216 = vmul.f32 1.0, %v1215
  %v1217 = vtanh.pop %v1210
  %v1219 = vrot.slane %v1063, 6
  %v1221 = vmul.f32 %v1216, %v1219
  %1223 = vrot.lane.b32.xlu0 %v1217, 64
  %v1224 = vpop.permute.xlu0 %1223
  %v1226 = vmul.f32 %v1216, %v1224
  %1228 = vrot.lane.b32.xlu0 %v1226, 32
  %v1229 = vpop.permute.xlu0 %1228
  %v1231 = vadd.f32 %v1221, %v1229
  %v1232 = vtanh.pop %v1231
  %1234 = vrot.lane.b32.xlu0 %v1232, 64
  %v1235 = vpop.permute.xlu0 %1234
  %v1237 = vmul.f32 %v1216, %v1235
  %1239 = vrot.lane.b32.xlu0 %v1237, 32
  %v1240 = vpop.permute.xlu0 %1239
  %1242 = vst.msk [vmem:[#allocation2 + $0x8] sm:$0x30] %vm493, %v1240
  %v1243 = vpack.c.bf16 %v1153, %v1153
  %v1245 = vrot.slane %v1243, 2
  %1246 = vrot.lane.b32.xlu0 %v1245, 32
  %v1247 = vpop.permute.xlu0 %1246
  %v1249 = vsel %vm152, %v1247, 0
  %1251 = vmatprep.subr.bf16.mxu0 0
  %1252 = vmatpush1.bf16.msra.mxu0 %v240
  %1253 = vmatprep.subr.bf16.mxu0 0
  %1254 = vmatpush1.bf16.msra.mxu0 %v241
  %1255 = vmatprep.subr.bf16.mxu0 0
  %1256 = vmatpush1.bf16.msra.mxu0 0
  %1257 = vmatprep.subr.bf16.mxu0 0
  %1258 = vmatpush1.bf16.msra.mxu0 0
  %1259 = vmatprep.subr.bf16.mxu0 0
  %1260 = vmatpush1.bf16.msra.mxu0 0
  %1261 = vmatprep.subr.bf16.mxu0 0
  %1262 = vmatpush1.bf16.msra.mxu0 0
  %1263 = vmatprep.subr.bf16.mxu0 0
  %1264 = vmatpush1.bf16.msra.mxu0 0
  %1265 = vmatprep.subr.bf16.mxu0 0
  %1266 = vmatpush1.bf16.msra.mxu0 0
  %1267 = vmatprep.subr.bf16.mxu0 0
  %1268 = vmatpush1.bf16.msra.mxu0 0
  %1269 = vmatprep.subr.bf16.mxu0 0
  %1270 = vmatpush1.bf16.msra.mxu0 0
  %1271 = vmatprep.subr.bf16.mxu0 0
  %1272 = vmatpush1.bf16.msra.mxu0 0
  %1273 = vmatprep.subr.bf16.mxu0 0
  %1274 = vmatpush1.bf16.msra.mxu0 0
  %1275 = vmatprep.subr.bf16.mxu0 0
  %1276 = vmatpush1.bf16.msra.mxu0 0
  %1277 = vmatprep.subr.bf16.mxu0 0
  %1278 = vmatpush1.bf16.msra.mxu0 0
  %1279 = vmatprep.subr.bf16.mxu0 0
  %1280 = vmatpush1.bf16.msra.mxu0 0
  %1281 = vmatprep.subr.bf16.mxu0 0
  %1282 = vmatpush1.bf16.msra.mxu0 0
  %1283 = vmatprep.mubr.bf16.mxu0 0
  %1284 = vmatmul.mubr.bf16.gmra.mrb[0].mxu0 %v1249
  %v1285 = vpop.f32.mrb[0].mxu0
  %v1286 = vadd.f32 0.0, %v1285
  %v1287 = vpop.f32.mrb[0].mxu0
  %v1288 = vpop.f32.mrb[0].mxu0
  %v1289 = vpop.f32.mrb[0].mxu0
  %1290 = vdwg.mxu0
  %v1292 = vrot.slane %v1286, 6
  %v1294 = vadd.f32 %v119, %v1292
  %v1295 = vxor.u32 %v1294, 2147483648
  %v1296 = vmul.f32 %v1295, 1.442695
  %v1297 = vpow.pop %v1296
  %v1298 = vadd.f32 %v1297, 1.0
  %v1299 = vrcp.pop %v1298
  %v1300 = vmul.f32 1.0, %v1299
  %v1301 = vtanh.pop %v1294
  %v1303 = vrot.slane %v1147, 2
  %v1305 = vmul.f32 %v1300, %v1303
  %1307 = vrot.lane.b32.xlu0 %v1301, 64
  %v1308 = vpop.permute.xlu0 %1307
  %v1310 = vmul.f32 %v1300, %v1308
  %1312 = vrot.lane.b32.xlu0 %v1310, 32
  %v1313 = vpop.permute.xlu0 %1312
  %v1315 = vadd.f32 %v1305, %v1313
  %v1316 = vtanh.pop %v1315
  %1318 = vrot.lane.b32.xlu0 %v1316, 64
  %v1319 = vpop.permute.xlu0 %1318
  %v1321 = vmul.f32 %v1300, %v1319
  %1323 = vrot.lane.b32.xlu0 %v1321, 32
  %v1324 = vpop.permute.xlu0 %1323
  %1326 = vst.msk [vmem:[#allocation3] sm:$0xc] %vm408, %v1324
  %v1327 = vpack.c.bf16 %v1237, %v1237
  %v1329 = vrot.slane %v1327, 2
  %1330 = vrot.lane.b32.xlu0 %v1329, 32
  %v1331 = vpop.permute.xlu0 %1330
  %v1333 = vsel %vm152, %v1331, 0
  %1335 = vmatprep.subr.bf16.mxu0 0
  %1336 = vmatpush1.bf16.msra.mxu0 %v148
  %1337 = vmatprep.subr.bf16.mxu0 0
  %1338 = vmatpush1.bf16.msra.mxu0 %v149
  %1339 = vmatprep.subr.bf16.mxu0 0
  %1340 = vmatpush1.bf16.msra.mxu0 0
  %1341 = vmatprep.subr.bf16.mxu0 0
  %1342 = vmatpush1.bf16.msra.mxu0 0
  %1343 = vmatprep.subr.bf16.mxu0 0
  %1344 = vmatpush1.bf16.msra.mxu0 0
  %1345 = vmatprep.subr.bf16.mxu0 0
  %1346 = vmatpush1.bf16.msra.mxu0 0
  %1347 = vmatprep.subr.bf16.mxu0 0
  %1348 = vmatpush1.bf16.msra.mxu0 0
  %1349 = vmatprep.subr.bf16.mxu0 0
  %1350 = vmatpush1.bf16.msra.mxu0 0
  %1351 = vmatprep.subr.bf16.mxu0 0
  %1352 = vmatpush1.bf16.msra.mxu0 0
  %1353 = vmatprep.subr.bf16.mxu0 0
  %1354 = vmatpush1.bf16.msra.mxu0 0
  %1355 = vmatprep.subr.bf16.mxu0 0
  %1356 = vmatpush1.bf16.msra.mxu0 0
  %1357 = vmatprep.subr.bf16.mxu0 0
  %1358 = vmatpush1.bf16.msra.mxu0 0
  %1359 = vmatprep.subr.bf16.mxu0 0
  %1360 = vmatpush1.bf16.msra.mxu0 0
  %1361 = vmatprep.subr.bf16.mxu0 0
  %1362 = vmatpush1.bf16.msra.mxu0 0
  %1363 = vmatprep.subr.bf16.mxu0 0
  %1364 = vmatpush1.bf16.msra.mxu0 0
  %1365 = vmatprep.subr.bf16.mxu0 0
  %1366 = vmatpush1.bf16.msra.mxu0 0
  %1367 = vmatprep.mubr.bf16.mxu0 0
  %1368 = vmatmul.mubr.bf16.gmra.mrb[0].mxu0 %v1333
  %v1369 = vpop.f32.mrb[0].mxu0
  %v1370 = vadd.f32 0.0, %v1369
  %v1371 = vpop.f32.mrb[0].mxu0
  %v1372 = vpop.f32.mrb[0].mxu0
  %v1373 = vpop.f32.mrb[0].mxu0
  %1374 = vdwg.mxu0
  %v1376 = vrot.slane %v1370, 2
  %v1378 = vadd.f32 %v121, %v1376
  %v1379 = vxor.u32 %v1378, 2147483648
  %v1380 = vmul.f32 %v1379, 1.442695
  %v1381 = vpow.pop %v1380
  %v1382 = vadd.f32 %v1381, 1.0
  %v1383 = vrcp.pop %v1382
  %v1384 = vmul.f32 1.0, %v1383
  %v1385 = vtanh.pop %v1378
  %v1387 = vrot.slane %v1231, 6
  %v1389 = vmul.f32 %v1384, %v1387
  %1391 = vrot.lane.b32.xlu0 %v1385, 64
  %v1392 = vpop.permute.xlu0 %1391
  %v1394 = vmul.f32 %v1384, %v1392
  %1396 = vrot.lane.b32.xlu0 %v1394, 32
  %v1397 = vpop.permute.xlu0 %1396
  %v1399 = vadd.f32 %v1389, %v1397
  %v1400 = vtanh.pop %v1399
  %1402 = vrot.lane.b32.xlu0 %v1400, 64
  %v1403 = vpop.permute.xlu0 %1402
  %v1405 = vmul.f32 %v1384, %v1403
  %1407 = vrot.lane.b32.xlu0 %v1405, 32
  %v1408 = vpop.permute.xlu0 %1407
  %1410 = vst.msk [vmem:[#allocation2 + $0x8] sm:$0xc0] %vm324, %v1408
  %v1411 = vpack.c.bf16 %v1321, %v1321
  %v1413 = vrot.slane %v1411, 1
  %1414 = vrot.lane.b32.xlu0 %v1413, 32
  %v1415 = vpop.permute.xlu0 %1414
  %v1417 = vsel %vm152, %v1415, 0
  %1419 = vmatprep.subr.bf16.mxu0 0
  %1420 = vmatpush1.bf16.msra.mxu0 %v240
  %1421 = vmatprep.subr.bf16.mxu0 0
  %1422 = vmatpush1.bf16.msra.mxu0 %v241
  %1423 = vmatprep.subr.bf16.mxu0 0
  %1424 = vmatpush1.bf16.msra.mxu0 0
  %1425 = vmatprep.subr.bf16.mxu0 0
  %1426 = vmatpush1.bf16.msra.mxu0 0
  %1427 = vmatprep.subr.bf16.mxu0 0
  %1428 = vmatpush1.bf16.msra.mxu0 0
  %1429 = vmatprep.subr.bf16.mxu0 0
  %1430 = vmatpush1.bf16.msra.mxu0 0
  %1431 = vmatprep.subr.bf16.mxu0 0
  %1432 = vmatpush1.bf16.msra.mxu0 0
  %1433 = vmatprep.subr.bf16.mxu0 0
  %1434 = vmatpush1.bf16.msra.mxu0 0
  %1435 = vmatprep.subr.bf16.mxu0 0
  %1436 = vmatpush1.bf16.msra.mxu0 0
  %1437 = vmatprep.subr.bf16.mxu0 0
  %1438 = vmatpush1.bf16.msra.mxu0 0
  %1439 = vmatprep.subr.bf16.mxu0 0
  %1440 = vmatpush1.bf16.msra.mxu0 0
  %1441 = vmatprep.subr.bf16.mxu0 0
  %1442 = vmatpush1.bf16.msra.mxu0 0
  %1443 = vmatprep.subr.bf16.mxu0 0
  %1444 = vmatpush1.bf16.msra.mxu0 0
  %1445 = vmatprep.subr.bf16.mxu0 0
  %1446 = vmatpush1.bf16.msra.mxu0 0
  %1447 = vmatprep.subr.bf16.mxu0 0
  %1448 = vmatpush1.bf16.msra.mxu0 0
  %1449 = vmatprep.subr.bf16.mxu0 0
  %1450 = vmatpush1.bf16.msra.mxu0 0
  %1451 = vmatprep.mubr.bf16.mxu0 0
  %1452 = vmatmul.mubr.bf16.gmra.mrb[0].mxu0 %v1417
  %v1453 = vpop.f32.mrb[0].mxu0
  %v1454 = vadd.f32 0.0, %v1453
  %v1455 = vpop.f32.mrb[0].mxu0
  %v1456 = vpop.f32.mrb[0].mxu0
  %v1457 = vpop.f32.mrb[0].mxu0
  %1458 = vdwg.mxu0
  %v1459 = vadd.f32 %v119, %v1454
  %v1460 = vxor.u32 %v1459, 2147483648
  %v1461 = vmul.f32 %v1460, 1.442695
  %v1462 = vpow.pop %v1461
  %v1463 = vadd.f32 %v1462, 1.0
  %v1464 = vrcp.pop %v1463
  %v1465 = vmul.f32 1.0, %v1464
  %v1466 = vtanh.pop %v1459
  %v1468 = vrot.slane %v1315, 2
  %v1470 = vmul.f32 %v1465, %v1468
  %1472 = vrot.lane.b32.xlu0 %v1466, 64
  %v1473 = vpop.permute.xlu0 %1472
  %v1475 = vmul.f32 %v1465, %v1473
  %1477 = vrot.lane.b32.xlu0 %v1475, 32
  %v1478 = vpop.permute.xlu0 %1477
  %v1480 = vadd.f32 %v1470, %v1478
  %v1481 = vtanh.pop %v1480
  %1483 = vrot.lane.b32.xlu0 %v1481, 64
  %v1484 = vpop.permute.xlu0 %1483
  %v1486 = vmul.f32 %v1465, %v1484
  %1488 = vrot.lane.b32.xlu0 %v1486, 32
  %v1489 = vpop.permute.xlu0 %1488
  %1491 = vst.msk [vmem:[#allocation3] sm:$0x3] %vm229, %v1489
  %v1492 = vld [vmem:[%s7] sm:$0xff]
  %v1493 = vld [vmem:[%s7 + $0x8] sm:$0xff]
  %v1494 = vld [vmem:[%s7 + $0x10] sm:$0xff]
  %v1495 = vld [vmem:[%s7 + $0x18] sm:$0xff]
  %v1496 = vld [vmem:[#allocation2] sm:$0xff]
  %v1497 = vld [vmem:[#allocation2 + $0x8] sm:$0xff]
  %v1498 = vld [vmem:[#allocation3] sm:$0xff]
  %v1499 = vld [vmem:[#allocation3 + $0x8] sm:$0xff]
  %v1501 = vsel %vm152, %v1498, 0
  %v1504 = vsel %vm152, %v1499, 0
  %1506 = vmatprep.subr.mxu0 0.0
  %1507 = vmatpush1.msra.mxu0 %v1492
  %1508 = vmatprep.subr.mxu0 0.0
  %1509 = vmatpush1.msra.mxu0 %v1493
  %1510 = vmatprep.subr.mxu0 0.0
  %1511 = vmatpush1.msra.mxu0 %v1494
  %1512 = vmatprep.subr.mxu0 0.0
  %1513 = vmatpush1.msra.mxu0 %v1495
  %1514 = vmatprep.subr.mxu0 0.0
  %1515 = vmatpush1.msra.mxu0 0.0
  %1516 = vmatprep.subr.mxu0 0.0
  %1517 = vmatpush1.msra.mxu0 0.0
  %1518 = vmatprep.subr.mxu0 0.0
  %1519 = vmatpush1.msra.mxu0 0.0
  %1520 = vmatprep.subr.mxu0 0.0
  %1521 = vmatpush1.msra.mxu0 0.0
  %1522 = vmatprep.subr.mxu0 0.0
  %1523 = vmatpush1.msra.mxu0 0.0
  %1524 = vmatprep.subr.mxu0 0.0
  %1525 = vmatpush1.msra.mxu0 0.0
  %1526 = vmatprep.subr.mxu0 0.0
  %1527 = vmatpush1.msra.mxu0 0.0
  %1528 = vmatprep.subr.mxu0 0.0
  %1529 = vmatpush1.msra.mxu0 0.0
  %1530 = vmatprep.subr.mxu0 0.0
  %1531 = vmatpush1.msra.mxu0 0.0
  %1532 = vmatprep.subr.mxu0 0.0
  %1533 = vmatpush1.msra.mxu0 0.0
  %1534 = vmatprep.subr.mxu0 0.0
  %1535 = vmatpush1.msra.mxu0 0.0
  %1536 = vmatprep.subr.mxu0 0.0
  %1537 = vmatpush1.msra.mxu0 0.0
  %1538 = vmatprep.subr.mxu0 0.0
  %1539 = vmatpush1.msra.mxu0 0.0
  %1540 = vmatprep.subr.mxu0 0.0
  %1541 = vmatpush1.msra.mxu0 0.0
  %1542 = vmatprep.subr.mxu0 0.0
  %1543 = vmatpush1.msra.mxu0 0.0
  %1544 = vmatprep.subr.mxu0 0.0
  %1545 = vmatpush1.msra.mxu0 0.0
  %1546 = vmatprep.subr.mxu0 0.0
  %1547 = vmatpush1.msra.mxu0 0.0
  %1548 = vmatprep.subr.mxu0 0.0
  %1549 = vmatpush1.msra.mxu0 0.0
  %1550 = vmatprep.subr.mxu0 0.0
  %1551 = vmatpush1.msra.mxu0 0.0
  %1552 = vmatprep.subr.mxu0 0.0
  %1553 = vmatpush1.msra.mxu0 0.0
  %1554 = vmatprep.subr.mxu0 0.0
  %1555 = vmatpush1.msra.mxu0 0.0
  %1556 = vmatprep.subr.mxu0 0.0
  %1557 = vmatpush1.msra.mxu0 0.0
  %1558 = vmatprep.subr.mxu0 0.0
  %1559 = vmatpush1.msra.mxu0 0.0
  %1560 = vmatprep.subr.mxu0 0.0
  %1561 = vmatpush1.msra.mxu0 0.0
  %1562 = vmatprep.subr.mxu0 0.0
  %1563 = vmatpush1.msra.mxu0 0.0
  %1564 = vmatprep.subr.mxu0 0.0
  %1565 = vmatpush1.msra.mxu0 0.0
  %1566 = vmatprep.subr.mxu0 0.0
  %1567 = vmatpush1.msra.mxu0 0.0
  %1568 = vmatprep.subr.mxu0 0.0
  %1569 = vmatpush1.msra.mxu0 0.0
  %1570 = vmatprep.mubr.f32.mxu0 0.0
  %1571 = vmatmul.mubr.f32.gmra.mrb[0].mxu0 %v1501
  %v1572 = vpop.f32.mrb[0].mxu0
  %v1573 = vadd.f32 0.0, %v1572
  %v1574 = vpop.f32.mrb[0].mxu0
  %1575 = vmatprep.mubr.f32.mxu0 0.0
  %1576 = vmatmul.mubr.f32.gmra.mrb[0].mxu0 %v1504
  %v1577 = vpop.f32.mrb[0].mxu0
  %v1578 = vadd.f32 0.0, %v1577
  %v1579 = vpop.f32.mrb[0].mxu0
  %1580 = vdwg.mxu0
  %v1582 = vsel %vm152, %v1496, 0
  %v1585 = vsel %vm152, %v1497, 0
  %1587 = vmatprep.subr.mxu0 0.0
  %1588 = vmatpush1.msra.mxu0 %v1492
  %1589 = vmatprep.subr.mxu0 0.0
  %1590 = vmatpush1.msra.mxu0 %v1493
  %1591 = vmatprep.subr.mxu0 0.0
  %1592 = vmatpush1.msra.mxu0 %v1494
  %1593 = vmatprep.subr.mxu0 0.0
  %1594 = vmatpush1.msra.mxu0 %v1495
  %1595 = vmatprep.subr.mxu0 0.0
  %1596 = vmatpush1.msra.mxu0 0.0
  %1597 = vmatprep.subr.mxu0 0.0
  %1598 = vmatpush1.msra.mxu0 0.0
  %1599 = vmatprep.subr.mxu0 0.0
  %1600 = vmatpush1.msra.mxu0 0.0
  %1601 = vmatprep.subr.mxu0 0.0
  %1602 = vmatpush1.msra.mxu0 0.0
  %1603 = vmatprep.subr.mxu0 0.0
  %1604 = vmatpush1.msra.mxu0 0.0
  %1605 = vmatprep.subr.mxu0 0.0
  %1606 = vmatpush1.msra.mxu0 0.0
  %1607 = vmatprep.subr.mxu0 0.0
  %1608 = vmatpush1.msra.mxu0 0.0
  %1609 = vmatprep.subr.mxu0 0.0
  %1610 = vmatpush1.msra.mxu0 0.0
  %1611 = vmatprep.subr.mxu0 0.0
  %1612 = vmatpush1.msra.mxu0 0.0
  %1613 = vmatprep.subr.mxu0 0.0
  %1614 = vmatpush1.msra.mxu0 0.0
  %1615 = vmatprep.subr.mxu0 0.0
  %1616 = vmatpush1.msra.mxu0 0.0
  %1617 = vmatprep.subr.mxu0 0.0
  %1618 = vmatpush1.msra.mxu0 0.0
  %1619 = vmatprep.subr.mxu0 0.0
  %1620 = vmatpush1.msra.mxu0 0.0
  %1621 = vmatprep.subr.mxu0 0.0
  %1622 = vmatpush1.msra.mxu0 0.0
  %1623 = vmatprep.subr.mxu0 0.0
  %1624 = vmatpush1.msra.mxu0 0.0
  %1625 = vmatprep.subr.mxu0 0.0
  %1626 = vmatpush1.msra.mxu0 0.0
  %1627 = vmatprep.subr.mxu0 0.0
  %1628 = vmatpush1.msra.mxu0 0.0
  %1629 = vmatprep.subr.mxu0 0.0
  %1630 = vmatpush1.msra.mxu0 0.0
  %1631 = vmatprep.subr.mxu0 0.0
  %1632 = vmatpush1.msra.mxu0 0.0
  %1633 = vmatprep.subr.mxu0 0.0
  %1634 = vmatpush1.msra.mxu0 0.0
  %1635 = vmatprep.subr.mxu0 0.0
  %1636 = vmatpush1.msra.mxu0 0.0
  %1637 = vmatprep.subr.mxu0 0.0
  %1638 = vmatpush1.msra.mxu0 0.0
  %1639 = vmatprep.subr.mxu0 0.0
  %1640 = vmatpush1.msra.mxu0 0.0
  %1641 = vmatprep.subr.mxu0 0.0
  %1642 = vmatpush1.msra.mxu0 0.0
  %1643 = vmatprep.subr.mxu0 0.0
  %1644 = vmatpush1.msra.mxu0 0.0
  %1645 = vmatprep.subr.mxu0 0.0
  %1646 = vmatpush1.msra.mxu0 0.0
  %1647 = vmatprep.subr.mxu0 0.0
  %1648 = vmatpush1.msra.mxu0 0.0
  %1649 = vmatprep.subr.mxu0 0.0
  %1650 = vmatpush1.msra.mxu0 0.0
  %1651 = vmatprep.mubr.f32.mxu0 0.0
  %1652 = vmatmul.mubr.f32.gmra.mrb[0].mxu0 %v1582
  %v1653 = vpop.f32.mrb[0].mxu0
  %v1654 = vadd.f32 %v1573, %v1653
  %v1655 = vpop.f32.mrb[0].mxu0
  %1656 = vmatprep.mubr.f32.mxu0 0.0
  %1657 = vmatmul.mubr.f32.gmra.mrb[0].mxu0 %v1585
  %v1658 = vpop.f32.mrb[0].mxu0
  %v1659 = vadd.f32 %v1578, %v1658
  %v1660 = vpop.f32.mrb[0].mxu0
  %1661 = vdwg.mxu0
  %v1662 = vld [vmem:[%s8] sm:$0x1]
  %v1664 = vlaneseq
  %v1665 = vshrl.u32 %v1664, 7
  %v1666 = vsub.s32 0, %v1665
  %v1667 = vrot.slane %v1662, %v1666
  %v1669 = vadd.f32 %v1654, %v1667
  %v1670 = vadd.f32 %v1659, %v1667
  %vm1671 = vcmask 64512
  %v1672 = vsel %vm1671, %v1669, -inf
  %1673 = vmax.xlane.f32.xlu0 %v1672
  %v1674 = vpop.xlane.xlu0 %1673
  %v1675 = vsel %vm1671, %v1670, -inf
  %1676 = vmax.xlane.f32.xlu0 %v1675
  %v1677 = vpop.xlane.xlu0 %1676
  %v1678 = vsub.f32 %v1669, %v1674
  %v1679 = vsub.f32 %v1670, %v1677
  %v1680 = vmul.f32 %v1678, 1.442695
  %v1681 = vpow.pop %v1680
  %v1682 = vmul.f32 %v1679, 1.442695
  %v1683 = vpow.pop %v1682
  %v1684 = vsel %vm1671, %v1681, 0.0
  %1685 = vadd.xlane.f32.xlu0 %v1684
  %v1686 = vpop.xlane.xlu0 %1685
  %v1687 = vsel %vm1671, %v1683, 0.0
  %1688 = vadd.xlane.f32.xlu0 %v1687
  %v1689 = vpop.xlane.xlu0 %1688
  %v1690 = vlog2.pop %v1686
  %v1691 = vmul.f32 %v1690, 0.6931472
  %v1692 = vlog2.pop %v1689
  %v1693 = vmul.f32 %v1692, 0.6931472
  %v1694 = vsub.f32 %v1678, %v1691
  %v1695 = vsub.f32 %v1679, %v1693
  %1696 = vst.msk [vmem:[%s13] sm:$0xff] %vm1671, %v1694
  %1697 = vst.msk [vmem:[%s13 + $0x8] sm:$0xff] %vm1671, %v1695
  %v1698 = vld [vmem:[%s10] sm:$0x1]
  %v1699 = vld [vmem:[%s11] sm:$0x1]
  %v1700 = vld [vmem:[%s12] sm:$0xff]
  %v1702 = vlaneseq
  %v1703 = vshrl.u32 %v1702, 7
  %v1704 = vsub.s32 0, %v1703
  %v1705 = vrot.slane %v1698, %v1704
  %v1707 = vadd.f32 %v1705, %v1694
  %s1708 = scalar_lea.vmem %s9, 2
  %v1709 = vld [vmem:[%s1708] sm:$0x3]
  %v1710 = vlaneseq
  %v1711 = vshrl.u32 %v1710, 7
  %v1712 = vsub.s32 0, %v1711
  %v1713 = vrot.slane %v1707, %v1712
  %1715 = vbcast.lane.b32.xlu0 %v1713, 256
  %v1716 = vpop.permute.xlu0 %1715
  %v1717 = vlaneseq
  %v1718 = vshrl.u32 %v1717, 7
  %v1719 = vsub.s32 1, %v1718
  %v1720 = vrot.slane %v1707, %v1719
  %1722 = vbcast.lane.b32.xlu0 %v1720, 256
  %v1723 = vpop.permute.xlu0 %1722
  %v1724 = vadd.f32 %v1716, %v1700
  %v1725 = vadd.f32 %v1723, %v1700
  %v1728 = vunpack.c.l.s4 1966171168
  %v1729 = vunpack.c.0.s8 %v1728
  %v1730 = vlaneseq
  %v1731 = vshrl.u32 %v1730, 7
  %v1732 = vsub.s32 %v1729, %v1731
  %v1733 = vrot.slane %v1694, %v1732
  %v1734 = vcombine.high %v1733, %v1733
  %v1736 = vunpack.c.l.s4 1966171168
  %v1737 = vunpack.c.0.s8 %v1736
  %v1738 = vlaneseq
  %v1739 = vshrl.u32 %v1738, 7
  %v1740 = vsub.s32 %v1737, %v1739
  %v1741 = vrot.slane %v1733, %v1740
  %v1743 = vunpack.c.l.s4 1966171168
  %v1744 = vunpack.c.0.s8 %v1743
  %v1745 = vlaneseq
  %v1746 = vshrl.u32 %v1745, 7
  %v1747 = vsub.s32 %v1744, %v1746
  %v1748 = vrot.slane %v1734, %v1747
  %v1749 = vcombine.high %v1741, %v1741
  %v1750 = vcombine.high %v1748, %v1748
  %v1751 = vlaneseq
  %v1752 = vshrl.u32 %v1751, 7
  %v1753 = vsub.s32 0, %v1752
  %v1754 = vrot.slane %v1749, %v1753
  %v1755 = vlaneseq
  %v1756 = vshrl.u32 %v1755, 7
  %v1757 = vsub.s32 0, %v1756
  %v1758 = vrot.slane %v1750, %v1757
  %v1761 = vadd.f32 %v1724, %v1754
  %v1762 = vadd.f32 %v1725, %v1758
  %v1763 = vsel %vm1671, %v1761, -inf
  %v1764 = vrot.slane %v1763, 4
  %v1765 = vmax.f32 %v1763, %v1764
  %v1766 = vrot.slane %v1765, 2
  %v1767 = vmax.f32 %v1765, %v1766
  %v1768 = vrot.slane %v1767, 1
  %v1769 = vmax.f32 %v1767, %v1768
  %v1770 = vsel %vm1671, %v1762, -inf
  %v1771 = vrot.slane %v1770, 4
  %v1772 = vmax.f32 %v1770, %v1771
  %v1773 = vrot.slane %v1772, 2
  %v1774 = vmax.f32 %v1772, %v1773
  %v1775 = vrot.slane %v1774, 1
  %v1776 = vmax.f32 %v1774, %v1775
  %v1777 = vsub.f32 %v1761, %v1769
  %v1778 = vsub.f32 %v1762, %v1776
  %v1779 = vmul.f32 %v1777, 1.442695
  %v1780 = vpow.pop %v1779
  %v1781 = vmul.f32 %v1778, 1.442695
  %v1782 = vpow.pop %v1781
  %v1783 = vsel %vm1671, %v1780, 0.0
  %v1784 = vrot.slane %v1783, 4
  %v1785 = vadd.f32 %v1783, %v1784
  %v1786 = vrot.slane %v1785, 2
  %v1787 = vadd.f32 %v1785, %v1786
  %v1788 = vrot.slane %v1787, 1
  %v1789 = vadd.f32 %v1787, %v1788
  %v1790 = vsel %vm1671, %v1782, 0.0
  %v1791 = vrot.slane %v1790, 4
  %v1792 = vadd.f32 %v1790, %v1791
  %v1793 = vrot.slane %v1792, 2
  %v1794 = vadd.f32 %v1792, %v1793
  %v1795 = vrot.slane %v1794, 1
  %v1796 = vadd.f32 %v1794, %v1795
  %v1797 = vlog2.pop %v1789
  %v1798 = vmul.f32 %v1797, 0.6931472
  %v1799 = vlog2.pop %v1796
  %v1800 = vmul.f32 %v1799, 0.6931472
  %v1801 = vadd.f32 %v1798, %v1769
  %v1802 = vadd.f32 %v1800, %v1776
  %vm1803 = vcmp.gt.f32.partialorder %v1709, 0.5
  %v1804 = vsel %vm1803, 1, 0
  %1805 = vset.pattern.permute.xlu0 0
  %1806 = vperm.xlu0 %1805, %v1804
  %v1807 = vpop.permute.xlu0 %1806
  %vm1808 = vcmp.eq.s32.totalorder %v1807, 1
  %vm1811 = vcmask 1041409
  %v1812 = vsel %vm1811, %v1802, %v1801
  %v1814 = vsel %vm1808, %v1812, %v1707
  %s1815 = scalar_lea.vmem %s9, 4
  %v1816 = vld [vmem:[%s1815] sm:$0x3]
  %v1817 = vlaneseq
  %v1818 = vshrl.u32 %v1817, 7
  %v1819 = vsub.s32 0, %v1818
  %v1820 = vrot.slane %v1814, %v1819
  %1822 = vbcast.lane.b32.xlu0 %v1820, 256
  %v1823 = vpop.permute.xlu0 %1822
  %v1824 = vlaneseq
  %v1825 = vshrl.u32 %v1824, 7
  %v1826 = vsub.s32 1, %v1825
  %v1827 = vrot.slane %v1814, %v1826
  %1829 = vbcast.lane.b32.xlu0 %v1827, 256
  %v1830 = vpop.permute.xlu0 %1829
  %v1831 = vadd.f32 %v1823, %v1700
  %v1832 = vadd.f32 %v1830, %v1700
  %v1833 = vcombine.high %v1694, %v1694
  %v1835 = vunpack.c.l.s4 1966171168
  %v1836 = vunpack.c.0.s8 %v1835
  %v1837 = vlaneseq
  %v1838 = vshrl.u32 %v1837, 7
  %v1839 = vsub.s32 %v1836, %v1838
  %v1840 = vrot.slane %v1833, %v1839
  %v1841 = vcombine.high %v1840, %v1840
  %v1843 = vunpack.c.l.s4 1966171168
  %v1844 = vunpack.c.0.s8 %v1843
  %v1845 = vlaneseq
  %v1846 = vshrl.u32 %v1845, 7
  %v1847 = vsub.s32 %v1844, %v1846
  %v1848 = vrot.slane %v1840, %v1847
  %v1850 = vunpack.c.l.s4 1966171168
  %v1851 = vunpack.c.0.s8 %v1850
  %v1852 = vlaneseq
  %v1853 = vshrl.u32 %v1852, 7
  %v1854 = vsub.s32 %v1851, %v1853
  %v1855 = vrot.slane %v1841, %v1854
  %v1856 = vlaneseq
  %v1857 = vshrl.u32 %v1856, 7
  %v1858 = vsub.s32 0, %v1857
  %v1859 = vrot.slane %v1848, %v1858
  %v1860 = vlaneseq
  %v1861 = vshrl.u32 %v1860, 7
  %v1862 = vsub.s32 0, %v1861
  %v1863 = vrot.slane %v1855, %v1862
  %v1866 = vadd.f32 %v1831, %v1859
  %v1867 = vadd.f32 %v1832, %v1863
  %v1868 = vsel %vm1671, %v1866, -inf
  %v1869 = vrot.slane %v1868, 4
  %v1870 = vmax.f32 %v1868, %v1869
  %v1871 = vrot.slane %v1870, 2
  %v1872 = vmax.f32 %v1870, %v1871
  %v1873 = vrot.slane %v1872, 1
  %v1874 = vmax.f32 %v1872, %v1873
  %v1875 = vsel %vm1671, %v1867, -inf
  %v1876 = vrot.slane %v1875, 4
  %v1877 = vmax.f32 %v1875, %v1876
  %v1878 = vrot.slane %v1877, 2
  %v1879 = vmax.f32 %v1877, %v1878
  %v1880 = vrot.slane %v1879, 1
  %v1881 = vmax.f32 %v1879, %v1880
  %v1882 = vsub.f32 %v1866, %v1874
  %v1883 = vsub.f32 %v1867, %v1881
  %v1884 = vmul.f32 %v1882, 1.442695
  %v1885 = vpow.pop %v1884
  %v1886 = vmul.f32 %v1883, 1.442695
  %v1887 = vpow.pop %v1886
  %v1888 = vsel %vm1671, %v1885, 0.0
  %v1889 = vrot.slane %v1888, 4
  %v1890 = vadd.f32 %v1888, %v1889
  %v1891 = vrot.slane %v1890, 2
  %v1892 = vadd.f32 %v1890, %v1891
  %v1893 = vrot.slane %v1892, 1
  %v1894 = vadd.f32 %v1892, %v1893
  %v1895 = vsel %vm1671, %v1887, 0.0
  %v1896 = vrot.slane %v1895, 4
  %v1897 = vadd.f32 %v1895, %v1896
  %v1898 = vrot.slane %v1897, 2
  %v1899 = vadd.f32 %v1897, %v1898
  %v1900 = vrot.slane %v1899, 1
  %v1901 = vadd.f32 %v1899, %v1900
  %v1902 = vlog2.pop %v1894
  %v1903 = vmul.f32 %v1902, 0.6931472
  %v1904 = vlog2.pop %v1901
  %v1905 = vmul.f32 %v1904, 0.6931472
  %v1906 = vadd.f32 %v1903, %v1874
  %v1907 = vadd.f32 %v1905, %v1881
  %vm1908 = vcmp.gt.f32.partialorder %v1816, 0.5
  %v1909 = vsel %vm1908, 1, 0
  %1910 = vset.pattern.permute.xlu0 0
  %1911 = vperm.xlu0 %1910, %v1909
  %v1912 = vpop.permute.xlu0 %1911
  %vm1913 = vcmp.eq.s32.totalorder %v1912, 1
  %v1916 = vsel %vm1811, %v1907, %v1906
  %v1918 = vsel %vm1913, %v1916, %v1814
  %s1919 = scalar_lea.vmem %s9, 6
  %v1920 = vld [vmem:[%s1919] sm:$0x3]
  %v1921 = vlaneseq
  %v1922 = vshrl.u32 %v1921, 7
  %v1923 = vsub.s32 0, %v1922
  %v1924 = vrot.slane %v1918, %v1923
  %1926 = vbcast.lane.b32.xlu0 %v1924, 256
  %v1927 = vpop.permute.xlu0 %1926
  %v1928 = vlaneseq
  %v1929 = vshrl.u32 %v1928, 7
  %v1930 = vsub.s32 1, %v1929
  %v1931 = vrot.slane %v1918, %v1930
  %1933 = vbcast.lane.b32.xlu0 %v1931, 256
  %v1934 = vpop.permute.xlu0 %1933
  %v1935 = vadd.f32 %v1927, %v1700
  %v1936 = vadd.f32 %v1934, %v1700
  %v1937 = vcombine.high %v1848, %v1848
  %v1938 = vcombine.high %v1855, %v1855
  %v1939 = vlaneseq
  %v1940 = vshrl.u32 %v1939, 7
  %v1941 = vsub.s32 0, %v1940
  %v1942 = vrot.slane %v1937, %v1941
  %v1943 = vlaneseq
  %v1944 = vshrl.u32 %v1943, 7
  %v1945 = vsub.s32 0, %v1944
  %v1946 = vrot.slane %v1938, %v1945
  %v1949 = vadd.f32 %v1935, %v1942
  %v1950 = vadd.f32 %v1936, %v1946
  %v1951 = vsel %vm1671, %v1949, -inf
  %v1952 = vrot.slane %v1951, 4
  %v1953 = vmax.f32 %v1951, %v1952
  %v1954 = vrot.slane %v1953, 2
  %v1955 = vmax.f32 %v1953, %v1954
  %v1956 = vrot.slane %v1955, 1
  %v1957 = vmax.f32 %v1955, %v1956
  %v1958 = vsel %vm1671, %v1950, -inf
  %v1959 = vrot.slane %v1958, 4
  %v1960 = vmax.f32 %v1958, %v1959
  %v1961 = vrot.slane %v1960, 2
  %v1962 = vmax.f32 %v1960, %v1961
  %v1963 = vrot.slane %v1962, 1
  %v1964 = vmax.f32 %v1962, %v1963
  %v1965 = vsub.f32 %v1949, %v1957
  %v1966 = vsub.f32 %v1950, %v1964
  %v1967 = vmul.f32 %v1965, 1.442695
  %v1968 = vpow.pop %v1967
  %v1969 = vmul.f32 %v1966, 1.442695
  %v1970 = vpow.pop %v1969
  %v1971 = vsel %vm1671, %v1968, 0.0
  %v1972 = vrot.slane %v1971, 4
  %v1973 = vadd.f32 %v1971, %v1972
  %v1974 = vrot.slane %v1973, 2
  %v1975 = vadd.f32 %v1973, %v1974
  %v1976 = vrot.slane %v1975, 1
  %v1977 = vadd.f32 %v1975, %v1976
  %v1978 = vsel %vm1671, %v1970, 0.0
  %v1979 = vrot.slane %v1978, 4
  %v1980 = vadd.f32 %v1978, %v1979
  %v1981 = vrot.slane %v1980, 2
  %v1982 = vadd.f32 %v1980, %v1981
  %v1983 = vrot.slane %v1982, 1
  %v1984 = vadd.f32 %v1982, %v1983
  %v1985 = vlog2.pop %v1977
  %v1986 = vmul.f32 %v1985, 0.6931472
  %v1987 = vlog2.pop %v1984
  %v1988 = vmul.f32 %v1987, 0.6931472
  %v1989 = vadd.f32 %v1986, %v1957
  %v1990 = vadd.f32 %v1988, %v1964
  %vm1991 = vcmp.gt.f32.partialorder %v1920, 0.5
  %v1992 = vsel %vm1991, 1, 0
  %1993 = vset.pattern.permute.xlu0 0
  %1994 = vperm.xlu0 %1993, %v1992
  %v1995 = vpop.permute.xlu0 %1994
  %vm1996 = vcmp.eq.s32.totalorder %v1995, 1
  %v1999 = vsel %vm1811, %v1990, %v1989
  %v2001 = vsel %vm1996, %v1999, %v1918
  %s2002 = scalar_lea.vmem %s9, 8
  %v2003 = vld [vmem:[%s2002] sm:$0x3]
  %v2004 = vlaneseq
  %v2005 = vshrl.u32 %v2004, 7
  %v2006 = vsub.s32 0, %v2005
  %v2007 = vrot.slane %v2001, %v2006
  %2009 = vbcast.lane.b32.xlu0 %v2007, 256
  %v2010 = vpop.permute.xlu0 %2009
  %v2011 = vlaneseq
  %v2012 = vshrl.u32 %v2011, 7
  %v2013 = vsub.s32 1, %v2012
  %v2014 = vrot.slane %v2001, %v2013
  %2016 = vbcast.lane.b32.xlu0 %v2014, 256
  %v2017 = vpop.permute.xlu0 %2016
  %v2018 = vadd.f32 %v2010, %v1700
  %v2019 = vadd.f32 %v2017, %v1700
  %v2022 = vunpack.c.l.s4 1966171168
  %v2023 = vunpack.c.0.s8 %v2022
  %v2024 = vlaneseq
  %v2025 = vshrl.u32 %v2024, 7
  %v2026 = vsub.s32 %v2023, %v2025
  %v2027 = vrot.slane %v1695, %v2026
  %v2028 = vcombine.high %v2027, %v2027
  %v2030 = vunpack.c.l.s4 1966171168
  %v2031 = vunpack.c.0.s8 %v2030
  %v2032 = vlaneseq
  %v2033 = vshrl.u32 %v2032, 7
  %v2034 = vsub.s32 %v2031, %v2033
  %v2035 = vrot.slane %v2027, %v2034
  %v2037 = vunpack.c.l.s4 1966171168
  %v2038 = vunpack.c.0.s8 %v2037
  %v2039 = vlaneseq
  %v2040 = vshrl.u32 %v2039, 7
  %v2041 = vsub.s32 %v2038, %v2040
  %v2042 = vrot.slane %v2028, %v2041
  %v2043 = vlaneseq
  %v2044 = vshrl.u32 %v2043, 7
  %v2045 = vsub.s32 0, %v2044
  %v2046 = vrot.slane %v2035, %v2045
  %v2047 = vlaneseq
  %v2048 = vshrl.u32 %v2047, 7
  %v2049 = vsub.s32 0, %v2048
  %v2050 = vrot.slane %v2042, %v2049
  %v2053 = vadd.f32 %v2018, %v2046
  %v2054 = vadd.f32 %v2019, %v2050
  %v2055 = vsel %vm1671, %v2053, -inf
  %v2056 = vrot.slane %v2055, 4
  %v2057 = vmax.f32 %v2055, %v2056
  %v2058 = vrot.slane %v2057, 2
  %v2059 = vmax.f32 %v2057, %v2058
  %v2060 = vrot.slane %v2059, 1
  %v2061 = vmax.f32 %v2059, %v2060
  %v2062 = vsel %vm1671, %v2054, -inf
  %v2063 = vrot.slane %v2062, 4
  %v2064 = vmax.f32 %v2062, %v2063
  %v2065 = vrot.slane %v2064, 2
  %v2066 = vmax.f32 %v2064, %v2065
  %v2067 = vrot.slane %v2066, 1
  %v2068 = vmax.f32 %v2066, %v2067
  %v2069 = vsub.f32 %v2053, %v2061
  %v2070 = vsub.f32 %v2054, %v2068
  %v2071 = vmul.f32 %v2069, 1.442695
  %v2072 = vpow.pop %v2071
  %v2073 = vmul.f32 %v2070, 1.442695
  %v2074 = vpow.pop %v2073
  %v2075 = vsel %vm1671, %v2072, 0.0
  %v2076 = vrot.slane %v2075, 4
  %v2077 = vadd.f32 %v2075, %v2076
  %v2078 = vrot.slane %v2077, 2
  %v2079 = vadd.f32 %v2077, %v2078
  %v2080 = vrot.slane %v2079, 1
  %v2081 = vadd.f32 %v2079, %v2080
  %v2082 = vsel %vm1671, %v2074, 0.0
  %v2083 = vrot.slane %v2082, 4
  %v2084 = vadd.f32 %v2082, %v2083
  %v2085 = vrot.slane %v2084, 2
  %v2086 = vadd.f32 %v2084, %v2085
  %v2087 = vrot.slane %v2086, 1
  %v2088 = vadd.f32 %v2086, %v2087
  %v2089 = vlog2.pop %v2081
  %v2090 = vmul.f32 %v2089, 0.6931472
  %v2091 = vlog2.pop %v2088
  %v2092 = vmul.f32 %v2091, 0.6931472
  %v2093 = vadd.f32 %v2090, %v2061
  %v2094 = vadd.f32 %v2092, %v2068
  %vm2095 = vcmp.gt.f32.partialorder %v2003, 0.5
  %v2096 = vsel %vm2095, 1, 0
  %2097 = vset.pattern.permute.xlu0 0
  %2098 = vperm.xlu0 %2097, %v2096
  %v2099 = vpop.permute.xlu0 %2098
  %vm2100 = vcmp.eq.s32.totalorder %v2099, 1
  %v2103 = vsel %vm1811, %v2094, %v2093
  %v2105 = vsel %vm2100, %v2103, %v2001
  %s2106 = scalar_lea.vmem %s9, 10
  %v2107 = vld [vmem:[%s2106] sm:$0x3]
  %v2108 = vlaneseq
  %v2109 = vshrl.u32 %v2108, 7
  %v2110 = vsub.s32 0, %v2109
  %v2111 = vrot.slane %v2105, %v2110
  %2113 = vbcast.lane.b32.xlu0 %v2111, 256
  %v2114 = vpop.permute.xlu0 %2113
  %v2115 = vlaneseq
  %v2116 = vshrl.u32 %v2115, 7
  %v2117 = vsub.s32 1, %v2116
  %v2118 = vrot.slane %v2105, %v2117
  %2120 = vbcast.lane.b32.xlu0 %v2118, 256
  %v2121 = vpop.permute.xlu0 %2120
  %v2122 = vadd.f32 %v2114, %v1700
  %v2123 = vadd.f32 %v2121, %v1700
  %v2124 = vcombine.high %v2035, %v2035
  %v2125 = vcombine.high %v2042, %v2042
  %v2126 = vlaneseq
  %v2127 = vshrl.u32 %v2126, 7
  %v2128 = vsub.s32 0, %v2127
  %v2129 = vrot.slane %v2124, %v2128
  %v2130 = vlaneseq
  %v2131 = vshrl.u32 %v2130, 7
  %v2132 = vsub.s32 0, %v2131
  %v2133 = vrot.slane %v2125, %v2132
  %v2136 = vadd.f32 %v2122, %v2129
  %v2137 = vadd.f32 %v2123, %v2133
  %v2138 = vsel %vm1671, %v2136, -inf
  %v2139 = vrot.slane %v2138, 4
  %v2140 = vmax.f32 %v2138, %v2139
  %v2141 = vrot.slane %v2140, 2
  %v2142 = vmax.f32 %v2140, %v2141
  %v2143 = vrot.slane %v2142, 1
  %v2144 = vmax.f32 %v2142, %v2143
  %v2145 = vsel %vm1671, %v2137, -inf
  %v2146 = vrot.slane %v2145, 4
  %v2147 = vmax.f32 %v2145, %v2146
  %v2148 = vrot.slane %v2147, 2
  %v2149 = vmax.f32 %v2147, %v2148
  %v2150 = vrot.slane %v2149, 1
  %v2151 = vmax.f32 %v2149, %v2150
  %v2152 = vsub.f32 %v2136, %v2144
  %v2153 = vsub.f32 %v2137, %v2151
  %v2154 = vmul.f32 %v2152, 1.442695
  %v2155 = vpow.pop %v2154
  %v2156 = vmul.f32 %v2153, 1.442695
  %v2157 = vpow.pop %v2156
  %v2158 = vsel %vm1671, %v2155, 0.0
  %v2159 = vrot.slane %v2158, 4
  %v2160 = vadd.f32 %v2158, %v2159
  %v2161 = vrot.slane %v2160, 2
  %v2162 = vadd.f32 %v2160, %v2161
  %v2163 = vrot.slane %v2162, 1
  %v2164 = vadd.f32 %v2162, %v2163
  %v2165 = vsel %vm1671, %v2157, 0.0
  %v2166 = vrot.slane %v2165, 4
  %v2167 = vadd.f32 %v2165, %v2166
  %v2168 = vrot.slane %v2167, 2
  %v2169 = vadd.f32 %v2167, %v2168
  %v2170 = vrot.slane %v2169, 1
  %v2171 = vadd.f32 %v2169, %v2170
  %v2172 = vlog2.pop %v2164
  %v2173 = vmul.f32 %v2172, 0.6931472
  %v2174 = vlog2.pop %v2171
  %v2175 = vmul.f32 %v2174, 0.6931472
  %v2176 = vadd.f32 %v2173, %v2144
  %v2177 = vadd.f32 %v2175, %v2151
  %vm2178 = vcmp.gt.f32.partialorder %v2107, 0.5
  %v2179 = vsel %vm2178, 1, 0
  %2180 = vset.pattern.permute.xlu0 0
  %2181 = vperm.xlu0 %2180, %v2179
  %v2182 = vpop.permute.xlu0 %2181
  %vm2183 = vcmp.eq.s32.totalorder %v2182, 1
  %v2186 = vsel %vm1811, %v2177, %v2176
  %v2188 = vsel %vm2183, %v2186, %v2105
  %s2189 = scalar_lea.vmem %s9, 12
  %v2190 = vld [vmem:[%s2189] sm:$0x3]
  %v2191 = vlaneseq
  %v2192 = vshrl.u32 %v2191, 7
  %v2193 = vsub.s32 0, %v2192
  %v2194 = vrot.slane %v2188, %v2193
  %2196 = vbcast.lane.b32.xlu0 %v2194, 256
  %v2197 = vpop.permute.xlu0 %2196
  %v2198 = vlaneseq
  %v2199 = vshrl.u32 %v2198, 7
  %v2200 = vsub.s32 1, %v2199
  %v2201 = vrot.slane %v2188, %v2200
  %2203 = vbcast.lane.b32.xlu0 %v2201, 256
  %v2204 = vpop.permute.xlu0 %2203
  %v2205 = vadd.f32 %v2197, %v1700
  %v2206 = vadd.f32 %v2204, %v1700
  %v2207 = vcombine.high %v1695, %v1695
  %v2209 = vunpack.c.l.s4 1966171168
  %v2210 = vunpack.c.0.s8 %v2209
  %v2211 = vlaneseq
  %v2212 = vshrl.u32 %v2211, 7
  %v2213 = vsub.s32 %v2210, %v2212
  %v2214 = vrot.slane %v2207, %v2213
  %v2215 = vcombine.high %v2214, %v2214
  %v2217 = vunpack.c.l.s4 1966171168
  %v2218 = vunpack.c.0.s8 %v2217
  %v2219 = vlaneseq
  %v2220 = vshrl.u32 %v2219, 7
  %v2221 = vsub.s32 %v2218, %v2220
  %v2222 = vrot.slane %v2214, %v2221
  %v2224 = vunpack.c.l.s4 1966171168
  %v2225 = vunpack.c.0.s8 %v2224
  %v2226 = vlaneseq
  %v2227 = vshrl.u32 %v2226, 7
  %v2228 = vsub.s32 %v2225, %v2227
  %v2229 = vrot.slane %v2215, %v2228
  %v2230 = vlaneseq
  %v2231 = vshrl.u32 %v2230, 7
  %v2232 = vsub.s32 0, %v2231
  %v2233 = vrot.slane %v2222, %v2232
  %v2234 = vlaneseq
  %v2235 = vshrl.u32 %v2234, 7
  %v2236 = vsub.s32 0, %v2235
  %v2237 = vrot.slane %v2229, %v2236
  %v2240 = vadd.f32 %v2205, %v2233
  %v2241 = vadd.f32 %v2206, %v2237
  %v2242 = vsel %vm1671, %v2240, -inf
  %v2243 = vrot.slane %v2242, 4
  %v2244 = vmax.f32 %v2242, %v2243
  %v2245 = vrot.slane %v2244, 2
  %v2246 = vmax.f32 %v2244, %v2245
  %v2247 = vrot.slane %v2246, 1
  %v2248 = vmax.f32 %v2246, %v2247
  %v2249 = vsel %vm1671, %v2241, -inf
  %v2250 = vrot.slane %v2249, 4
  %v2251 = vmax.f32 %v2249, %v2250
  %v2252 = vrot.slane %v2251, 2
  %v2253 = vmax.f32 %v2251, %v2252
  %v2254 = vrot.slane %v2253, 1
  %v2255 = vmax.f32 %v2253, %v2254
  %v2256 = vsub.f32 %v2240, %v2248
  %v2257 = vsub.f32 %v2241, %v2255
  %v2258 = vmul.f32 %v2256, 1.442695
  %v2259 = vpow.pop %v2258
  %v2260 = vmul.f32 %v2257, 1.442695
  %v2261 = vpow.pop %v2260
  %v2262 = vsel %vm1671, %v2259, 0.0
  %v2263 = vrot.slane %v2262, 4
  %v2264 = vadd.f32 %v2262, %v2263
  %v2265 = vrot.slane %v2264, 2
  %v2266 = vadd.f32 %v2264, %v2265
  %v2267 = vrot.slane %v2266, 1
  %v2268 = vadd.f32 %v2266, %v2267
  %v2269 = vsel %vm1671, %v2261, 0.0
  %v2270 = vrot.slane %v2269, 4
  %v2271 = vadd.f32 %v2269, %v2270
  %v2272 = vrot.slane %v2271, 2
  %v2273 = vadd.f32 %v2271, %v2272
  %v2274 = vrot.slane %v2273, 1
  %v2275 = vadd.f32 %v2273, %v2274
  %v2276 = vlog2.pop %v2268
  %v2277 = vmul.f32 %v2276, 0.6931472
  %v2278 = vlog2.pop %v2275
  %v2279 = vmul.f32 %v2278, 0.6931472
  %v2280 = vadd.f32 %v2277, %v2248
  %v2281 = vadd.f32 %v2279, %v2255
  %vm2282 = vcmp.gt.f32.partialorder %v2190, 0.5
  %v2283 = vsel %vm2282, 1, 0
  %2284 = vset.pattern.permute.xlu0 0
  %2285 = vperm.xlu0 %2284, %v2283
  %v2286 = vpop.permute.xlu0 %2285
  %vm2287 = vcmp.eq.s32.totalorder %v2286, 1
  %v2290 = vsel %vm1811, %v2281, %v2280
  %v2292 = vsel %vm2287, %v2290, %v2188
  %s2293 = scalar_lea.vmem %s9, 14
  %v2294 = vld [vmem:[%s2293] sm:$0x3]
  %v2295 = vlaneseq
  %v2296 = vshrl.u32 %v2295, 7
  %v2297 = vsub.s32 0, %v2296
  %v2298 = vrot.slane %v2292, %v2297
  %2300 = vbcast.lane.b32.xlu0 %v2298, 256
  %v2301 = vpop.permute.xlu0 %2300
  %v2302 = vlaneseq
  %v2303 = vshrl.u32 %v2302, 7
  %v2304 = vsub.s32 1, %v2303
  %v2305 = vrot.slane %v2292, %v2304
  %2307 = vbcast.lane.b32.xlu0 %v2305, 256
  %v2308 = vpop.permute.xlu0 %2307
  %v2309 = vadd.f32 %v2301, %v1700
  %v2310 = vadd.f32 %v2308, %v1700
  %v2311 = vcombine.high %v2222, %v2222
  %v2312 = vcombine.high %v2229, %v2229
  %v2313 = vlaneseq
  %v2314 = vshrl.u32 %v2313, 7
  %v2315 = vsub.s32 0, %v2314
  %v2316 = vrot.slane %v2311, %v2315
  %v2317 = vlaneseq
  %v2318 = vshrl.u32 %v2317, 7
  %v2319 = vsub.s32 0, %v2318
  %v2320 = vrot.slane %v2312, %v2319
  %v2323 = vadd.f32 %v2309, %v2316
  %v2324 = vadd.f32 %v2310, %v2320
  %v2325 = vsel %vm1671, %v2323, -inf
  %v2326 = vrot.slane %v2325, 4
  %v2327 = vmax.f32 %v2325, %v2326
  %v2328 = vrot.slane %v2327, 2
  %v2329 = vmax.f32 %v2327, %v2328
  %v2330 = vrot.slane %v2329, 1
  %v2331 = vmax.f32 %v2329, %v2330
  %v2332 = vsel %vm1671, %v2324, -inf
  %v2333 = vrot.slane %v2332, 4
  %v2334 = vmax.f32 %v2332, %v2333
  %v2335 = vrot.slane %v2334, 2
  %v2336 = vmax.f32 %v2334, %v2335
  %v2337 = vrot.slane %v2336, 1
  %v2338 = vmax.f32 %v2336, %v2337
  %v2339 = vsub.f32 %v2323, %v2331
  %v2340 = vsub.f32 %v2324, %v2338
  %v2341 = vmul.f32 %v2339, 1.442695
  %v2342 = vpow.pop %v2341
  %v2343 = vmul.f32 %v2340, 1.442695
  %v2344 = vpow.pop %v2343
  %v2345 = vsel %vm1671, %v2342, 0.0
  %v2346 = vrot.slane %v2345, 4
  %v2347 = vadd.f32 %v2345, %v2346
  %v2348 = vrot.slane %v2347, 2
  %v2349 = vadd.f32 %v2347, %v2348
  %v2350 = vrot.slane %v2349, 1
  %v2351 = vadd.f32 %v2349, %v2350
  %v2352 = vsel %vm1671, %v2344, 0.0
  %v2353 = vrot.slane %v2352, 4
  %v2354 = vadd.f32 %v2352, %v2353
  %v2355 = vrot.slane %v2354, 2
  %v2356 = vadd.f32 %v2354, %v2355
  %v2357 = vrot.slane %v2356, 1
  %v2358 = vadd.f32 %v2356, %v2357
  %v2359 = vlog2.pop %v2351
  %v2360 = vmul.f32 %v2359, 0.6931472
  %v2361 = vlog2.pop %v2358
  %v2362 = vmul.f32 %v2361, 0.6931472
  %v2363 = vadd.f32 %v2360, %v2331
  %v2364 = vadd.f32 %v2362, %v2338
  %vm2365 = vcmp.gt.f32.partialorder %v2294, 0.5
  %v2366 = vsel %vm2365, 1, 0
  %2367 = vset.pattern.permute.xlu0 0
  %2368 = vperm.xlu0 %2367, %v2366
  %v2369 = vpop.permute.xlu0 %2368
  %vm2370 = vcmp.eq.s32.totalorder %v2369, 1
  %v2373 = vsel %vm1811, %v2364, %v2363
  %v2375 = vsel %vm2370, %v2373, %v2292
  %v2377 = vlaneseq
  %v2378 = vshrl.u32 %v2377, 7
  %v2379 = vsub.s32 0, %v2378
  %v2380 = vrot.slane %v1699, %v2379
  %v2382 = vadd.f32 %v2375, %v2380
  %vm2383 = vcmask 58368
  %v2384 = vsel %vm2383, %v2382, -inf
  %2385 = vmax.xlane.f32.xlu0 %v2384
  %v2386 = vpop.xlane.xlu0 %2385
  %v2387 = vsub.f32 %v2382, %v2386
  %v2388 = vmul.f32 %v2387, 1.442695
  %v2389 = vpow.pop %v2388
  %v2390 = vsel %vm2383, %v2389, 0.0
  %2391 = vadd.xlane.f32.xlu0 %v2390
  %v2392 = vpop.xlane.xlu0 %2391
  %v2393 = vlog2.pop %v2392
  %v2394 = vmul.f32 %v2393, 0.6931472
  %v2395 = vadd.f32 %v2394, %v2386
  %vm2396 = vcmask 1024
  %2397 = vst.msk [vmem:[%s14] sm:$0x3] %vm2396, %v2395
  // Predicated region
  $region54: #{lstm_crf_forward.1} parent=0 // pred_check
    _
  $region55: #{lstm_crf_forward.1} parent=0 // pred_check_branch
    %2399 = sbr.rel (0) target = $region57
  $region56: #{lstm_crf_forward.1} parent=0 // pred_region
    _
  $region57: #{lstm_crf_forward.1} parent=0 // pred_fallthru
    _
  // Predicated region
  $region58: #{lstm_crf_forward.1} parent=0 // pred_check
    _
  $region59: #{lstm_crf_forward.1} parent=0 // pred_check_branch
    %2401 = sbr.rel (0) target = $region61
  $region60: #{lstm_crf_forward.1} parent=0 // pred_region
    _
  $region61: #{lstm_crf_forward.1} parent=0 // pred_fallthru
    _
  // Predicated region
  $region62: #{lstm_crf_forward.1} parent=0 // pred_check
    _
  $region63: #{lstm_crf_forward.1} parent=0 // pred_check_branch
    %2403 = sbr.rel (0) target = $region65
  $region64: #{lstm_crf_forward.1} parent=0 // pred_region
    _
  $region65: #{lstm_crf_forward.1} parent=0 // pred_fallthru
    _
  // Predicated region
  $region66: #{lstm_crf_forward.1} parent=0 // pred_check
    _
  $region67: #{lstm_crf_forward.1} parent=0 // pred_check_branch
    %2405 = sbr.rel (0) target = $region69
  $region68: #{lstm_crf_forward.1} parent=0 // pred_region
    _
  $region69: #{lstm_crf_forward.1} parent=0 // pred_fallthru
    _

</llo_original>
